<compile_context>
chip_gen: v7x
topology: tpu7x:2x2x1
jax: 0.10.0
libtpu: 0.0.40
codegen_flags: <defaults>
</compile_context>

<pallas_src>
import functools

import jax
import jax.numpy as jnp
from jax.experimental import pallas as pl
from jax.experimental.pallas import tpu as pltpu


@functools.partial(jax.jit, static_argnames=("compute_dtype",))
def inv_res_trans_block(x, w1, b1, w2, b2, *, compute_dtype=jnp.bfloat16):
    """x: (N, Cin, D, H, W);  w1: (Cin, Cin, 3,3,3);  b1: (Cin,);
    w2: (Cin, Cout, 2,2,2);  b2: (Cout,).  Returns f32 (N, Cout, 2D, 2H, 2W)."""
    N, C, D, H, W = x.shape
    Co = w2.shape[1]
    KO = 8 * Co
    Hp, Wp = H + 2, W + 2
    RS = Hp * Wp                       # flattened zero-padded (h, w) plane
    ROWS = H * Wp                      # contiguous row window covering every valid voxel
    BASE = Wp + 1                      # flat row of padded position (1, 1)
    RSP = ((RS + 2 + 7) // 8) * 8      # +2 guard rows -> every shifted slice is in-bounds
    cdt = jnp.dtype(compute_dtype)

    # ---- prep (all fused under jit; ~1 rewrite of the input, no 27x blow-up) --------
    xc = jnp.transpose(x, (0, 2, 3, 4, 1))                        # (N, D, H, W, C)
    xp = jnp.pad(xc, ((0, 0), (1, 1), (1, 1), (1, 1), (0, 0)))    # zero halo on d/h/w
    xf = xp.reshape(N, D + 2, RS, C)
    xf = jnp.pad(xf, ((0, 0), (0, 0), (0, RSP - RS), (0, 0))).astype(cdt)

    # ConvTranspose3d(s=1, p=1) == conv with flipped kernel & swapped channel axes.
    w1f = jnp.flip(jnp.transpose(w1, (2, 3, 4, 0, 1)), axis=(0, 1, 2))  # [a,b,c,i,o]
    w1t = w1f.reshape(27, C, C).astype(cdt)
    b1r = b1.reshape(1, C).astype(jnp.float32)

    # ConvTranspose3d(2, s=2): stride == kernel -> 8 taps fused in one (C, 8*Co) matmul.
    # column ((i*2+j)*2+k)*Co + o  <-  w2[c, o, i, j, k]
    w2p = jnp.transpose(w2, (0, 2, 3, 4, 1)).reshape(C, KO).astype(cdt)
    b2p = jnp.tile(b2, 8).reshape(1, KO).astype(jnp.float32)

    def kernel(x0_ref, x1_ref, x2_ref, w1_ref, b1_ref, w2_ref, b2_ref, out_ref):
        # x*_ref: (1, 1, RSP, C) flattened padded planes at input depths d-1, d, d+1.
        refs = (x0_ref, x1_ref, x2_ref)
        # 3x3x3 deconv: 27 static row-shifted slices -> 27 accumulated MXU matmuls (f32 acc).
        acc = jnp.zeros((ROWS, C), jnp.float32)
        for a in range(3):
            for b in range(3):
                for c in range(3):
                    start = BASE + (b - 1) * Wp + (c - 1)
                    tap = refs[a][0, 0, start:start + ROWS, :]          # (ROWS, C)
                    acc = acc + jnp.dot(tap, w1_ref[a * 9 + b * 3 + c],
                                        preferred_element_type=jnp.float32)
        r = jnp.maximum(acc + b1_ref[...], 0.0).astype(w2_ref.dtype)    # bias + ReLU
        # 2x2x2 stride-2 deconv: one matmul + one packed bias add.
        z = jnp.dot(r, w2_ref[...], preferred_element_type=jnp.float32) + b2_ref[...]
        out_ref[0, 0] = z                                               # (ROWS, 8*Co) f32

    flops = 2 * N * D * ROWS * (27 * C * C + C * KO)
    bytes_acc = (3 * N * D * RSP * C * cdt.itemsize          # 3x depth-halo reads
                 + N * D * ROWS * KO * 4                     # packed output write
                 + (27 * C * C + C * KO) * cdt.itemsize + (C + KO) * 4)

    out_pack = pl.pallas_call(
        kernel,
        out_shape=jax.ShapeDtypeStruct((N, D, ROWS, KO), jnp.float32),
        grid=(N, D),
        in_specs=[
            pl.BlockSpec((1, 1, RSP, C), lambda n, d: (n, d, 0, 0)),      # input depth d-1
            pl.BlockSpec((1, 1, RSP, C), lambda n, d: (n, d + 1, 0, 0)),  # input depth d
            pl.BlockSpec((1, 1, RSP, C), lambda n, d: (n, d + 2, 0, 0)),  # input depth d+1
            pl.BlockSpec((27, C, C), lambda n, d: (0, 0, 0)),
            pl.BlockSpec((1, C), lambda n, d: (0, 0)),
            pl.BlockSpec((C, KO), lambda n, d: (0, 0)),
            pl.BlockSpec((1, KO), lambda n, d: (0, 0)),
        ],
        out_specs=pl.BlockSpec((1, 1, ROWS, KO), lambda n, d: (n, d, 0, 0)),
        compiler_params=pltpu.CompilerParams(
            dimension_semantics=("parallel", "parallel"),
            vmem_limit_bytes=48 * 1024 * 1024),   # explicit budget (v7x: 64 MiB physical)
        cost_estimate=pl.CostEstimate(flops=flops, transcendentals=0,
                                      bytes_accessed=bytes_acc),
    )(xf, xf, xf, w1t, b1r, w2p, b2p)

    # unpack: rows are h*(W+2)+w (w >= W is junk); cols are ((i*2+j)*2+k)*Co + o.
    # TODO(synk): this final NCDHW permute stays in XLA (fused under jit); a channels-last
    # consumer could take out_pack directly and skip it entirely.
    z = out_pack.reshape(N, D, H, Wp, 2, 2, 2, Co)[:, :, :, :W]
    z = jnp.transpose(z, (0, 7, 1, 4, 2, 5, 3, 6))   # N, Co, D, i, H, j, W, k
    return z.reshape(N, Co, 2 * D, 2 * H, 2 * W)


def reference(x, w1, b1, w2, b2):
    """Plain-JAX (XLA) f32 reference of the same forward pass."""
    N, C, D, H, W = x.shape
    Co = w2.shape[1]
    xp = jnp.pad(x, ((0, 0), (0, 0), (1, 1), (1, 1), (1, 1)))
    y = jnp.zeros((N, C, D, H, W), jnp.float32)
    for a in range(3):
        for b in range(3):
            for c in range(3):
                patch = xp[:, :, a:a + D, b:b + H, c:c + W]
                y = y + jnp.einsum('nidhw,io->nodhw', patch,
                                   w1[:, :, 2 - a, 2 - b, 2 - c])
    r = jax.nn.relu(y + b1[None, :, None, None, None])
    z = jnp.einsum('nidhw,ioabc->nodahbwc', r, w2)
    z = z.reshape(N, Co, 2 * D, 2 * H, 2 * W)
    return z + b2[None, :, None, None, None]


if __name__ == "__main__":
    N, Cin, Cout = 2, 4, 8
    D = H = W = 8

    key = jax.random.PRNGKey(0)
    k1, k2, k3, k4, k5 = jax.random.split(key, 5)
    x = jax.random.normal(k1, (N, Cin, D, H, W), jnp.float32)
    w1 = jax.random.normal(k2, (Cin, Cin, 3, 3, 3), jnp.float32) * 0.1
    b1 = jax.random.normal(k3, (Cin,), jnp.float32) * 0.1
    w2 = jax.random.normal(k4, (Cin, Cout, 2, 2, 2), jnp.float32) * 0.1
    b2 = jax.random.normal(k5, (Cout,), jnp.float32) * 0.1

    ref = jax.block_until_ready(reference(x, w1, b1, w2, b2))

    # Default path: bf16 operands, f32 accumulation (review: bf16 on all generations).
    out = jax.block_until_ready(inv_res_trans_block(x, w1, b1, w2, b2))
    assert out.shape == (N, Cout, 2 * D, 2 * H, 2 * W), out.shape
    assert jnp.allclose(out, ref, rtol=2e-2, atol=2e-2), float(jnp.max(jnp.abs(out - ref)))

    # Tight algorithmic check with f32 operands.
    out32 = jax.block_until_ready(
        inv_res_trans_block(x, w1, b1, w2, b2, compute_dtype=jnp.float32))
    assert jnp.allclose(out32, ref, rtol=1e-3, atol=1e-3), float(jnp.max(jnp.abs(out32 - ref)))

    print("KERNEL_OK")
</pallas_src>

<mosaic_0001>
module attributes {stable_mosaic.version = 11 : i64} {
  func.func @kernel(%arg0: i32, %arg1: i32, %arg2: memref<1x1x104x4xbf16, #tpu.memory_space<vmem>>, %arg3: memref<1x1x104x4xbf16, #tpu.memory_space<vmem>>, %arg4: memref<1x1x104x4xbf16, #tpu.memory_space<vmem>>, %arg5: memref<27x4x4xbf16, #tpu.memory_space<vmem>>, %arg6: memref<1x4xf32, #tpu.memory_space<vmem>>, %arg7: memref<4x64xbf16, #tpu.memory_space<vmem>>, %arg8: memref<1x64xf32, #tpu.memory_space<vmem>>, %arg9: memref<1x1x80x64xf32, #tpu.memory_space<vmem>>) attributes {dimension_semantics = [#tpu.dimension_semantics<parallel>, #tpu.dimension_semantics<parallel>], iteration_bounds = array<i64: 2, 8>, scalar_prefetch = 0 : i64, scratch_operands = 0 : i64, tpu.core_type = #tpu.core_type<tc>, window_params = [{transform_indices = @transform_0, window_bounds = array<i64: 1, 1, 104, 4>}, {transform_indices = @transform_1, window_bounds = array<i64: 1, 1, 104, 4>}, {transform_indices = @transform_2, window_bounds = array<i64: 1, 1, 104, 4>}, {pipeline_mode = #tpu.pipeline_mode<synchronous>, transform_indices = @transform_3, window_bounds = array<i64: 27, 4, 4>}, {pipeline_mode = #tpu.pipeline_mode<synchronous>, transform_indices = @transform_4, window_bounds = array<i64: 1, 4>}, {pipeline_mode = #tpu.pipeline_mode<synchronous>, transform_indices = @transform_5, window_bounds = array<i64: 4, 64>}, {pipeline_mode = #tpu.pipeline_mode<synchronous>, transform_indices = @transform_6, window_bounds = array<i64: 1, 64>}, {transform_indices = @transform_7, window_bounds = array<i64: 1, 1, 80, 64>}]} {
    %cst = arith.constant 0.000000e+00 : f32
    %0 = vector.broadcast %cst : f32 to vector<80x4xf32>
    %c0 = arith.constant 0 : index
    %c0_0 = arith.constant 0 : index
    %c0_1 = arith.constant 0 : index
    %c0_2 = arith.constant 0 : index
    %1 = vector.load %arg2[%c0, %c0_0, %c0_1, %c0_2] : memref<1x1x104x4xbf16, #tpu.memory_space<vmem>>, vector<1x1x80x4xbf16>
    %2 = vector.shape_cast %1 : vector<1x1x80x4xbf16> to vector<80x4xbf16>
    %c0_3 = arith.constant 0 : index
    %c0_4 = arith.constant 0 : index
    %c0_5 = arith.constant 0 : index
    %3 = vector.load %arg5[%c0_3, %c0_4, %c0_5] : memref<27x4x4xbf16, #tpu.memory_space<vmem>>, vector<1x4x4xbf16>
    %4 = vector.shape_cast %3 : vector<1x4x4xbf16> to vector<4x4xbf16>
    %cst_6 = arith.constant dense<0.000000e+00> : vector<80x4xf32>
    %5 = tpu.matmul %2, %4, %cst_6 {dimension_numbers = #tpu.dot_dimension_numbers<[1], [0], [0], [1], [0, 0, 1, 1], [], []>} : vector<80x4xbf16>, vector<4x4xbf16>, vector<80x4xf32> -> vector<80x4xf32>
    %6 = arith.addf %0, %5 : vector<80x4xf32>
    %c0_7 = arith.constant 0 : index
    %c0_8 = arith.constant 0 : index
    %c1 = arith.constant 1 : index
    %c0_9 = arith.constant 0 : index
    %7 = vector.load %arg2[%c0_7, %c0_8, %c1, %c0_9] : memref<1x1x104x4xbf16, #tpu.memory_space<vmem>>, vector<1x1x80x4xbf16>
    %8 = vector.shape_cast %7 : vector<1x1x80x4xbf16> to vector<80x4xbf16>
    %c1_10 = arith.constant 1 : index
    %c0_11 = arith.constant 0 : index
    %c0_12 = arith.constant 0 : index
    %9 = vector.load %arg5[%c1_10, %c0_11, %c0_12] : memref<27x4x4xbf16, #tpu.memory_space<vmem>>, vector<1x4x4xbf16>
    %10 = vector.shape_cast %9 : vector<1x4x4xbf16> to vector<4x4xbf16>
    %cst_13 = arith.constant dense<0.000000e+00> : vector<80x4xf32>
    %11 = tpu.matmul %8, %10, %cst_13 {dimension_numbers = #tpu.dot_dimension_numbers<[1], [0], [0], [1], [0, 0, 1, 1], [], []>} : vector<80x4xbf16>, vector<4x4xbf16>, vector<80x4xf32> -> vector<80x4xf32>
    %12 = arith.addf %6, %11 : vector<80x4xf32>
    %c0_14 = arith.constant 0 : index
    %c0_15 = arith.constant 0 : index
    %c2 = arith.constant 2 : index
    %c0_16 = arith.constant 0 : index
    %13 = vector.load %arg2[%c0_14, %c0_15, %c2, %c0_16] : memref<1x1x104x4xbf16, #tpu.memory_space<vmem>>, vector<1x1x80x4xbf16>
    %14 = vector.shape_cast %13 : vector<1x1x80x4xbf16> to vector<80x4xbf16>
    %c2_17 = arith.constant 2 : index
    %c0_18 = arith.constant 0 : index
    %c0_19 = arith.constant 0 : index
    %15 = vector.load %arg5[%c2_17, %c0_18, %c0_19] : memref<27x4x4xbf16, #tpu.memory_space<vmem>>, vector<1x4x4xbf16>
    %16 = vector.shape_cast %15 : vector<1x4x4xbf16> to vector<4x4xbf16>
    %cst_20 = arith.constant dense<0.000000e+00> : vector<80x4xf32>
    %17 = tpu.matmul %14, %16, %cst_20 {dimension_numbers = #tpu.dot_dimension_numbers<[1], [0], [0], [1], [0, 0, 1, 1], [], []>} : vector<80x4xbf16>, vector<4x4xbf16>, vector<80x4xf32> -> vector<80x4xf32>
    %18 = arith.addf %12, %17 : vector<80x4xf32>
    %c0_21 = arith.constant 0 : index
    %c0_22 = arith.constant 0 : index
    %c10 = arith.constant 10 : index
    %c0_23 = arith.constant 0 : index
    %19 = vector.load %arg2[%c0_21, %c0_22, %c10, %c0_23] : memref<1x1x104x4xbf16, #tpu.memory_space<vmem>>, vector<1x1x80x4xbf16>
    %20 = vector.shape_cast %19 : vector<1x1x80x4xbf16> to vector<80x4xbf16>
    %c3 = arith.constant 3 : index
    %c0_24 = arith.constant 0 : index
    %c0_25 = arith.constant 0 : index
    %21 = vector.load %arg5[%c3, %c0_24, %c0_25] : memref<27x4x4xbf16, #tpu.memory_space<vmem>>, vector<1x4x4xbf16>
    %22 = vector.shape_cast %21 : vector<1x4x4xbf16> to vector<4x4xbf16>
    %cst_26 = arith.constant dense<0.000000e+00> : vector<80x4xf32>
    %23 = tpu.matmul %20, %22, %cst_26 {dimension_numbers = #tpu.dot_dimension_numbers<[1], [0], [0], [1], [0, 0, 1, 1], [], []>} : vector<80x4xbf16>, vector<4x4xbf16>, vector<80x4xf32> -> vector<80x4xf32>
    %24 = arith.addf %18, %23 : vector<80x4xf32>
    %c0_27 = arith.constant 0 : index
    %c0_28 = arith.constant 0 : index
    %c11 = arith.constant 11 : index
    %c0_29 = arith.constant 0 : index
    %25 = vector.load %arg2[%c0_27, %c0_28, %c11, %c0_29] : memref<1x1x104x4xbf16, #tpu.memory_space<vmem>>, vector<1x1x80x4xbf16>
    %26 = vector.shape_cast %25 : vector<1x1x80x4xbf16> to vector<80x4xbf16>
    %c4 = arith.constant 4 : index
    %c0_30 = arith.constant 0 : index
    %c0_31 = arith.constant 0 : index
    %27 = vector.load %arg5[%c4, %c0_30, %c0_31] : memref<27x4x4xbf16, #tpu.memory_space<vmem>>, vector<1x4x4xbf16>
    %28 = vector.shape_cast %27 : vector<1x4x4xbf16> to vector<4x4xbf16>
    %cst_32 = arith.constant dense<0.000000e+00> : vector<80x4xf32>
    %29 = tpu.matmul %26, %28, %cst_32 {dimension_numbers = #tpu.dot_dimension_numbers<[1], [0], [0], [1], [0, 0, 1, 1], [], []>} : vector<80x4xbf16>, vector<4x4xbf16>, vector<80x4xf32> -> vector<80x4xf32>
    %30 = arith.addf %24, %29 : vector<80x4xf32>
    %c0_33 = arith.constant 0 : index
    %c0_34 = arith.constant 0 : index
    %c12 = arith.constant 12 : index
    %c0_35 = arith.constant 0 : index
    %31 = vector.load %arg2[%c0_33, %c0_34, %c12, %c0_35] : memref<1x1x104x4xbf16, #tpu.memory_space<vmem>>, vector<1x1x80x4xbf16>
    %32 = vector.shape_cast %31 : vector<1x1x80x4xbf16> to vector<80x4xbf16>
    %c5 = arith.constant 5 : index
    %c0_36 = arith.constant 0 : index
    %c0_37 = arith.constant 0 : index
    %33 = vector.load %arg5[%c5, %c0_36, %c0_37] : memref<27x4x4xbf16, #tpu.memory_space<vmem>>, vector<1x4x4xbf16>
    %34 = vector.shape_cast %33 : vector<1x4x4xbf16> to vector<4x4xbf16>
    %cst_38 = arith.constant dense<0.000000e+00> : vector<80x4xf32>
    %35 = tpu.matmul %32, %34, %cst_38 {dimension_numbers = #tpu.dot_dimension_numbers<[1], [0], [0], [1], [0, 0, 1, 1], [], []>} : vector<80x4xbf16>, vector<4x4xbf16>, vector<80x4xf32> -> vector<80x4xf32>
    %36 = arith.addf %30, %35 : vector<80x4xf32>
    %c0_39 = arith.constant 0 : index
    %c0_40 = arith.constant 0 : index
    %c20 = arith.constant 20 : index
    %c0_41 = arith.constant 0 : index
    %37 = vector.load %arg2[%c0_39, %c0_40, %c20, %c0_41] : memref<1x1x104x4xbf16, #tpu.memory_space<vmem>>, vector<1x1x80x4xbf16>
    %38 = vector.shape_cast %37 : vector<1x1x80x4xbf16> to vector<80x4xbf16>
    %c6 = arith.constant 6 : index
    %c0_42 = arith.constant 0 : index
    %c0_43 = arith.constant 0 : index
    %39 = vector.load %arg5[%c6, %c0_42, %c0_43] : memref<27x4x4xbf16, #tpu.memory_space<vmem>>, vector<1x4x4xbf16>
    %40 = vector.shape_cast %39 : vector<1x4x4xbf16> to vector<4x4xbf16>
    %cst_44 = arith.constant dense<0.000000e+00> : vector<80x4xf32>
    %41 = tpu.matmul %38, %40, %cst_44 {dimension_numbers = #tpu.dot_dimension_numbers<[1], [0], [0], [1], [0, 0, 1, 1], [], []>} : vector<80x4xbf16>, vector<4x4xbf16>, vector<80x4xf32> -> vector<80x4xf32>
    %42 = arith.addf %36, %41 : vector<80x4xf32>
    %c0_45 = arith.constant 0 : index
    %c0_46 = arith.constant 0 : index
    %c21 = arith.constant 21 : index
    %c0_47 = arith.constant 0 : index
    %43 = vector.load %arg2[%c0_45, %c0_46, %c21, %c0_47] : memref<1x1x104x4xbf16, #tpu.memory_space<vmem>>, vector<1x1x80x4xbf16>
    %44 = vector.shape_cast %43 : vector<1x1x80x4xbf16> to vector<80x4xbf16>
    %c7 = arith.constant 7 : index
    %c0_48 = arith.constant 0 : index
    %c0_49 = arith.constant 0 : index
    %45 = vector.load %arg5[%c7, %c0_48, %c0_49] : memref<27x4x4xbf16, #tpu.memory_space<vmem>>, vector<1x4x4xbf16>
    %46 = vector.shape_cast %45 : vector<1x4x4xbf16> to vector<4x4xbf16>
    %cst_50 = arith.constant dense<0.000000e+00> : vector<80x4xf32>
    %47 = tpu.matmul %44, %46, %cst_50 {dimension_numbers = #tpu.dot_dimension_numbers<[1], [0], [0], [1], [0, 0, 1, 1], [], []>} : vector<80x4xbf16>, vector<4x4xbf16>, vector<80x4xf32> -> vector<80x4xf32>
    %48 = arith.addf %42, %47 : vector<80x4xf32>
    %c0_51 = arith.constant 0 : index
    %c0_52 = arith.constant 0 : index
    %c22 = arith.constant 22 : index
    %c0_53 = arith.constant 0 : index
    %49 = vector.load %arg2[%c0_51, %c0_52, %c22, %c0_53] : memref<1x1x104x4xbf16, #tpu.memory_space<vmem>>, vector<1x1x80x4xbf16>
    %50 = vector.shape_cast %49 : vector<1x1x80x4xbf16> to vector<80x4xbf16>
    %c8 = arith.constant 8 : index
    %c0_54 = arith.constant 0 : index
    %c0_55 = arith.constant 0 : index
    %51 = vector.load %arg5[%c8, %c0_54, %c0_55] : memref<27x4x4xbf16, #tpu.memory_space<vmem>>, vector<1x4x4xbf16>
    %52 = vector.shape_cast %51 : vector<1x4x4xbf16> to vector<4x4xbf16>
    %cst_56 = arith.constant dense<0.000000e+00> : vector<80x4xf32>
    %53 = tpu.matmul %50, %52, %cst_56 {dimension_numbers = #tpu.dot_dimension_numbers<[1], [0], [0], [1], [0, 0, 1, 1], [], []>} : vector<80x4xbf16>, vector<4x4xbf16>, vector<80x4xf32> -> vector<80x4xf32>
    %54 = arith.addf %48, %53 : vector<80x4xf32>
    %c0_57 = arith.constant 0 : index
    %c0_58 = arith.constant 0 : index
    %c0_59 = arith.constant 0 : index
    %c0_60 = arith.constant 0 : index
    %55 = vector.load %arg3[%c0_57, %c0_58, %c0_59, %c0_60] : memref<1x1x104x4xbf16, #tpu.memory_space<vmem>>, vector<1x1x80x4xbf16>
    %56 = vector.shape_cast %55 : vector<1x1x80x4xbf16> to vector<80x4xbf16>
    %c9 = arith.constant 9 : index
    %c0_61 = arith.constant 0 : index
    %c0_62 = arith.constant 0 : index
    %57 = vector.load %arg5[%c9, %c0_61, %c0_62] : memref<27x4x4xbf16, #tpu.memory_space<vmem>>, vector<1x4x4xbf16>
    %58 = vector.shape_cast %57 : vector<1x4x4xbf16> to vector<4x4xbf16>
    %cst_63 = arith.constant dense<0.000000e+00> : vector<80x4xf32>
    %59 = tpu.matmul %56, %58, %cst_63 {dimension_numbers = #tpu.dot_dimension_numbers<[1], [0], [0], [1], [0, 0, 1, 1], [], []>} : vector<80x4xbf16>, vector<4x4xbf16>, vector<80x4xf32> -> vector<80x4xf32>
    %60 = arith.addf %54, %59 : vector<80x4xf32>
    %c0_64 = arith.constant 0 : index
    %c0_65 = arith.constant 0 : index
    %c1_66 = arith.constant 1 : index
    %c0_67 = arith.constant 0 : index
    %61 = vector.load %arg3[%c0_64, %c0_65, %c1_66, %c0_67] : memref<1x1x104x4xbf16, #tpu.memory_space<vmem>>, vector<1x1x80x4xbf16>
    %62 = vector.shape_cast %61 : vector<1x1x80x4xbf16> to vector<80x4xbf16>
    %c10_68 = arith.constant 10 : index
    %c0_69 = arith.constant 0 : index
    %c0_70 = arith.constant 0 : index
    %63 = vector.load %arg5[%c10_68, %c0_69, %c0_70] : memref<27x4x4xbf16, #tpu.memory_space<vmem>>, vector<1x4x4xbf16>
    %64 = vector.shape_cast %63 : vector<1x4x4xbf16> to vector<4x4xbf16>
    %cst_71 = arith.constant dense<0.000000e+00> : vector<80x4xf32>
    %65 = tpu.matmul %62, %64, %cst_71 {dimension_numbers = #tpu.dot_dimension_numbers<[1], [0], [0], [1], [0, 0, 1, 1], [], []>} : vector<80x4xbf16>, vector<4x4xbf16>, vector<80x4xf32> -> vector<80x4xf32>
    %66 = arith.addf %60, %65 : vector<80x4xf32>
    %c0_72 = arith.constant 0 : index
    %c0_73 = arith.constant 0 : index
    %c2_74 = arith.constant 2 : index
    %c0_75 = arith.constant 0 : index
    %67 = vector.load %arg3[%c0_72, %c0_73, %c2_74, %c0_75] : memref<1x1x104x4xbf16, #tpu.memory_space<vmem>>, vector<1x1x80x4xbf16>
    %68 = vector.shape_cast %67 : vector<1x1x80x4xbf16> to vector<80x4xbf16>
    %c11_76 = arith.constant 11 : index
    %c0_77 = arith.constant 0 : index
    %c0_78 = arith.constant 0 : index
    %69 = vector.load %arg5[%c11_76, %c0_77, %c0_78] : memref<27x4x4xbf16, #tpu.memory_space<vmem>>, vector<1x4x4xbf16>
    %70 = vector.shape_cast %69 : vector<1x4x4xbf16> to vector<4x4xbf16>
    %cst_79 = arith.constant dense<0.000000e+00> : vector<80x4xf32>
    %71 = tpu.matmul %68, %70, %cst_79 {dimension_numbers = #tpu.dot_dimension_numbers<[1], [0], [0], [1], [0, 0, 1, 1], [], []>} : vector<80x4xbf16>, vector<4x4xbf16>, vector<80x4xf32> -> vector<80x4xf32>
    %72 = arith.addf %66, %71 : vector<80x4xf32>
    %c0_80 = arith.constant 0 : index
    %c0_81 = arith.constant 0 : index
    %c10_82 = arith.constant 10 : index
    %c0_83 = arith.constant 0 : index
    %73 = vector.load %arg3[%c0_80, %c0_81, %c10_82, %c0_83] : memref<1x1x104x4xbf16, #tpu.memory_space<vmem>>, vector<1x1x80x4xbf16>
    %74 = vector.shape_cast %73 : vector<1x1x80x4xbf16> to vector<80x4xbf16>
    %c12_84 = arith.constant 12 : index
    %c0_85 = arith.constant 0 : index
    %c0_86 = arith.constant 0 : index
    %75 = vector.load %arg5[%c12_84, %c0_85, %c0_86] : memref<27x4x4xbf16, #tpu.memory_space<vmem>>, vector<1x4x4xbf16>
    %76 = vector.shape_cast %75 : vector<1x4x4xbf16> to vector<4x4xbf16>
    %cst_87 = arith.constant dense<0.000000e+00> : vector<80x4xf32>
    %77 = tpu.matmul %74, %76, %cst_87 {dimension_numbers = #tpu.dot_dimension_numbers<[1], [0], [0], [1], [0, 0, 1, 1], [], []>} : vector<80x4xbf16>, vector<4x4xbf16>, vector<80x4xf32> -> vector<80x4xf32>
    %78 = arith.addf %72, %77 : vector<80x4xf32>
    %c0_88 = arith.constant 0 : index
    %c0_89 = arith.constant 0 : index
    %c11_90 = arith.constant 11 : index
    %c0_91 = arith.constant 0 : index
    %79 = vector.load %arg3[%c0_88, %c0_89, %c11_90, %c0_91] : memref<1x1x104x4xbf16, #tpu.memory_space<vmem>>, vector<1x1x80x4xbf16>
    %80 = vector.shape_cast %79 : vector<1x1x80x4xbf16> to vector<80x4xbf16>
    %c13 = arith.constant 13 : index
    %c0_92 = arith.constant 0 : index
    %c0_93 = arith.constant 0 : index
    %81 = vector.load %arg5[%c13, %c0_92, %c0_93] : memref<27x4x4xbf16, #tpu.memory_space<vmem>>, vector<1x4x4xbf16>
    %82 = vector.shape_cast %81 : vector<1x4x4xbf16> to vector<4x4xbf16>
    %cst_94 = arith.constant dense<0.000000e+00> : vector<80x4xf32>
    %83 = tpu.matmul %80, %82, %cst_94 {dimension_numbers = #tpu.dot_dimension_numbers<[1], [0], [0], [1], [0, 0, 1, 1], [], []>} : vector<80x4xbf16>, vector<4x4xbf16>, vector<80x4xf32> -> vector<80x4xf32>
    %84 = arith.addf %78, %83 : vector<80x4xf32>
    %c0_95 = arith.constant 0 : index
    %c0_96 = arith.constant 0 : index
    %c12_97 = arith.constant 12 : index
    %c0_98 = arith.constant 0 : index
    %85 = vector.load %arg3[%c0_95, %c0_96, %c12_97, %c0_98] : memref<1x1x104x4xbf16, #tpu.memory_space<vmem>>, vector<1x1x80x4xbf16>
    %86 = vector.shape_cast %85 : vector<1x1x80x4xbf16> to vector<80x4xbf16>
    %c14 = arith.constant 14 : index
    %c0_99 = arith.constant 0 : index
    %c0_100 = arith.constant 0 : index
    %87 = vector.load %arg5[%c14, %c0_99, %c0_100] : memref<27x4x4xbf16, #tpu.memory_space<vmem>>, vector<1x4x4xbf16>
    %88 = vector.shape_cast %87 : vector<1x4x4xbf16> to vector<4x4xbf16>
    %cst_101 = arith.constant dense<0.000000e+00> : vector<80x4xf32>
    %89 = tpu.matmul %86, %88, %cst_101 {dimension_numbers = #tpu.dot_dimension_numbers<[1], [0], [0], [1], [0, 0, 1, 1], [], []>} : vector<80x4xbf16>, vector<4x4xbf16>, vector<80x4xf32> -> vector<80x4xf32>
    %90 = arith.addf %84, %89 : vector<80x4xf32>
    %c0_102 = arith.constant 0 : index
    %c0_103 = arith.constant 0 : index
    %c20_104 = arith.constant 20 : index
    %c0_105 = arith.constant 0 : index
    %91 = vector.load %arg3[%c0_102, %c0_103, %c20_104, %c0_105] : memref<1x1x104x4xbf16, #tpu.memory_space<vmem>>, vector<1x1x80x4xbf16>
    %92 = vector.shape_cast %91 : vector<1x1x80x4xbf16> to vector<80x4xbf16>
    %c15 = arith.constant 15 : index
    %c0_106 = arith.constant 0 : index
    %c0_107 = arith.constant 0 : index
    %93 = vector.load %arg5[%c15, %c0_106, %c0_107] : memref<27x4x4xbf16, #tpu.memory_space<vmem>>, vector<1x4x4xbf16>
    %94 = vector.shape_cast %93 : vector<1x4x4xbf16> to vector<4x4xbf16>
    %cst_108 = arith.constant dense<0.000000e+00> : vector<80x4xf32>
    %95 = tpu.matmul %92, %94, %cst_108 {dimension_numbers = #tpu.dot_dimension_numbers<[1], [0], [0], [1], [0, 0, 1, 1], [], []>} : vector<80x4xbf16>, vector<4x4xbf16>, vector<80x4xf32> -> vector<80x4xf32>
    %96 = arith.addf %90, %95 : vector<80x4xf32>
    %c0_109 = arith.constant 0 : index
    %c0_110 = arith.constant 0 : index
    %c21_111 = arith.constant 21 : index
    %c0_112 = arith.constant 0 : index
    %97 = vector.load %arg3[%c0_109, %c0_110, %c21_111, %c0_112] : memref<1x1x104x4xbf16, #tpu.memory_space<vmem>>, vector<1x1x80x4xbf16>
    %98 = vector.shape_cast %97 : vector<1x1x80x4xbf16> to vector<80x4xbf16>
    %c16 = arith.constant 16 : index
    %c0_113 = arith.constant 0 : index
    %c0_114 = arith.constant 0 : index
    %99 = vector.load %arg5[%c16, %c0_113, %c0_114] : memref<27x4x4xbf16, #tpu.memory_space<vmem>>, vector<1x4x4xbf16>
    %100 = vector.shape_cast %99 : vector<1x4x4xbf16> to vector<4x4xbf16>
    %cst_115 = arith.constant dense<0.000000e+00> : vector<80x4xf32>
    %101 = tpu.matmul %98, %100, %cst_115 {dimension_numbers = #tpu.dot_dimension_numbers<[1], [0], [0], [1], [0, 0, 1, 1], [], []>} : vector<80x4xbf16>, vector<4x4xbf16>, vector<80x4xf32> -> vector<80x4xf32>
    %102 = arith.addf %96, %101 : vector<80x4xf32>
    %c0_116 = arith.constant 0 : index
    %c0_117 = arith.constant 0 : index
    %c22_118 = arith.constant 22 : index
    %c0_119 = arith.constant 0 : index
    %103 = vector.load %arg3[%c0_116, %c0_117, %c22_118, %c0_119] : memref<1x1x104x4xbf16, #tpu.memory_space<vmem>>, vector<1x1x80x4xbf16>
    %104 = vector.shape_cast %103 : vector<1x1x80x4xbf16> to vector<80x4xbf16>
    %c17 = arith.constant 17 : index
    %c0_120 = arith.constant 0 : index
    %c0_121 = arith.constant 0 : index
    %105 = vector.load %arg5[%c17, %c0_120, %c0_121] : memref<27x4x4xbf16, #tpu.memory_space<vmem>>, vector<1x4x4xbf16>
    %106 = vector.shape_cast %105 : vector<1x4x4xbf16> to vector<4x4xbf16>
    %cst_122 = arith.constant dense<0.000000e+00> : vector<80x4xf32>
    %107 = tpu.matmul %104, %106, %cst_122 {dimension_numbers = #tpu.dot_dimension_numbers<[1], [0], [0], [1], [0, 0, 1, 1], [], []>} : vector<80x4xbf16>, vector<4x4xbf16>, vector<80x4xf32> -> vector<80x4xf32>
    %108 = arith.addf %102, %107 : vector<80x4xf32>
    %c0_123 = arith.constant 0 : index
    %c0_124 = arith.constant 0 : index
    %c0_125 = arith.constant 0 : index
    %c0_126 = arith.constant 0 : index
    %109 = vector.load %arg4[%c0_123, %c0_124, %c0_125, %c0_126] : memref<1x1x104x4xbf16, #tpu.memory_space<vmem>>, vector<1x1x80x4xbf16>
    %110 = vector.shape_cast %109 : vector<1x1x80x4xbf16> to vector<80x4xbf16>
    %c18 = arith.constant 18 : index
    %c0_127 = arith.constant 0 : index
    %c0_128 = arith.constant 0 : index
    %111 = vector.load %arg5[%c18, %c0_127, %c0_128] : memref<27x4x4xbf16, #tpu.memory_space<vmem>>, vector<1x4x4xbf16>
    %112 = vector.shape_cast %111 : vector<1x4x4xbf16> to vector<4x4xbf16>
    %cst_129 = arith.constant dense<0.000000e+00> : vector<80x4xf32>
    %113 = tpu.matmul %110, %112, %cst_129 {dimension_numbers = #tpu.dot_dimension_numbers<[1], [0], [0], [1], [0, 0, 1, 1], [], []>} : vector<80x4xbf16>, vector<4x4xbf16>, vector<80x4xf32> -> vector<80x4xf32>
    %114 = arith.addf %108, %113 : vector<80x4xf32>
    %c0_130 = arith.constant 0 : index
    %c0_131 = arith.constant 0 : index
    %c1_132 = arith.constant 1 : index
    %c0_133 = arith.constant 0 : index
    %115 = vector.load %arg4[%c0_130, %c0_131, %c1_132, %c0_133] : memref<1x1x104x4xbf16, #tpu.memory_space<vmem>>, vector<1x1x80x4xbf16>
    %116 = vector.shape_cast %115 : vector<1x1x80x4xbf16> to vector<80x4xbf16>
    %c19 = arith.constant 19 : index
    %c0_134 = arith.constant 0 : index
    %c0_135 = arith.constant 0 : index
    %117 = vector.load %arg5[%c19, %c0_134, %c0_135] : memref<27x4x4xbf16, #tpu.memory_space<vmem>>, vector<1x4x4xbf16>
    %118 = vector.shape_cast %117 : vector<1x4x4xbf16> to vector<4x4xbf16>
    %cst_136 = arith.constant dense<0.000000e+00> : vector<80x4xf32>
    %119 = tpu.matmul %116, %118, %cst_136 {dimension_numbers = #tpu.dot_dimension_numbers<[1], [0], [0], [1], [0, 0, 1, 1], [], []>} : vector<80x4xbf16>, vector<4x4xbf16>, vector<80x4xf32> -> vector<80x4xf32>
    %120 = arith.addf %114, %119 : vector<80x4xf32>
    %c0_137 = arith.constant 0 : index
    %c0_138 = arith.constant 0 : index
    %c2_139 = arith.constant 2 : index
    %c0_140 = arith.constant 0 : index
    %121 = vector.load %arg4[%c0_137, %c0_138, %c2_139, %c0_140] : memref<1x1x104x4xbf16, #tpu.memory_space<vmem>>, vector<1x1x80x4xbf16>
    %122 = vector.shape_cast %121 : vector<1x1x80x4xbf16> to vector<80x4xbf16>
    %c20_141 = arith.constant 20 : index
    %c0_142 = arith.constant 0 : index
    %c0_143 = arith.constant 0 : index
    %123 = vector.load %arg5[%c20_141, %c0_142, %c0_143] : memref<27x4x4xbf16, #tpu.memory_space<vmem>>, vector<1x4x4xbf16>
    %124 = vector.shape_cast %123 : vector<1x4x4xbf16> to vector<4x4xbf16>
    %cst_144 = arith.constant dense<0.000000e+00> : vector<80x4xf32>
    %125 = tpu.matmul %122, %124, %cst_144 {dimension_numbers = #tpu.dot_dimension_numbers<[1], [0], [0], [1], [0, 0, 1, 1], [], []>} : vector<80x4xbf16>, vector<4x4xbf16>, vector<80x4xf32> -> vector<80x4xf32>
    %126 = arith.addf %120, %125 : vector<80x4xf32>
    %c0_145 = arith.constant 0 : index
    %c0_146 = arith.constant 0 : index
    %c10_147 = arith.constant 10 : index
    %c0_148 = arith.constant 0 : index
    %127 = vector.load %arg4[%c0_145, %c0_146, %c10_147, %c0_148] : memref<1x1x104x4xbf16, #tpu.memory_space<vmem>>, vector<1x1x80x4xbf16>
    %128 = vector.shape_cast %127 : vector<1x1x80x4xbf16> to vector<80x4xbf16>
    %c21_149 = arith.constant 21 : index
    %c0_150 = arith.constant 0 : index
    %c0_151 = arith.constant 0 : index
    %129 = vector.load %arg5[%c21_149, %c0_150, %c0_151] : memref<27x4x4xbf16, #tpu.memory_space<vmem>>, vector<1x4x4xbf16>
    %130 = vector.shape_cast %129 : vector<1x4x4xbf16> to vector<4x4xbf16>
    %cst_152 = arith.constant dense<0.000000e+00> : vector<80x4xf32>
    %131 = tpu.matmul %128, %130, %cst_152 {dimension_numbers = #tpu.dot_dimension_numbers<[1], [0], [0], [1], [0, 0, 1, 1], [], []>} : vector<80x4xbf16>, vector<4x4xbf16>, vector<80x4xf32> -> vector<80x4xf32>
    %132 = arith.addf %126, %131 : vector<80x4xf32>
    %c0_153 = arith.constant 0 : index
    %c0_154 = arith.constant 0 : index
    %c11_155 = arith.constant 11 : index
    %c0_156 = arith.constant 0 : index
    %133 = vector.load %arg4[%c0_153, %c0_154, %c11_155, %c0_156] : memref<1x1x104x4xbf16, #tpu.memory_space<vmem>>, vector<1x1x80x4xbf16>
    %134 = vector.shape_cast %133 : vector<1x1x80x4xbf16> to vector<80x4xbf16>
    %c22_157 = arith.constant 22 : index
    %c0_158 = arith.constant 0 : index
    %c0_159 = arith.constant 0 : index
    %135 = vector.load %arg5[%c22_157, %c0_158, %c0_159] : memref<27x4x4xbf16, #tpu.memory_space<vmem>>, vector<1x4x4xbf16>
    %136 = vector.shape_cast %135 : vector<1x4x4xbf16> to vector<4x4xbf16>
    %cst_160 = arith.constant dense<0.000000e+00> : vector<80x4xf32>
    %137 = tpu.matmul %134, %136, %cst_160 {dimension_numbers = #tpu.dot_dimension_numbers<[1], [0], [0], [1], [0, 0, 1, 1], [], []>} : vector<80x4xbf16>, vector<4x4xbf16>, vector<80x4xf32> -> vector<80x4xf32>
    %138 = arith.addf %132, %137 : vector<80x4xf32>
    %c0_161 = arith.constant 0 : index
    %c0_162 = arith.constant 0 : index
    %c12_163 = arith.constant 12 : index
    %c0_164 = arith.constant 0 : index
    %139 = vector.load %arg4[%c0_161, %c0_162, %c12_163, %c0_164] : memref<1x1x104x4xbf16, #tpu.memory_space<vmem>>, vector<1x1x80x4xbf16>
    %140 = vector.shape_cast %139 : vector<1x1x80x4xbf16> to vector<80x4xbf16>
    %c23 = arith.constant 23 : index
    %c0_165 = arith.constant 0 : index
    %c0_166 = arith.constant 0 : index
    %141 = vector.load %arg5[%c23, %c0_165, %c0_166] : memref<27x4x4xbf16, #tpu.memory_space<vmem>>, vector<1x4x4xbf16>
    %142 = vector.shape_cast %141 : vector<1x4x4xbf16> to vector<4x4xbf16>
    %cst_167 = arith.constant dense<0.000000e+00> : vector<80x4xf32>
    %143 = tpu.matmul %140, %142, %cst_167 {dimension_numbers = #tpu.dot_dimension_numbers<[1], [0], [0], [1], [0, 0, 1, 1], [], []>} : vector<80x4xbf16>, vector<4x4xbf16>, vector<80x4xf32> -> vector<80x4xf32>
    %144 = arith.addf %138, %143 : vector<80x4xf32>
    %c0_168 = arith.constant 0 : index
    %c0_169 = arith.constant 0 : index
    %c20_170 = arith.constant 20 : index
    %c0_171 = arith.constant 0 : index
    %145 = vector.load %arg4[%c0_168, %c0_169, %c20_170, %c0_171] : memref<1x1x104x4xbf16, #tpu.memory_space<vmem>>, vector<1x1x80x4xbf16>
    %146 = vector.shape_cast %145 : vector<1x1x80x4xbf16> to vector<80x4xbf16>
    %c24 = arith.constant 24 : index
    %c0_172 = arith.constant 0 : index
    %c0_173 = arith.constant 0 : index
    %147 = vector.load %arg5[%c24, %c0_172, %c0_173] : memref<27x4x4xbf16, #tpu.memory_space<vmem>>, vector<1x4x4xbf16>
    %148 = vector.shape_cast %147 : vector<1x4x4xbf16> to vector<4x4xbf16>
    %cst_174 = arith.constant dense<0.000000e+00> : vector<80x4xf32>
    %149 = tpu.matmul %146, %148, %cst_174 {dimension_numbers = #tpu.dot_dimension_numbers<[1], [0], [0], [1], [0, 0, 1, 1], [], []>} : vector<80x4xbf16>, vector<4x4xbf16>, vector<80x4xf32> -> vector<80x4xf32>
    %150 = arith.addf %144, %149 : vector<80x4xf32>
    %c0_175 = arith.constant 0 : index
    %c0_176 = arith.constant 0 : index
    %c21_177 = arith.constant 21 : index
    %c0_178 = arith.constant 0 : index
    %151 = vector.load %arg4[%c0_175, %c0_176, %c21_177, %c0_178] : memref<1x1x104x4xbf16, #tpu.memory_space<vmem>>, vector<1x1x80x4xbf16>
    %152 = vector.shape_cast %151 : vector<1x1x80x4xbf16> to vector<80x4xbf16>
    %c25 = arith.constant 25 : index
    %c0_179 = arith.constant 0 : index
    %c0_180 = arith.constant 0 : index
    %153 = vector.load %arg5[%c25, %c0_179, %c0_180] : memref<27x4x4xbf16, #tpu.memory_space<vmem>>, vector<1x4x4xbf16>
    %154 = vector.shape_cast %153 : vector<1x4x4xbf16> to vector<4x4xbf16>
    %cst_181 = arith.constant dense<0.000000e+00> : vector<80x4xf32>
    %155 = tpu.matmul %152, %154, %cst_181 {dimension_numbers = #tpu.dot_dimension_numbers<[1], [0], [0], [1], [0, 0, 1, 1], [], []>} : vector<80x4xbf16>, vector<4x4xbf16>, vector<80x4xf32> -> vector<80x4xf32>
    %156 = arith.addf %150, %155 : vector<80x4xf32>
    %c0_182 = arith.constant 0 : index
    %c0_183 = arith.constant 0 : index
    %c22_184 = arith.constant 22 : index
    %c0_185 = arith.constant 0 : index
    %157 = vector.load %arg4[%c0_182, %c0_183, %c22_184, %c0_185] : memref<1x1x104x4xbf16, #tpu.memory_space<vmem>>, vector<1x1x80x4xbf16>
    %158 = vector.shape_cast %157 : vector<1x1x80x4xbf16> to vector<80x4xbf16>
    %c26 = arith.constant 26 : index
    %c0_186 = arith.constant 0 : index
    %c0_187 = arith.constant 0 : index
    %159 = vector.load %arg5[%c26, %c0_186, %c0_187] : memref<27x4x4xbf16, #tpu.memory_space<vmem>>, vector<1x4x4xbf16>
    %160 = vector.shape_cast %159 : vector<1x4x4xbf16> to vector<4x4xbf16>
    %cst_188 = arith.constant dense<0.000000e+00> : vector<80x4xf32>
    %161 = tpu.matmul %158, %160, %cst_188 {dimension_numbers = #tpu.dot_dimension_numbers<[1], [0], [0], [1], [0, 0, 1, 1], [], []>} : vector<80x4xbf16>, vector<4x4xbf16>, vector<80x4xf32> -> vector<80x4xf32>
    %162 = arith.addf %156, %161 : vector<80x4xf32>
    %c0_189 = arith.constant 0 : index
    %c0_190 = arith.constant 0 : index
    %163 = vector.load %arg6[%c0_189, %c0_190] : memref<1x4xf32, #tpu.memory_space<vmem>>, vector<1x4xf32>
    %164 = vector.broadcast %163 : vector<1x4xf32> to vector<80x4xf32>
    %165 = arith.addf %162, %164 : vector<80x4xf32>
    %cst_191 = arith.constant 0.000000e+00 : f32
    %166 = vector.broadcast %cst_191 : f32 to vector<80x4xf32>
    %167 = arith.maximumf %165, %166 : vector<80x4xf32>
    %168 = arith.truncf %167 : vector<80x4xf32> to vector<80x4xbf16>
    %c0_192 = arith.constant 0 : index
    %c0_193 = arith.constant 0 : index
    %169 = vector.load %arg7[%c0_192, %c0_193] : memref<4x64xbf16, #tpu.memory_space<vmem>>, vector<4x64xbf16>
    %cst_194 = arith.constant dense<0.000000e+00> : vector<80x64xf32>
    %170 = tpu.matmul %168, %169, %cst_194 {dimension_numbers = #tpu.dot_dimension_numbers<[1], [0], [0], [1], [0, 0, 1, 1], [], []>} : vector<80x4xbf16>, vector<4x64xbf16>, vector<80x64xf32> -> vector<80x64xf32>
    %c0_195 = arith.constant 0 : index
    %c0_196 = arith.constant 0 : index
    %171 = vector.load %arg8[%c0_195, %c0_196] : memref<1x64xf32, #tpu.memory_space<vmem>>, vector<1x64xf32>
    %172 = vector.broadcast %171 : vector<1x64xf32> to vector<80x64xf32>
    %173 = arith.addf %170, %172 : vector<80x64xf32>
    %c0_197 = arith.constant 0 : index
    %c0_198 = arith.constant 0 : index
    %c0_199 = arith.constant 0 : index
    %c0_200 = arith.constant 0 : index
    %174 = vector.load %arg9[%c0_197, %c0_198, %c0_199, %c0_200] : memref<1x1x80x64xf32, #tpu.memory_space<vmem>>, vector<1x1x80x64xf32>
    %175 = vector.shape_cast %174 : vector<1x1x80x64xf32> to vector<80x64xf32>
    %176 = vector.shape_cast %173 : vector<80x64xf32> to vector<1x1x80x64xf32>
    tpu.vector_store %arg9[%c0_197, %c0_198, %c0_199, %c0_200], %176 {strides = array<i32>} : memref<1x1x80x64xf32, #tpu.memory_space<vmem>>, vector<1x1x80x64xf32>,
    return
  }
  func.func @transform_0(%arg0: i32, %arg1: i32) -> (i32, i32, i32, i32) {
    %c0_i32 = arith.constant 0 : i32
    %c0_i32_0 = arith.constant 0 : i32
    %c0_i32_1 = arith.constant 0 : i32
    return %arg0, %arg1, %c0_i32, %c0_i32_0 : i32, i32, i32, i32
  }
  func.func @transform_1(%arg0: i32, %arg1: i32) -> (i32, i32, i32, i32) {
    %c1_i32 = arith.constant 1 : i32
    %0 = arith.addi %arg1, %c1_i32 : i32
    %c0_i32 = arith.constant 0 : i32
    %c0_i32_0 = arith.constant 0 : i32
    %c0_i32_1 = arith.constant 0 : i32
    return %arg0, %0, %c0_i32, %c0_i32_0 : i32, i32, i32, i32
  }
  func.func @transform_2(%arg0: i32, %arg1: i32) -> (i32, i32, i32, i32) {
    %c2_i32 = arith.constant 2 : i32
    %0 = arith.addi %arg1, %c2_i32 : i32
    %c0_i32 = arith.constant 0 : i32
    %c0_i32_0 = arith.constant 0 : i32
    %c0_i32_1 = arith.constant 0 : i32
    return %arg0, %0, %c0_i32, %c0_i32_0 : i32, i32, i32, i32
  }
  func.func @transform_3(%arg0: i32, %arg1: i32) -> (i32, i32, i32) {
    %c0_i32 = arith.constant 0 : i32
    %c0_i32_0 = arith.constant 0 : i32
    %c0_i32_1 = arith.constant 0 : i32
    %c0_i32_2 = arith.constant 0 : i32
    return %c0_i32, %c0_i32_0, %c0_i32_1 : i32, i32, i32
  }
  func.func @transform_4(%arg0: i32, %arg1: i32) -> (i32, i32) {
    %c0_i32 = arith.constant 0 : i32
    %c0_i32_0 = arith.constant 0 : i32
    %c0_i32_1 = arith.constant 0 : i32
    return %c0_i32, %c0_i32_0 : i32, i32
  }
  func.func @transform_5(%arg0: i32, %arg1: i32) -> (i32, i32) {
    %c0_i32 = arith.constant 0 : i32
    %c0_i32_0 = arith.constant 0 : i32
    %c0_i32_1 = arith.constant 0 : i32
    return %c0_i32, %c0_i32_0 : i32, i32
  }
  func.func @transform_6(%arg0: i32, %arg1: i32) -> (i32, i32) {
    %c0_i32 = arith.constant 0 : i32
    %c0_i32_0 = arith.constant 0 : i32
    %c0_i32_1 = arith.constant 0 : i32
    return %c0_i32, %c0_i32_0 : i32, i32
  }
  func.func @transform_7(%arg0: i32, %arg1: i32) -> (i32, i32, i32, i32) {
    %c0_i32 = arith.constant 0 : i32
    %c0_i32_0 = arith.constant 0 : i32
    %c0_i32_1 = arith.constant 0 : i32
    return %arg0, %arg1, %c0_i32, %c0_i32_0 : i32, i32, i32, i32
  }
}

</mosaic_0001>

<llo_original>
// kernel: tile.9
$region0: #{tile.9}
  %s0 = inlined_call_operand.vmem [shape: f32[8,8], index: 0, kind: input, shape index: {}]
  %s1 = inlined_call_operand.vmem [shape: f32[1,64], index: 1, kind: output, shape index: {}]
  $region1: #{tile.9} parent=0
    #allocation0 [shape = 'u8[4096]{0}', space=vmem, size = 0x1000, scoped, tag = 'scoped mem for output reshape']
    %v2 = vld [vmem:[%s0] sm:$0x1]
    %vm3 = vcmask 64512
    %4 = vst.msk [vmem:[#allocation0] sm:$0x1] %vm3, %v2
    %s5 = scalar_lea.vmem %s0, 7
    %v6 = vld [vmem:[%s5] sm:$0x1]
    %7 = vrot.lane.b32.xlu0 %v6, 56
    %v8 = vpop.permute.xlu0 %7
    %vm9 = vcmask 523712
    %10 = vst.msk [vmem:[#allocation0] sm:$0x1] %vm9, %v8
    %s11 = scalar_lea.vmem %s0, 6
    %v12 = vld [vmem:[%s11] sm:$0x1]
    %13 = vrot.lane.b32.xlu0 %v12, 48
    %v14 = vpop.permute.xlu0 %13
    %vm15 = vcmask 458112
    %16 = vst.msk [vmem:[#allocation0] sm:$0x1] %vm15, %v14
    %s17 = scalar_lea.vmem %s0, 5
    %v18 = vld [vmem:[%s17] sm:$0x1]
    %19 = vrot.lane.b32.xlu0 %v18, 40
    %v20 = vpop.permute.xlu0 %19
    %vm21 = vcmask 392512
    %22 = vst.msk [vmem:[#allocation0] sm:$0x1] %vm21, %v20
    %s23 = scalar_lea.vmem %s0, 4
    %v24 = vld [vmem:[%s23] sm:$0x1]
    %25 = vrot.lane.b32.xlu0 %v24, 32
    %v26 = vpop.permute.xlu0 %25
    %vm27 = vcmask 326912
    %28 = vst.msk [vmem:[#allocation0] sm:$0x1] %vm27, %v26
    %s29 = scalar_lea.vmem %s0, 3
    %v30 = vld [vmem:[%s29] sm:$0x1]
    %31 = vrot.lane.b32.xlu0 %v30, 24
    %v32 = vpop.permute.xlu0 %31
    %vm33 = vcmask 261312
    %34 = vst.msk [vmem:[#allocation0] sm:$0x1] %vm33, %v32
    %s35 = scalar_lea.vmem %s0, 2
    %v36 = vld [vmem:[%s35] sm:$0x1]
    %37 = vrot.lane.b32.xlu0 %v36, 16
    %v38 = vpop.permute.xlu0 %37
    %vm39 = vcmask 195712
    %40 = vst.msk [vmem:[#allocation0] sm:$0x1] %vm39, %v38
    %s41 = scalar_lea.vmem %s0, 1
    %v42 = vld [vmem:[%s41] sm:$0x1]
    %43 = vrot.lane.b32.xlu0 %v42, 8
    %v44 = vpop.permute.xlu0 %43
    %vm45 = vcmask 130112
    %46 = vst.msk [vmem:[#allocation0] sm:$0x1] %vm45, %v44
    %s48 = sshllo.u32 0, 1
    %v50 = vld [vmem:[#allocation0] sm:%s48]
    %s51 = sshllo.u32 0, 1
    %52 = vst [vmem:[%s1] sm:%s51] %v50

// kernel: tile.8
$region0: #{tile.8}
  #allocation2 [shape = 's32[1]{0}', space=sflag, size = 0x4, scoped, tag = 'scoped memory for tile.8']
  %s0 = inlined_call_operand.hbm [shape: f32[8], index: 0, kind: input, shape index: {}]
  %s1 = inlined_call_operand.vmem [shape: f32[8,8], index: 1, kind: output, shape index: {}]
  $region1: #{tile.8} parent=0
    #allocation0 [shape = 'u8[512]{0}', space=vmem, size = 0x400, scoped, tag = 'operand span for operand 0']
    #allocation1 [shape = 's32[1]{0}', space=sflag, size = 0x4, scoped, tag = 'scoped memory for tile.8']
    %2 = vsyncpa [#allocation1], 0
    // Predicated region
    $region2: #{tile.8} parent=1 // pred_check
      _
    $region3: #{tile.8} parent=1 // pred_check_branch
      %4 = sbr.rel (0) target = $region5
    $region4: #{tile.8} parent=1 // pred_region
      %s6 = ssub.s32 16, 16
      %7 = vsyncadd [#allocation1], %s6
      %s9 = sshll.u32 [#allocation0], 4
      %s10 = int_to_ptr.vmem [resolvable:$true] %s9
      %12 = dma.hbm_to_vmem [thread:$0]  %s0, 16, %s10, [#allocation1]
    $region5: #{tile.8} parent=1 // pred_fallthru
      _
    // Predicated region
    $region6: #{tile.8} parent=1 // pred_check
      _
    $region7: #{tile.8} parent=1 // pred_check_branch
      %14 = sbr.rel (0) target = $region9
    $region8: #{tile.8} parent=1 // pred_region
      %15 = dma.done [#allocation1], 16
    $region9: #{tile.8} parent=1 // pred_fallthru
      _
    %v16 = vld [vmem:[#allocation0] ss:$0 sm:$0xff]
    %17 = vst [vmem:[%s1] sm:$0xff] %v16
    %18 = vsyncpa [#allocation1], 1

// kernel: inv_res_trans_block.1
$region0: #{inv_res_trans_block.1}
  #allocation0 [shape = 'u32[]', space=smem, size = 0x4, offset = 0x4, fixed_abs, tag = 'smem constant byte address 0x4 - core index']
  #allocation1 [shape = 'u32[144,128]{1,0:T(1,128)}', space=vmem, size = 0x12000, scoped, tag = 'internal scratch']
  %s0 = inlined_call_operand.vmem [shape: bf16[2,10,104,4], index: 0, kind: input, shape index: {}, may-alias: {0,1,2}]
  %s1 = inlined_call_operand.vmem [shape: bf16[2,10,104,4], index: 1, kind: input, shape index: {}, may-alias: {0,1,2}]
  %s2 = inlined_call_operand.vmem [shape: bf16[2,10,104,4], index: 2, kind: input, shape index: {}, may-alias: {0,1,2}]
  %s3 = inlined_call_operand.vmem [shape: bf16[27,4,4], index: 3, kind: input, shape index: {}]
  %s4 = inlined_call_operand.hbm [shape: f32[1,4], index: 4, kind: input, shape index: {}]
  %s5 = inlined_call_operand.vmem [shape: bf16[4,64], index: 5, kind: input, shape index: {}]
  %s6 = inlined_call_operand.vmem [shape: f32[1,64], index: 6, kind: input, shape index: {}]
  %s7 = inlined_call_operand.vmem [shape: f32[2,8,80,64], index: 7, kind: output, shape index: {}]
  %s8 = sld [smem:[#allocation0]]
  $region65: #{inv_res_trans_block.1} parent=0
    _
  %s10 = ssub.s32 1, %s8
  %s11 = scalar_select 0, %s10, %s8
  $region1: #{inv_res_trans_block.1} parent=0
    #allocation2 [shape = 'u8[512]{0}', space=vmem, size = 0x400, scoped, tag = 'input window, operand 4, single buffered']
    #allocation3 [shape = 's32[2]{0}', space=sflag, size = 0x8, scoped, tag = 'scoped memory for inv_res_trans_block.1']
    %12 = vsyncpa [#allocation3], 0
    loop: start=0, step=1, limit=18
    $region2: #{inv_res_trans_block.1} parent=1 // loop_pre_header
      _
    $region3: #{inv_res_trans_block.1} parent=1 // loop_header
      %s14 = sphi 0, %s18
      %p15 = scmp.ge.s32.totalorder %s14, 18
      %s21 = sphi 0, %s33
      %s22 = sphi 0, %s29
      %s23 = sphi 0, %s21
      %s24 = sphi 0, %s22
      %s25 = sphi 0, %s23
      %s26 = sphi 0, %s24
      %s38 = sphi 0, %s40
      %s41 = sphi 0, %s38
      %s42 = sphi 0, %s41
      %s58 = sphi 0, %s42
      %s68 = sphi 0, %s70
      %s71 = sphi 0, %s68
      %s72 = sphi 0, %s71
      %s88 = sphi 0, %s72
      %s98 = sphi 0, %s100
      %s101 = sphi 0, %s98
      %s102 = sphi 0, %s101
      %s118 = sphi 0, %s102
      %s122 = sphi 0, %s122
      %s124 = sphi 0, %s122
      %s125 = sphi 0, %s124
      %s139 = sphi 0, %s125
      %s143 = sphi 0, %s143
      %s145 = sphi 0, %s143
      %s146 = sphi 0, %s145
      %s160 = sphi 0, %s146
      %s164 = sphi 0, %s164
      %s166 = sphi 0, %s164
      %s167 = sphi 0, %s166
      %s181 = sphi 0, %s167
      %s185 = sphi 0, %s185
      %s187 = sphi 0, %s185
      %s188 = sphi 0, %s187
      %s202 = sphi 0, %s188
      %s210 = sphi 0, %s212
      %s213 = sphi 0, %s210
      %s214 = sphi 0, %s213
      %s230 = sphi 0, %s214
    $region4: #{inv_res_trans_block.1} parent=1 // loop_header_branch
      %17 = sbr.rel (%p15) target = $region8
    $region5: #{inv_res_trans_block.1} parent=1 // loop_body
      %s19 = ssub.s32 %s14, 1
      %s20 = ssub.s32 %s14, 2
      %s27 = sadd.s32 1, %s22
      %p28 = scmp.ge.s32.totalorder %s27, 8
      %s29 = scalar_select %p28, 0, %s27
      %s30 = sadd.s32 1, %s21
      %s31 = scalar_select %p28, %s30, %s21
      %p32 = scmp.ge.s32.totalorder %s31, 2
      %s33 = scalar_select %p32, 0, %s31
      %s34 = ssub.s32 %s21, %s33
      %s35 = ssub.s32 %s22, %s29
      %s36 = sor.u32 %s34, %s35
      %p37 = scmp.eq.s32.totalorder %s36, 0
      %s39 = sadd.s32 %s38, 1
      %s40 = scalar_select %p37, %s38, %s39
      %p43 = pneg %p37
      %p44 = scmp.eq.s32.totalorder %s14, 15
      %p45 = por %p43, %p44
      %p46 = scmp.ne.s32.totalorder %s38, %s41
      %p47 = scmp.eq.s32.totalorder %s14, 0
      %p48 = por %p46, %p47
      %p49 = scmp.ne.s32.totalorder %s38, %s41
      %p50 = scmp.eq.s32.totalorder %s19, 15
      %p51 = por %p49, %p50
      %p52 = scmp.ne.s32.totalorder %s41, %s42
      %p53 = scmp.eq.s32.totalorder %s19, 0
      %p54 = por %p52, %p53
      %p55 = scmp.ne.s32.totalorder %s41, %s42
      %p56 = scmp.eq.s32.totalorder %s20, 15
      %p57 = por %p55, %p56
      %p59 = scmp.ne.s32.totalorder %s42, %s58
      %p60 = scmp.eq.s32.totalorder %s20, 0
      %p61 = por %p59, %p60
      %s62 = sadd.s32 %s22, 1
      %s63 = sadd.s32 %s29, 1
      %s64 = ssub.s32 %s21, %s33
      %s65 = ssub.s32 %s62, %s63
      %s66 = sor.u32 %s64, %s65
      %p67 = scmp.eq.s32.totalorder %s66, 0
      %s69 = sadd.s32 %s68, 1
      %s70 = scalar_select %p67, %s68, %s69
      %p73 = pneg %p67
      %p74 = scmp.eq.s32.totalorder %s14, 15
      %p75 = por %p73, %p74
      %p76 = scmp.ne.s32.totalorder %s68, %s71
      %p77 = scmp.eq.s32.totalorder %s14, 0
      %p78 = por %p76, %p77
      %p79 = scmp.ne.s32.totalorder %s68, %s71
      %p80 = scmp.eq.s32.totalorder %s19, 15
      %p81 = por %p79, %p80
      %p82 = scmp.ne.s32.totalorder %s71, %s72
      %p83 = scmp.eq.s32.totalorder %s19, 0
      %p84 = por %p82, %p83
      %p85 = scmp.ne.s32.totalorder %s71, %s72
      %p86 = scmp.eq.s32.totalorder %s20, 15
      %p87 = por %p85, %p86
      %p89 = scmp.ne.s32.totalorder %s72, %s88
      %p90 = scmp.eq.s32.totalorder %s20, 0
      %p91 = por %p89, %p90
      %s92 = sadd.s32 %s22, 2
      %s93 = sadd.s32 %s29, 2
      %s94 = ssub.s32 %s21, %s33
      %s95 = ssub.s32 %s92, %s93
      %s96 = sor.u32 %s94, %s95
      %p97 = scmp.eq.s32.totalorder %s96, 0
      %s99 = sadd.s32 %s98, 1
      %s100 = scalar_select %p97, %s98, %s99
      %p103 = pneg %p97
      %p104 = scmp.eq.s32.totalorder %s14, 15
      %p105 = por %p103, %p104
      %p106 = scmp.ne.s32.totalorder %s98, %s101
      %p107 = scmp.eq.s32.totalorder %s14, 0
      %p108 = por %p106, %p107
      %p109 = scmp.ne.s32.totalorder %s98, %s101
      %p110 = scmp.eq.s32.totalorder %s19, 15
      %p111 = por %p109, %p110
      %p112 = scmp.ne.s32.totalorder %s101, %s102
      %p113 = scmp.eq.s32.totalorder %s19, 0
      %p114 = por %p112, %p113
      %p115 = scmp.ne.s32.totalorder %s101, %s102
      %p116 = scmp.eq.s32.totalorder %s20, 15
      %p117 = por %p115, %p116
      %p119 = scmp.ne.s32.totalorder %s102, %s118
      %p120 = scmp.eq.s32.totalorder %s20, 0
      %p121 = por %p119, %p120
      %s123 = sadd.s32 %s122, 1
      %p126 = scmp.eq.s32.totalorder %s14, 15
      %p127 = scmp.ne.s32.totalorder %s122, %s124
      %p128 = scmp.eq.s32.totalorder %s14, 0
      %p129 = por %p127, %p128
      %p130 = scmp.ne.s32.totalorder %s122, %s124
      %p131 = scmp.eq.s32.totalorder %s19, 15
      %p132 = por %p130, %p131
      %p133 = scmp.ne.s32.totalorder %s124, %s125
      %p134 = scmp.eq.s32.totalorder %s19, 0
      %p135 = por %p133, %p134
      %p136 = scmp.ne.s32.totalorder %s124, %s125
      %p137 = scmp.eq.s32.totalorder %s20, 15
      %p138 = por %p136, %p137
      %p140 = scmp.ne.s32.totalorder %s125, %s139
      %p141 = scmp.eq.s32.totalorder %s20, 0
      %p142 = por %p140, %p141
      %s144 = sadd.s32 %s143, 1
      %p147 = scmp.eq.s32.totalorder %s14, 15
      %p148 = scmp.ne.s32.totalorder %s143, %s145
      %p149 = scmp.eq.s32.totalorder %s14, 0
      %p150 = por %p148, %p149
      %p151 = scmp.ne.s32.totalorder %s143, %s145
      %p152 = scmp.eq.s32.totalorder %s19, 15
      %p153 = por %p151, %p152
      %p154 = scmp.ne.s32.totalorder %s145, %s146
      %p155 = scmp.eq.s32.totalorder %s19, 0
      %p156 = por %p154, %p155
      %p157 = scmp.ne.s32.totalorder %s145, %s146
      %p158 = scmp.eq.s32.totalorder %s20, 15
      %p159 = por %p157, %p158
      %p161 = scmp.ne.s32.totalorder %s146, %s160
      %p162 = scmp.eq.s32.totalorder %s20, 0
      %p163 = por %p161, %p162
      %s165 = sadd.s32 %s164, 1
      %p168 = scmp.eq.s32.totalorder %s14, 15
      %p169 = scmp.ne.s32.totalorder %s164, %s166
      %p170 = scmp.eq.s32.totalorder %s14, 0
      %p171 = por %p169, %p170
      %p172 = scmp.ne.s32.totalorder %s164, %s166
      %p173 = scmp.eq.s32.totalorder %s19, 15
      %p174 = por %p172, %p173
      %p175 = scmp.ne.s32.totalorder %s166, %s167
      %p176 = scmp.eq.s32.totalorder %s19, 0
      %p177 = por %p175, %p176
      %p178 = scmp.ne.s32.totalorder %s166, %s167
      %p179 = scmp.eq.s32.totalorder %s20, 15
      %p180 = por %p178, %p179
      %p182 = scmp.ne.s32.totalorder %s167, %s181
      %p183 = scmp.eq.s32.totalorder %s20, 0
      %p184 = por %p182, %p183
      %s186 = sadd.s32 %s185, 1
      %p189 = scmp.eq.s32.totalorder %s14, 15
      %p190 = scmp.ne.s32.totalorder %s185, %s187
      %p191 = scmp.eq.s32.totalorder %s14, 0
      %p192 = por %p190, %p191
      %p193 = scmp.ne.s32.totalorder %s185, %s187
      %p194 = scmp.eq.s32.totalorder %s19, 15
      %p195 = por %p193, %p194
      %p196 = scmp.ne.s32.totalorder %s187, %s188
      %p197 = scmp.eq.s32.totalorder %s19, 0
      %p198 = por %p196, %p197
      %p199 = scmp.ne.s32.totalorder %s187, %s188
      %p200 = scmp.eq.s32.totalorder %s20, 15
      %p201 = por %p199, %p200
      %p203 = scmp.ne.s32.totalorder %s188, %s202
      %p204 = scmp.eq.s32.totalorder %s20, 0
      %p205 = por %p203, %p204
      %s206 = ssub.s32 %s21, %s33
      %s207 = ssub.s32 %s22, %s29
      %s208 = sor.u32 %s206, %s207
      %p209 = scmp.eq.s32.totalorder %s208, 0
      %s211 = sadd.s32 %s210, 1
      %s212 = scalar_select %p209, %s210, %s211
      %p215 = pneg %p209
      %p216 = scmp.eq.s32.totalorder %s14, 15
      %p217 = por %p215, %p216
      %p218 = scmp.ne.s32.totalorder %s210, %s213
      %p219 = scmp.eq.s32.totalorder %s14, 0
      %p220 = por %p218, %p219
      %p221 = scmp.ne.s32.totalorder %s210, %s213
      %p222 = scmp.eq.s32.totalorder %s19, 15
      %p223 = por %p221, %p222
      %p224 = scmp.ne.s32.totalorder %s213, %s214
      %p225 = scmp.eq.s32.totalorder %s19, 0
      %p226 = por %p224, %p225
      %p227 = scmp.ne.s32.totalorder %s213, %s214
      %p228 = scmp.eq.s32.totalorder %s20, 15
      %p229 = por %p227, %p228
      %p231 = scmp.ne.s32.totalorder %s214, %s230
      %p232 = scmp.eq.s32.totalorder %s20, 0
      %p233 = por %p231, %p232
      %p234 = scmp.le.s32.totalorder 1, %s14
      %p235 = scmp.lt.s32.totalorder %s14, 17
      %p236 = pnand %p234, %p235
      %p237 = pneg %p236
      // Predicated region
      $region9: #{inv_res_trans_block.1} parent=5 // pred_check
        _
      $region10: #{inv_res_trans_block.1} parent=5 // pred_check_branch
        %239 = sbr.rel (%p236) target = $region12
      $region11: #{inv_res_trans_block.1} parent=5 // pred_region
        %s240 = ssub.s32 %s14, 1
        // Predicated region
        $region13: #{inv_res_trans_block.1} parent=11 // pred_check
          %p241 = pneg %p135
        $region14: #{inv_res_trans_block.1} parent=11 // pred_check_branch
          %243 = sbr.rel (%p241) target = $region16
        $region15: #{inv_res_trans_block.1} parent=11 // pred_region
          _
        $region16: #{inv_res_trans_block.1} parent=11 // pred_fallthru
          _
        // Predicated region
        $region17: #{inv_res_trans_block.1} parent=11 // pred_check
          %p244 = pneg %p156
        $region18: #{inv_res_trans_block.1} parent=11 // pred_check_branch
          %246 = sbr.rel (%p244) target = $region20
        $region19: #{inv_res_trans_block.1} parent=11 // pred_region
          %s248 = ssub.s32 16, 16
          %249 = vsyncadd [#allocation3], %s248
          %s251 = sshll.u32 [#allocation2], 4
          %s252 = int_to_ptr.vmem [resolvable:$true] %s251
          %254 = dma.hbm_to_vmem [thread:$0]  %s4, 16, %s252, [#allocation3]
        $region20: #{inv_res_trans_block.1} parent=11 // pred_fallthru
          _
        // Predicated region
        $region21: #{inv_res_trans_block.1} parent=11 // pred_check
          %p255 = pneg %p177
        $region22: #{inv_res_trans_block.1} parent=11 // pred_check_branch
          %257 = sbr.rel (%p255) target = $region24
        $region23: #{inv_res_trans_block.1} parent=11 // pred_region
          _
        $region24: #{inv_res_trans_block.1} parent=11 // pred_fallthru
          _
        // Predicated region
        $region25: #{inv_res_trans_block.1} parent=11 // pred_check
          %p258 = pneg %p198
        $region26: #{inv_res_trans_block.1} parent=11 // pred_check_branch
          %260 = sbr.rel (%p258) target = $region28
        $region27: #{inv_res_trans_block.1} parent=11 // pred_region
          _
        $region28: #{inv_res_trans_block.1} parent=11 // pred_fallthru
          _
      $region12: #{inv_res_trans_block.1} parent=5 // pred_fallthru
        _
      %p261 = scmp.lt.s32.totalorder %s14, 16
      // Predicated region
      $region29: #{inv_res_trans_block.1} parent=5 // pred_check
        %p262 = pneg %p261
      $region30: #{inv_res_trans_block.1} parent=5 // pred_check_branch
        %264 = sbr.rel (%p262) target = $region32
      $region31: #{inv_res_trans_block.1} parent=5 // pred_region
        // Predicated region
        $region33: #{inv_res_trans_block.1} parent=31 // pred_check
          %p265 = pneg %p48
        $region34: #{inv_res_trans_block.1} parent=31 // pred_check_branch
          %267 = sbr.rel (%p265) target = $region36
        $region35: #{inv_res_trans_block.1} parent=31 // pred_region
          %p268 = scmp.lt.s32.totalorder %s21, 1
          %s269 = scalar_select %p268, %s21, 1
          %p270 = scmp.lt.s32.totalorder %s22, 9
          %s271 = scalar_select %p270, %s22, 9
          %s272 = smul.addr %s271, 13
          %s273 = smul.addr %s269, 130
          %s274 = sadd.s32 %s272, %s273
          %s275 = smul.addr %s274, 4
          %s276 = scalar_lea.vmem %s0, %s275
        $region36: #{inv_res_trans_block.1} parent=31 // pred_fallthru
          _
        // Predicated region
        $region37: #{inv_res_trans_block.1} parent=31 // pred_check
          %p277 = pneg %p78
        $region38: #{inv_res_trans_block.1} parent=31 // pred_check_branch
          %279 = sbr.rel (%p277) target = $region40
        $region39: #{inv_res_trans_block.1} parent=31 // pred_region
          %s280 = sadd.s32 %s22, 1
          %p281 = scmp.lt.s32.totalorder %s21, 1
          %s282 = scalar_select %p281, %s21, 1
          %p283 = scmp.lt.s32.totalorder %s280, 9
          %s284 = scalar_select %p283, %s280, 9
          %s285 = smul.addr %s284, 13
          %s286 = smul.addr %s282, 130
          %s287 = sadd.s32 %s285, %s286
          %s288 = smul.addr %s287, 4
          %s289 = scalar_lea.vmem %s1, %s288
          %s290 = sadd.s32 %s22, 1
        $region40: #{inv_res_trans_block.1} parent=31 // pred_fallthru
          _
        // Predicated region
        $region41: #{inv_res_trans_block.1} parent=31 // pred_check
          %p291 = pneg %p108
        $region42: #{inv_res_trans_block.1} parent=31 // pred_check_branch
          %293 = sbr.rel (%p291) target = $region44
        $region43: #{inv_res_trans_block.1} parent=31 // pred_region
          %s294 = sadd.s32 %s22, 2
          %p295 = scmp.lt.s32.totalorder %s21, 1
          %s296 = scalar_select %p295, %s21, 1
          %p297 = scmp.lt.s32.totalorder %s294, 9
          %s298 = scalar_select %p297, %s294, 9
          %s299 = smul.addr %s298, 13
          %s300 = smul.addr %s296, 130
          %s301 = sadd.s32 %s299, %s300
          %s302 = smul.addr %s301, 4
          %s303 = scalar_lea.vmem %s2, %s302
          %s304 = sadd.s32 %s22, 2
        $region44: #{inv_res_trans_block.1} parent=31 // pred_fallthru
          _
      $region32: #{inv_res_trans_block.1} parent=5 // pred_fallthru
        _
      %p305 = scmp.le.s32.totalorder 1, %s14
      %p306 = scmp.lt.s32.totalorder %s14, 17
      %p307 = pnand %p305, %p306
      %p308 = pneg %p307
      // Predicated region
      $region45: #{inv_res_trans_block.1} parent=5 // pred_check
        _
      $region46: #{inv_res_trans_block.1} parent=5 // pred_check_branch
        %310 = sbr.rel (%p307) target = $region48
      $region47: #{inv_res_trans_block.1} parent=5 // pred_region
        %s311 = ssub.s32 %s14, 1
        // Predicated region
        $region49: #{inv_res_trans_block.1} parent=47 // pred_check
          %p312 = pneg %p156
        $region50: #{inv_res_trans_block.1} parent=47 // pred_check_branch
          %314 = sbr.rel (%p312) target = $region52
        $region51: #{inv_res_trans_block.1} parent=47 // pred_region
          %315 = dma.done [#allocation3], 16
        $region52: #{inv_res_trans_block.1} parent=47 // pred_fallthru
          _
        %p316 = scmp.lt.s32.totalorder %s23, 1
        %s317 = scalar_select %p316, %s23, 1
        %p318 = scmp.lt.s32.totalorder %s24, 9
        %s319 = scalar_select %p318, %s24, 9
        %s320 = smul.addr %s319, 13
        %s321 = smul.addr %s317, 130
        %s322 = sadd.s32 %s320, %s321
        %s323 = smul.addr %s322, 4
        %s324 = scalar_lea.vmem %s0, %s323
        %p325 = pneg %p54
        %p326 = pneg %p51
        %s327 = sadd.s32 %s24, 1
        %p328 = scmp.lt.s32.totalorder %s23, 1
        %s329 = scalar_select %p328, %s23, 1
        %p330 = scmp.lt.s32.totalorder %s327, 9
        %s331 = scalar_select %p330, %s327, 9
        %s332 = smul.addr %s331, 13
        %s333 = smul.addr %s329, 130
        %s334 = sadd.s32 %s332, %s333
        %s335 = smul.addr %s334, 4
        %s336 = scalar_lea.vmem %s1, %s335
        %p337 = pneg %p84
        %p338 = pneg %p81
        %s339 = sadd.s32 %s24, 2
        %p340 = scmp.lt.s32.totalorder %s23, 1
        %s341 = scalar_select %p340, %s23, 1
        %p342 = scmp.lt.s32.totalorder %s339, 9
        %s343 = scalar_select %p342, %s339, 9
        %s344 = smul.addr %s343, 13
        %s345 = smul.addr %s341, 130
        %s346 = sadd.s32 %s344, %s345
        %s347 = smul.addr %s346, 4
        %s348 = scalar_lea.vmem %s2, %s347
        %p349 = pneg %p114
        %p350 = pneg %p111
        %p351 = pneg %p135
        %p352 = pneg %p132
        %p353 = pneg %p156
        %p354 = pneg %p153
        %p355 = pneg %p177
        %p356 = pneg %p174
        %p357 = pneg %p198
        %p358 = pneg %p195
        %p359 = pneg %p226
        %p360 = pneg %p223
        %p361 = scmp.lt.s32.totalorder %s23, 1
        %s362 = scalar_select %p361, %s23, 1
        %p363 = scmp.lt.s32.totalorder %s24, 7
        %s364 = scalar_select %p363, %s24, 7
        %s365 = smul.addr %s364, 10
        %s366 = smul.addr %s362, 80
        %s367 = sadd.s32 %s365, %s366
        %s368 = smul.addr %s367, 8
        %s369 = scalar_lea.vmem %s7, %s368
        %p370 = scmp.lt.s32.totalorder %s23, 1
        %s371 = scalar_select %p370, %s23, 1
        %p372 = scmp.lt.s32.totalorder %s24, 9
        %s373 = scalar_select %p372, %s24, 9
        %s374 = smul.addr %s373, 13
        %s375 = smul.addr %s371, 130
        %s376 = sadd.s32 %s374, %s375
        %s377 = smul.addr %s376, 4
        %s378 = scalar_lea.vmem %s0, %s377
        %s379 = sadd.s32 %s24, 1
        %p380 = scmp.lt.s32.totalorder %s23, 1
        %s381 = scalar_select %p380, %s23, 1
        %p382 = scmp.lt.s32.totalorder %s379, 9
        %s383 = scalar_select %p382, %s379, 9
        %s384 = smul.addr %s383, 13
        %s385 = smul.addr %s381, 130
        %s386 = sadd.s32 %s384, %s385
        %s387 = smul.addr %s386, 4
        %s388 = scalar_lea.vmem %s1, %s387
        %s389 = sadd.s32 %s24, 1
        %s390 = sadd.s32 %s24, 2
        %p391 = scmp.lt.s32.totalorder %s23, 1
        %s392 = scalar_select %p391, %s23, 1
        %p393 = scmp.lt.s32.totalorder %s390, 9
        %s394 = scalar_select %p393, %s390, 9
        %s395 = smul.addr %s394, 13
        %s396 = smul.addr %s392, 130
        %s397 = sadd.s32 %s395, %s396
        %s398 = smul.addr %s397, 4
        %s399 = scalar_lea.vmem %s2, %s398
        %s400 = sadd.s32 %s24, 2
        %p401 = scmp.lt.s32.totalorder %s23, 1
        %s402 = scalar_select %p401, %s23, 1
        %p403 = scmp.lt.s32.totalorder %s24, 7
        %s404 = scalar_select %p403, %s24, 7
        %s405 = smul.addr %s404, 10
        %s406 = smul.addr %s402, 80
        %s407 = sadd.s32 %s405, %s406
        %s408 = smul.addr %s407, 8
        %s409 = scalar_lea.vmem %s7, %s408
        %v411 = vld [vmem:[%s378] sm:$0xf]
        %v412 = vld [vmem:[%s378 + $0x4] sm:$0xf]
        %v413 = vld [vmem:[%s378 + $0x8] sm:$0xf]
        %v414 = vld [vmem:[%s378 + $0xc] sm:$0xf]
        %v415 = vld [vmem:[%s378 + $0x10] sm:$0xf]
        %v416 = vld [vmem:[%s378 + $0x14] sm:$0xf]
        %v417 = vld [vmem:[%s378 + $0x18] sm:$0xf]
        %v418 = vld [vmem:[%s378 + $0x1c] sm:$0xf]
        %v419 = vld [vmem:[%s378 + $0x20] sm:$0xf]
        %v420 = vld [vmem:[%s378 + $0x24] sm:$0xf]
        %v421 = vld [vmem:[%s3] sm:$0x3]
        %v422 = vld [vmem:[%s378 + $0x28] sm:$0x1]
        %s423 = scalar_lea.vmem %s3, 2
        %v424 = vld [vmem:[%s423] sm:$0x3]
        %v436 = vunpack.c.l.b16 %v411
        %v437 = vunpack.c.l.b16 %v412
        %v438 = vunpack.c.l.b16 %v413
        %v439 = vunpack.c.l.b16 %v414
        %v440 = vunpack.c.l.b16 %v415
        %v441 = vunpack.c.l.b16 %v416
        %v442 = vunpack.c.l.b16 %v417
        %v443 = vunpack.c.l.b16 %v418
        %v444 = vunpack.c.l.b16 %v419
        %v445 = vunpack.c.l.b16 %v420
        %v446 = vunpack.c.l.b16 %v422
        %v447 = vpack.c.b16 %v437, %v436
        %v448 = vpack.c.b16 %v439, %v438
        %v449 = vpack.c.b16 %v441, %v440
        %v450 = vpack.c.b16 %v443, %v442
        %v451 = vpack.c.b16 %v445, %v444
        %v452 = vpack.c.b16 %v446, %v446
        %vm453 = vsmask.f32 7424
        %v455 = vshrl.u32 %v447, 16
        %v457 = vshll.u32 %v447, 16
        %v459 = vrot.slane %v457, 1
        %v460 = vor.u32 %v455, %v459
        %v462 = vshll.u32 %v448, 16
        %v464 = vrot.slane %v462, 1
        %v465 = vsel %vm453, %v460, %v464
        %v466 = vshrl.u32 %v448, 16
        %v468 = vor.u32 %v466, %v464
        %v470 = vshll.u32 %v449, 16
        %v472 = vrot.slane %v470, 1
        %v473 = vsel %vm453, %v468, %v472
        %v474 = vshrl.u32 %v449, 16
        %v476 = vor.u32 %v474, %v472
        %v478 = vshll.u32 %v450, 16
        %v480 = vrot.slane %v478, 1
        %v481 = vsel %vm453, %v476, %v480
        %v482 = vshrl.u32 %v450, 16
        %v484 = vor.u32 %v482, %v480
        %v486 = vshll.u32 %v451, 16
        %v488 = vrot.slane %v486, 1
        %v489 = vsel %vm453, %v484, %v488
        %v490 = vshrl.u32 %v451, 16
        %v492 = vor.u32 %v490, %v488
        %v494 = vshll.u32 %v452, 16
        %v496 = vrot.slane %v494, 1
        %v497 = vsel %vm453, %v492, %v496
        %vm498 = vcmask 31744
        %v500 = vsel %vm498, %v465, 0
        %v503 = vsel %vm498, %v473, 0
        %v506 = vsel %vm498, %v481, 0
        %v509 = vsel %vm498, %v489, 0
        %v512 = vsel %vm498, %v497, 0
        %vm514 = vcmask 1041408
        %v516 = vsel %vm514, %v424, 0
        %518 = vmatprep.subr.bf16.mxu0 0
        %519 = vmatpush1.bf16.msra.mxu0 %v516
        %520 = vmatprep.subr.bf16.mxu0 0
        %521 = vmatpush1.bf16.msra.mxu0 0
        %522 = vmatprep.subr.bf16.mxu0 0
        %523 = vmatpush1.bf16.msra.mxu0 0
        %524 = vmatprep.subr.bf16.mxu0 0
        %525 = vmatpush1.bf16.msra.mxu0 0
        %526 = vmatprep.subr.bf16.mxu0 0
        %527 = vmatpush1.bf16.msra.mxu0 0
        %528 = vmatprep.subr.bf16.mxu0 0
        %529 = vmatpush1.bf16.msra.mxu0 0
        %530 = vmatprep.subr.bf16.mxu0 0
        %531 = vmatpush1.bf16.msra.mxu0 0
        %532 = vmatprep.subr.bf16.mxu0 0
        %533 = vmatpush1.bf16.msra.mxu0 0
        %534 = vmatprep.subr.bf16.mxu0 0
        %535 = vmatpush1.bf16.msra.mxu0 0
        %536 = vmatprep.subr.bf16.mxu0 0
        %537 = vmatpush1.bf16.msra.mxu0 0
        %538 = vmatprep.subr.bf16.mxu0 0
        %539 = vmatpush1.bf16.msra.mxu0 0
        %540 = vmatprep.subr.bf16.mxu0 0
        %541 = vmatpush1.bf16.msra.mxu0 0
        %542 = vmatprep.subr.bf16.mxu0 0
        %543 = vmatpush1.bf16.msra.mxu0 0
        %544 = vmatprep.subr.bf16.mxu0 0
        %545 = vmatpush1.bf16.msra.mxu0 0
        %546 = vmatprep.subr.bf16.mxu0 0
        %547 = vmatpush1.bf16.msra.mxu0 0
        %548 = vmatprep.subr.bf16.mxu0 0
        %549 = vmatpush1.bf16.msra.mxu0 0
        %550 = vmatprep.mubr.bf16.mxu0 0
        %551 = vmatmul.mubr.bf16.gmra.mrb[0].mxu0 %v500
        %v552 = vpop.f32.mrb[0].mxu0
        %v553 = vadd.f32 0.0, %v552
        %v554 = vpop.f32.mrb[0].mxu0
        %v555 = vpop.f32.mrb[0].mxu0
        %v556 = vadd.f32 0.0, %v555
        %v557 = vpop.f32.mrb[0].mxu0
        %558 = vmatprep.mubr.bf16.mxu0 0
        %559 = vmatmul.mubr.bf16.gmra.mrb[0].mxu0 %v503
        %v560 = vpop.f32.mrb[0].mxu0
        %v561 = vadd.f32 0.0, %v560
        %v562 = vpop.f32.mrb[0].mxu0
        %v563 = vpop.f32.mrb[0].mxu0
        %v564 = vadd.f32 0.0, %v563
        %v565 = vpop.f32.mrb[0].mxu0
        %566 = vmatprep.mubr.bf16.mxu0 0
        %567 = vmatmul.mubr.bf16.gmra.mrb[0].mxu0 %v506
        %v568 = vpop.f32.mrb[0].mxu0
        %v569 = vadd.f32 0.0, %v568
        %v570 = vpop.f32.mrb[0].mxu0
        %v571 = vpop.f32.mrb[0].mxu0
        %v572 = vadd.f32 0.0, %v571
        %v573 = vpop.f32.mrb[0].mxu0
        %574 = vmatprep.mubr.bf16.mxu0 0
        %575 = vmatmul.mubr.bf16.gmra.mrb[0].mxu0 %v509
        %v576 = vpop.f32.mrb[0].mxu0
        %v577 = vadd.f32 0.0, %v576
        %v578 = vpop.f32.mrb[0].mxu0
        %v579 = vpop.f32.mrb[0].mxu0
        %v580 = vadd.f32 0.0, %v579
        %v581 = vpop.f32.mrb[0].mxu0
        %582 = vmatprep.mubr.bf16.mxu0 0
        %583 = vmatmul.mubr.bf16.gmra.mrb[0].mxu0 %v512
        %v584 = vpop.f32.mrb[0].mxu0
        %v585 = vadd.f32 0.0, %v584
        %v586 = vpop.f32.mrb[0].mxu0
        %v587 = vpop.f32.mrb[0].mxu0
        %v588 = vadd.f32 0.0, %v587
        %v589 = vpop.f32.mrb[0].mxu0
        %590 = vdwg.mxu0
        %v591 = vsel %vm498, %v447, 0
        %v593 = vsel %vm498, %v448, 0
        %v595 = vsel %vm498, %v449, 0
        %v597 = vsel %vm498, %v450, 0
        %v599 = vsel %vm498, %v451, 0
        %v602 = vsel %vm514, %v421, 0
        %604 = vmatprep.subr.bf16.mxu0 0
        %605 = vmatpush1.bf16.msra.mxu0 %v602
        %606 = vmatprep.subr.bf16.mxu0 0
        %607 = vmatpush1.bf16.msra.mxu0 0
        %608 = vmatprep.subr.bf16.mxu0 0
        %609 = vmatpush1.bf16.msra.mxu0 0
        %610 = vmatprep.subr.bf16.mxu0 0
        %611 = vmatpush1.bf16.msra.mxu0 0
        %612 = vmatprep.subr.bf16.mxu0 0
        %613 = vmatpush1.bf16.msra.mxu0 0
        %614 = vmatprep.subr.bf16.mxu0 0
        %615 = vmatpush1.bf16.msra.mxu0 0
        %616 = vmatprep.subr.bf16.mxu0 0
        %617 = vmatpush1.bf16.msra.mxu0 0
        %618 = vmatprep.subr.bf16.mxu0 0
        %619 = vmatpush1.bf16.msra.mxu0 0
        %620 = vmatprep.subr.bf16.mxu0 0
        %621 = vmatpush1.bf16.msra.mxu0 0
        %622 = vmatprep.subr.bf16.mxu0 0
        %623 = vmatpush1.bf16.msra.mxu0 0
        %624 = vmatprep.subr.bf16.mxu0 0
        %625 = vmatpush1.bf16.msra.mxu0 0
        %626 = vmatprep.subr.bf16.mxu0 0
        %627 = vmatpush1.bf16.msra.mxu0 0
        %628 = vmatprep.subr.bf16.mxu0 0
        %629 = vmatpush1.bf16.msra.mxu0 0
        %630 = vmatprep.subr.bf16.mxu0 0
        %631 = vmatpush1.bf16.msra.mxu0 0
        %632 = vmatprep.subr.bf16.mxu0 0
        %633 = vmatpush1.bf16.msra.mxu0 0
        %634 = vmatprep.subr.bf16.mxu0 0
        %635 = vmatpush1.bf16.msra.mxu0 0
        %636 = vmatprep.mubr.bf16.mxu0 0
        %637 = vmatmul.mubr.bf16.gmra.mrb[0].mxu0 %v591
        %v638 = vpop.f32.mrb[0].mxu0
        %v639 = vadd.f32 %v553, %v638
        %v640 = vpop.f32.mrb[0].mxu0
        %v641 = vpop.f32.mrb[0].mxu0
        %v642 = vadd.f32 %v556, %v641
        %v643 = vpop.f32.mrb[0].mxu0
        %644 = vmatprep.mubr.bf16.mxu0 0
        %645 = vmatmul.mubr.bf16.gmra.mrb[0].mxu0 %v593
        %v646 = vpop.f32.mrb[0].mxu0
        %v647 = vadd.f32 %v561, %v646
        %v648 = vpop.f32.mrb[0].mxu0
        %v649 = vpop.f32.mrb[0].mxu0
        %v650 = vadd.f32 %v564, %v649
        %v651 = vpop.f32.mrb[0].mxu0
        %652 = vmatprep.mubr.bf16.mxu0 0
        %653 = vmatmul.mubr.bf16.gmra.mrb[0].mxu0 %v595
        %v654 = vpop.f32.mrb[0].mxu0
        %v655 = vadd.f32 %v569, %v654
        %v656 = vpop.f32.mrb[0].mxu0
        %v657 = vpop.f32.mrb[0].mxu0
        %v658 = vadd.f32 %v572, %v657
        %v659 = vpop.f32.mrb[0].mxu0
        %660 = vmatprep.mubr.bf16.mxu0 0
        %661 = vmatmul.mubr.bf16.gmra.mrb[0].mxu0 %v597
        %v662 = vpop.f32.mrb[0].mxu0
        %v663 = vadd.f32 %v577, %v662
        %v664 = vpop.f32.mrb[0].mxu0
        %v665 = vpop.f32.mrb[0].mxu0
        %v666 = vadd.f32 %v580, %v665
        %v667 = vpop.f32.mrb[0].mxu0
        %668 = vmatprep.mubr.bf16.mxu0 0
        %669 = vmatmul.mubr.bf16.gmra.mrb[0].mxu0 %v599
        %v670 = vpop.f32.mrb[0].mxu0
        %v671 = vadd.f32 %v585, %v670
        %v672 = vpop.f32.mrb[0].mxu0
        %v673 = vpop.f32.mrb[0].mxu0
        %v674 = vadd.f32 %v588, %v673
        %v675 = vpop.f32.mrb[0].mxu0
        %676 = vdwg.mxu0
        %v677 = vld [vmem:[%s378] sm:$0xe]
        %s678 = scalar_lea.vmem %s3, 4
        %v679 = vld [vmem:[%s678] sm:$0x3]
        %v681 = vunpack.c.l.b16 %v677
        %v682 = vpack.c.b16 %v437, %v681
        %vm683 = vcmask 1046528
        %v684 = vrot.slane %v682, 1
        %v685 = vrot.slane %v448, 1
        %v686 = vsel %vm683, %v684, %v685
        %v687 = vrot.slane %v449, 1
        %v688 = vsel %vm683, %v685, %v687
        %v689 = vrot.slane %v450, 1
        %v690 = vsel %vm683, %v687, %v689
        %v691 = vrot.slane %v451, 1
        %v692 = vsel %vm683, %v689, %v691
        %v693 = vrot.slane %v452, 1
        %v694 = vsel %vm683, %v691, %v693
        %v696 = vsel %vm498, %v686, 0
        %v699 = vsel %vm498, %v688, 0
        %v702 = vsel %vm498, %v690, 0
        %v705 = vsel %vm498, %v692, 0
        %v708 = vsel %vm498, %v694, 0
        %v711 = vsel %vm514, %v679, 0
        %713 = vmatprep.subr.bf16.mxu0 0
        %714 = vmatpush1.bf16.msra.mxu0 %v711
        %715 = vmatprep.subr.bf16.mxu0 0
        %716 = vmatpush1.bf16.msra.mxu0 0
        %717 = vmatprep.subr.bf16.mxu0 0
        %718 = vmatpush1.bf16.msra.mxu0 0
        %719 = vmatprep.subr.bf16.mxu0 0
        %720 = vmatpush1.bf16.msra.mxu0 0
        %721 = vmatprep.subr.bf16.mxu0 0
        %722 = vmatpush1.bf16.msra.mxu0 0
        %723 = vmatprep.subr.bf16.mxu0 0
        %724 = vmatpush1.bf16.msra.mxu0 0
        %725 = vmatprep.subr.bf16.mxu0 0
        %726 = vmatpush1.bf16.msra.mxu0 0
        %727 = vmatprep.subr.bf16.mxu0 0
        %728 = vmatpush1.bf16.msra.mxu0 0
        %729 = vmatprep.subr.bf16.mxu0 0
        %730 = vmatpush1.bf16.msra.mxu0 0
        %731 = vmatprep.subr.bf16.mxu0 0
        %732 = vmatpush1.bf16.msra.mxu0 0
        %733 = vmatprep.subr.bf16.mxu0 0
        %734 = vmatpush1.bf16.msra.mxu0 0
        %735 = vmatprep.subr.bf16.mxu0 0
        %736 = vmatpush1.bf16.msra.mxu0 0
        %737 = vmatprep.subr.bf16.mxu0 0
        %738 = vmatpush1.bf16.msra.mxu0 0
        %739 = vmatprep.subr.bf16.mxu0 0
        %740 = vmatpush1.bf16.msra.mxu0 0
        %741 = vmatprep.subr.bf16.mxu0 0
        %742 = vmatpush1.bf16.msra.mxu0 0
        %743 = vmatprep.subr.bf16.mxu0 0
        %744 = vmatpush1.bf16.msra.mxu0 0
        %745 = vmatprep.mubr.bf16.mxu0 0
        %746 = vmatmul.mubr.bf16.gmra.mrb[0].mxu0 %v696
        %v747 = vpop.f32.mrb[0].mxu0
        %v748 = vadd.f32 0.0, %v747
        %v749 = vpop.f32.mrb[0].mxu0
        %v750 = vpop.f32.mrb[0].mxu0
        %v751 = vadd.f32 0.0, %v750
        %v752 = vpop.f32.mrb[0].mxu0
        %753 = vmatprep.mubr.bf16.mxu0 0
        %754 = vmatmul.mubr.bf16.gmra.mrb[0].mxu0 %v699
        %v755 = vpop.f32.mrb[0].mxu0
        %v756 = vadd.f32 0.0, %v755
        %v757 = vpop.f32.mrb[0].mxu0
        %v758 = vpop.f32.mrb[0].mxu0
        %v759 = vadd.f32 0.0, %v758
        %v760 = vpop.f32.mrb[0].mxu0
        %761 = vmatprep.mubr.bf16.mxu0 0
        %762 = vmatmul.mubr.bf16.gmra.mrb[0].mxu0 %v702
        %v763 = vpop.f32.mrb[0].mxu0
        %v764 = vadd.f32 0.0, %v763
        %v765 = vpop.f32.mrb[0].mxu0
        %v766 = vpop.f32.mrb[0].mxu0
        %v767 = vadd.f32 0.0, %v766
        %v768 = vpop.f32.mrb[0].mxu0
        %769 = vmatprep.mubr.bf16.mxu0 0
        %770 = vmatmul.mubr.bf16.gmra.mrb[0].mxu0 %v705
        %v771 = vpop.f32.mrb[0].mxu0
        %v772 = vadd.f32 0.0, %v771
        %v773 = vpop.f32.mrb[0].mxu0
        %v774 = vpop.f32.mrb[0].mxu0
        %v775 = vadd.f32 0.0, %v774
        %v776 = vpop.f32.mrb[0].mxu0
        %777 = vmatprep.mubr.bf16.mxu0 0
        %778 = vmatmul.mubr.bf16.gmra.mrb[0].mxu0 %v708
        %v779 = vpop.f32.mrb[0].mxu0
        %v780 = vadd.f32 0.0, %v779
        %v781 = vpop.f32.mrb[0].mxu0
        %v782 = vpop.f32.mrb[0].mxu0
        %v783 = vadd.f32 0.0, %v782
        %v784 = vpop.f32.mrb[0].mxu0
        %785 = vdwg.mxu0
        %v786 = vadd.f32 %v639, %v748
        %v787 = vadd.f32 %v642, %v751
        %v788 = vadd.f32 %v647, %v756
        %v789 = vadd.f32 %v650, %v759
        %v790 = vadd.f32 %v655, %v764
        %v791 = vadd.f32 %v658, %v767
        %v792 = vadd.f32 %v663, %v772
        %v793 = vadd.f32 %v666, %v775
        %v794 = vadd.f32 %v671, %v780
        %v795 = vadd.f32 %v674, %v783
        %v796 = vld [vmem:[%s378 + $0x4] sm:$0xe]
        %v797 = vld [vmem:[%s378 + $0x8] sm:$0xf]
        %v798 = vld [vmem:[%s378 + $0xc] sm:$0xf]
        %v799 = vld [vmem:[%s378 + $0x10] sm:$0xf]
        %v800 = vld [vmem:[%s378 + $0x14] sm:$0xf]
        %v801 = vld [vmem:[%s378 + $0x18] sm:$0xf]
        %v802 = vld [vmem:[%s378 + $0x1c] sm:$0xf]
        %v803 = vld [vmem:[%s378 + $0x20] sm:$0xf]
        %v804 = vld [vmem:[%s378 + $0x24] sm:$0xf]
        %v805 = vld [vmem:[%s378 + $0x28] sm:$0xf]
        %v806 = vld [vmem:[%s378 + $0x2c] sm:$0x1]
        %s807 = scalar_lea.vmem %s3, 6
        %v808 = vld [vmem:[%s807] sm:$0x3]
        %v820 = vunpack.c.l.b16 %v796
        %v821 = vunpack.c.l.b16 %v797
        %v822 = vunpack.c.l.b16 %v798
        %v823 = vunpack.c.l.b16 %v799
        %v824 = vunpack.c.l.b16 %v800
        %v825 = vunpack.c.l.b16 %v801
        %v826 = vunpack.c.l.b16 %v802
        %v827 = vunpack.c.l.b16 %v803
        %v828 = vunpack.c.l.b16 %v804
        %v829 = vunpack.c.l.b16 %v805
        %v830 = vunpack.c.l.b16 %v806
        %v831 = vpack.c.b16 %v821, %v820
        %v832 = vpack.c.b16 %v823, %v822
        %v833 = vpack.c.b16 %v825, %v824
        %v834 = vpack.c.b16 %v827, %v826
        %v835 = vpack.c.b16 %v829, %v828
        %v836 = vpack.c.b16 %v830, %v830
        %v837 = vrot.slane %v831, 1
        %v838 = vrot.slane %v832, 1
        %v839 = vsel %vm683, %v837, %v838
        %v840 = vrot.slane %v833, 1
        %v841 = vsel %vm683, %v838, %v840
        %v842 = vrot.slane %v834, 1
        %v843 = vsel %vm683, %v840, %v842
        %v844 = vrot.slane %v835, 1
        %v845 = vsel %vm683, %v842, %v844
        %v846 = vrot.slane %v836, 1
        %v847 = vsel %vm683, %v844, %v846
        %v849 = vsel %vm498, %v839, 0
        %v852 = vsel %vm498, %v841, 0
        %v855 = vsel %vm498, %v843, 0
        %v858 = vsel %vm498, %v845, 0
        %v861 = vsel %vm498, %v847, 0
        %v864 = vsel %vm514, %v808, 0
        %866 = vmatprep.subr.bf16.mxu0 0
        %867 = vmatpush1.bf16.msra.mxu0 %v864
        %868 = vmatprep.subr.bf16.mxu0 0
        %869 = vmatpush1.bf16.msra.mxu0 0
        %870 = vmatprep.subr.bf16.mxu0 0
        %871 = vmatpush1.bf16.msra.mxu0 0
        %872 = vmatprep.subr.bf16.mxu0 0
        %873 = vmatpush1.bf16.msra.mxu0 0
        %874 = vmatprep.subr.bf16.mxu0 0
        %875 = vmatpush1.bf16.msra.mxu0 0
        %876 = vmatprep.subr.bf16.mxu0 0
        %877 = vmatpush1.bf16.msra.mxu0 0
        %878 = vmatprep.subr.bf16.mxu0 0
        %879 = vmatpush1.bf16.msra.mxu0 0
        %880 = vmatprep.subr.bf16.mxu0 0
        %881 = vmatpush1.bf16.msra.mxu0 0
        %882 = vmatprep.subr.bf16.mxu0 0
        %883 = vmatpush1.bf16.msra.mxu0 0
        %884 = vmatprep.subr.bf16.mxu0 0
        %885 = vmatpush1.bf16.msra.mxu0 0
        %886 = vmatprep.subr.bf16.mxu0 0
        %887 = vmatpush1.bf16.msra.mxu0 0
        %888 = vmatprep.subr.bf16.mxu0 0
        %889 = vmatpush1.bf16.msra.mxu0 0
        %890 = vmatprep.subr.bf16.mxu0 0
        %891 = vmatpush1.bf16.msra.mxu0 0
        %892 = vmatprep.subr.bf16.mxu0 0
        %893 = vmatpush1.bf16.msra.mxu0 0
        %894 = vmatprep.subr.bf16.mxu0 0
        %895 = vmatpush1.bf16.msra.mxu0 0
        %896 = vmatprep.subr.bf16.mxu0 0
        %897 = vmatpush1.bf16.msra.mxu0 0
        %898 = vmatprep.mubr.bf16.mxu0 0
        %899 = vmatmul.mubr.bf16.gmra.mrb[0].mxu0 %v849
        %v900 = vpop.f32.mrb[0].mxu0
        %v901 = vadd.f32 0.0, %v900
        %v902 = vpop.f32.mrb[0].mxu0
        %v903 = vpop.f32.mrb[0].mxu0
        %v904 = vadd.f32 0.0, %v903
        %v905 = vpop.f32.mrb[0].mxu0
        %906 = vmatprep.mubr.bf16.mxu0 0
        %907 = vmatmul.mubr.bf16.gmra.mrb[0].mxu0 %v852
        %v908 = vpop.f32.mrb[0].mxu0
        %v909 = vadd.f32 0.0, %v908
        %v910 = vpop.f32.mrb[0].mxu0
        %v911 = vpop.f32.mrb[0].mxu0
        %v912 = vadd.f32 0.0, %v911
        %v913 = vpop.f32.mrb[0].mxu0
        %914 = vmatprep.mubr.bf16.mxu0 0
        %915 = vmatmul.mubr.bf16.gmra.mrb[0].mxu0 %v855
        %v916 = vpop.f32.mrb[0].mxu0
        %v917 = vadd.f32 0.0, %v916
        %v918 = vpop.f32.mrb[0].mxu0
        %v919 = vpop.f32.mrb[0].mxu0
        %v920 = vadd.f32 0.0, %v919
        %v921 = vpop.f32.mrb[0].mxu0
        %922 = vmatprep.mubr.bf16.mxu0 0
        %923 = vmatmul.mubr.bf16.gmra.mrb[0].mxu0 %v858
        %v924 = vpop.f32.mrb[0].mxu0
        %v925 = vadd.f32 0.0, %v924
        %v926 = vpop.f32.mrb[0].mxu0
        %v927 = vpop.f32.mrb[0].mxu0
        %v928 = vadd.f32 0.0, %v927
        %v929 = vpop.f32.mrb[0].mxu0
        %930 = vmatprep.mubr.bf16.mxu0 0
        %931 = vmatmul.mubr.bf16.gmra.mrb[0].mxu0 %v861
        %v932 = vpop.f32.mrb[0].mxu0
        %v933 = vadd.f32 0.0, %v932
        %v934 = vpop.f32.mrb[0].mxu0
        %v935 = vpop.f32.mrb[0].mxu0
        %v936 = vadd.f32 0.0, %v935
        %v937 = vpop.f32.mrb[0].mxu0
        %938 = vdwg.mxu0
        %v939 = vadd.f32 %v786, %v901
        %v940 = vadd.f32 %v787, %v904
        %v941 = vadd.f32 %v788, %v909
        %v942 = vadd.f32 %v789, %v912
        %v943 = vadd.f32 %v790, %v917
        %v944 = vadd.f32 %v791, %v920
        %v945 = vadd.f32 %v792, %v925
        %v946 = vadd.f32 %v793, %v928
        %v947 = vadd.f32 %v794, %v933
        %v948 = vadd.f32 %v795, %v936
        %v949 = vld [vmem:[%s378 + $0x2c] sm:$0x3]
        %s950 = scalar_lea.vmem %s3, 8
        %v951 = vld [vmem:[%s950] sm:$0x3]
        %v953 = vunpack.c.l.b16 %v949
        %v954 = vpack.c.b16 %v953, %v953
        %vm955 = vsmask.f32 6400
        %v957 = vshrl.u32 %v831, 16
        %v959 = vrot.slane %v957, 1
        %v960 = vshll.u32 %v831, 16
        %v962 = vrot.slane %v960, 2
        %v963 = vor.u32 %v959, %v962
        %v965 = vshrl.u32 %v832, 16
        %v967 = vrot.slane %v965, 1
        %v968 = vshll.u32 %v832, 16
        %v970 = vrot.slane %v968, 2
        %v971 = vor.u32 %v967, %v970
        %v972 = vsel %vm955, %v963, %v971
        %v974 = vshrl.u32 %v833, 16
        %v976 = vrot.slane %v974, 1
        %v977 = vshll.u32 %v833, 16
        %v979 = vrot.slane %v977, 2
        %v980 = vor.u32 %v976, %v979
        %v981 = vsel %vm955, %v971, %v980
        %v983 = vshrl.u32 %v834, 16
        %v985 = vrot.slane %v983, 1
        %v986 = vshll.u32 %v834, 16
        %v988 = vrot.slane %v986, 2
        %v989 = vor.u32 %v985, %v988
        %v990 = vsel %vm955, %v980, %v989
        %v992 = vshrl.u32 %v835, 16
        %v994 = vrot.slane %v992, 1
        %v995 = vshll.u32 %v835, 16
        %v997 = vrot.slane %v995, 2
        %v998 = vor.u32 %v994, %v997
        %v999 = vsel %vm955, %v989, %v998
        %v1001 = vshrl.u32 %v954, 16
        %v1003 = vrot.slane %v1001, 1
        %v1004 = vshll.u32 %v954, 16
        %v1006 = vrot.slane %v1004, 2
        %v1007 = vor.u32 %v1003, %v1006
        %v1008 = vsel %vm955, %v998, %v1007
        %v1010 = vsel %vm498, %v972, 0
        %v1013 = vsel %vm498, %v981, 0
        %v1016 = vsel %vm498, %v990, 0
        %v1019 = vsel %vm498, %v999, 0
        %v1022 = vsel %vm498, %v1008, 0
        %v1025 = vsel %vm514, %v951, 0
        %1027 = vmatprep.subr.bf16.mxu0 0
        %1028 = vmatpush1.bf16.msra.mxu0 %v1025
        %1029 = vmatprep.subr.bf16.mxu0 0
        %1030 = vmatpush1.bf16.msra.mxu0 0
        %1031 = vmatprep.subr.bf16.mxu0 0
        %1032 = vmatpush1.bf16.msra.mxu0 0
        %1033 = vmatprep.subr.bf16.mxu0 0
        %1034 = vmatpush1.bf16.msra.mxu0 0
        %1035 = vmatprep.subr.bf16.mxu0 0
        %1036 = vmatpush1.bf16.msra.mxu0 0
        %1037 = vmatprep.subr.bf16.mxu0 0
        %1038 = vmatpush1.bf16.msra.mxu0 0
        %1039 = vmatprep.subr.bf16.mxu0 0
        %1040 = vmatpush1.bf16.msra.mxu0 0
        %1041 = vmatprep.subr.bf16.mxu0 0
        %1042 = vmatpush1.bf16.msra.mxu0 0
        %1043 = vmatprep.subr.bf16.mxu0 0
        %1044 = vmatpush1.bf16.msra.mxu0 0
        %1045 = vmatprep.subr.bf16.mxu0 0
        %1046 = vmatpush1.bf16.msra.mxu0 0
        %1047 = vmatprep.subr.bf16.mxu0 0
        %1048 = vmatpush1.bf16.msra.mxu0 0
        %1049 = vmatprep.subr.bf16.mxu0 0
        %1050 = vmatpush1.bf16.msra.mxu0 0
        %1051 = vmatprep.subr.bf16.mxu0 0
        %1052 = vmatpush1.bf16.msra.mxu0 0
        %1053 = vmatprep.subr.bf16.mxu0 0
        %1054 = vmatpush1.bf16.msra.mxu0 0
        %1055 = vmatprep.subr.bf16.mxu0 0
        %1056 = vmatpush1.bf16.msra.mxu0 0
        %1057 = vmatprep.subr.bf16.mxu0 0
        %1058 = vmatpush1.bf16.msra.mxu0 0
        %1059 = vmatprep.mubr.bf16.mxu0 0
        %1060 = vmatmul.mubr.bf16.gmra.mrb[0].mxu0 %v1010
        %v1061 = vpop.f32.mrb[0].mxu0
        %v1062 = vadd.f32 0.0, %v1061
        %v1063 = vpop.f32.mrb[0].mxu0
        %v1064 = vpop.f32.mrb[0].mxu0
        %v1065 = vadd.f32 0.0, %v1064
        %v1066 = vpop.f32.mrb[0].mxu0
        %1067 = vmatprep.mubr.bf16.mxu0 0
        %1068 = vmatmul.mubr.bf16.gmra.mrb[0].mxu0 %v1013
        %v1069 = vpop.f32.mrb[0].mxu0
        %v1070 = vadd.f32 0.0, %v1069
        %v1071 = vpop.f32.mrb[0].mxu0
        %v1072 = vpop.f32.mrb[0].mxu0
        %v1073 = vadd.f32 0.0, %v1072
        %v1074 = vpop.f32.mrb[0].mxu0
        %1075 = vmatprep.mubr.bf16.mxu0 0
        %1076 = vmatmul.mubr.bf16.gmra.mrb[0].mxu0 %v1016
        %v1077 = vpop.f32.mrb[0].mxu0
        %v1078 = vadd.f32 0.0, %v1077
        %v1079 = vpop.f32.mrb[0].mxu0
        %v1080 = vpop.f32.mrb[0].mxu0
        %v1081 = vadd.f32 0.0, %v1080
        %v1082 = vpop.f32.mrb[0].mxu0
        %1083 = vmatprep.mubr.bf16.mxu0 0
        %1084 = vmatmul.mubr.bf16.gmra.mrb[0].mxu0 %v1019
        %v1085 = vpop.f32.mrb[0].mxu0
        %v1086 = vadd.f32 0.0, %v1085
        %v1087 = vpop.f32.mrb[0].mxu0
        %v1088 = vpop.f32.mrb[0].mxu0
        %v1089 = vadd.f32 0.0, %v1088
        %v1090 = vpop.f32.mrb[0].mxu0
        %1091 = vmatprep.mubr.bf16.mxu0 0
        %1092 = vmatmul.mubr.bf16.gmra.mrb[0].mxu0 %v1022
        %v1093 = vpop.f32.mrb[0].mxu0
        %v1094 = vadd.f32 0.0, %v1093
        %v1095 = vpop.f32.mrb[0].mxu0
        %v1096 = vpop.f32.mrb[0].mxu0
        %v1097 = vadd.f32 0.0, %v1096
        %v1098 = vpop.f32.mrb[0].mxu0
        %1099 = vdwg.mxu0
        %v1100 = vadd.f32 %v939, %v1062
        %v1101 = vadd.f32 %v940, %v1065
        %v1102 = vadd.f32 %v941, %v1070
        %v1103 = vadd.f32 %v942, %v1073
        %v1104 = vadd.f32 %v943, %v1078
        %v1105 = vadd.f32 %v944, %v1081
        %v1106 = vadd.f32 %v945, %v1086
        %v1107 = vadd.f32 %v946, %v1089
        %v1108 = vadd.f32 %v947, %v1094
        %v1109 = vadd.f32 %v948, %v1097
        %v1110 = vld [vmem:[%s378 + $0x4] sm:$0xc]
        %s1111 = scalar_lea.vmem %s3, 10
        %v1112 = vld [vmem:[%s1111] sm:$0x3]
        %v1114 = vunpack.c.l.b16 %v1110
        %v1115 = vpack.c.b16 %v821, %v1114
        %vm1116 = vcmask 1045504
        %v1117 = vrot.slane %v1115, 2
        %v1118 = vrot.slane %v832, 2
        %v1119 = vsel %vm1116, %v1117, %v1118
        %v1120 = vrot.slane %v833, 2
        %v1121 = vsel %vm1116, %v1118, %v1120
        %v1122 = vrot.slane %v834, 2
        %v1123 = vsel %vm1116, %v1120, %v1122
        %v1124 = vrot.slane %v835, 2
        %v1125 = vsel %vm1116, %v1122, %v1124
        %v1126 = vrot.slane %v954, 2
        %v1127 = vsel %vm1116, %v1124, %v1126
        %v1129 = vsel %vm498, %v1119, 0
        %v1132 = vsel %vm498, %v1121, 0
        %v1135 = vsel %vm498, %v1123, 0
        %v1138 = vsel %vm498, %v1125, 0
        %v1141 = vsel %vm498, %v1127, 0
        %v1144 = vsel %vm514, %v1112, 0
        %1146 = vmatprep.subr.bf16.mxu0 0
        %1147 = vmatpush1.bf16.msra.mxu0 %v1144
        %1148 = vmatprep.subr.bf16.mxu0 0
        %1149 = vmatpush1.bf16.msra.mxu0 0
        %1150 = vmatprep.subr.bf16.mxu0 0
        %1151 = vmatpush1.bf16.msra.mxu0 0
        %1152 = vmatprep.subr.bf16.mxu0 0
        %1153 = vmatpush1.bf16.msra.mxu0 0
        %1154 = vmatprep.subr.bf16.mxu0 0
        %1155 = vmatpush1.bf16.msra.mxu0 0
        %1156 = vmatprep.subr.bf16.mxu0 0
        %1157 = vmatpush1.bf16.msra.mxu0 0
        %1158 = vmatprep.subr.bf16.mxu0 0
        %1159 = vmatpush1.bf16.msra.mxu0 0
        %1160 = vmatprep.subr.bf16.mxu0 0
        %1161 = vmatpush1.bf16.msra.mxu0 0
        %1162 = vmatprep.subr.bf16.mxu0 0
        %1163 = vmatpush1.bf16.msra.mxu0 0
        %1164 = vmatprep.subr.bf16.mxu0 0
        %1165 = vmatpush1.bf16.msra.mxu0 0
        %1166 = vmatprep.subr.bf16.mxu0 0
        %1167 = vmatpush1.bf16.msra.mxu0 0
        %1168 = vmatprep.subr.bf16.mxu0 0
        %1169 = vmatpush1.bf16.msra.mxu0 0
        %1170 = vmatprep.subr.bf16.mxu0 0
        %1171 = vmatpush1.bf16.msra.mxu0 0
        %1172 = vmatprep.subr.bf16.mxu0 0
        %1173 = vmatpush1.bf16.msra.mxu0 0
        %1174 = vmatprep.subr.bf16.mxu0 0
        %1175 = vmatpush1.bf16.msra.mxu0 0
        %1176 = vmatprep.subr.bf16.mxu0 0
        %1177 = vmatpush1.bf16.msra.mxu0 0
        %1178 = vmatprep.mubr.bf16.mxu0 0
        %1179 = vmatmul.mubr.bf16.gmra.mrb[0].mxu0 %v1129
        %v1180 = vpop.f32.mrb[0].mxu0
        %v1181 = vadd.f32 0.0, %v1180
        %v1182 = vpop.f32.mrb[0].mxu0
        %v1183 = vpop.f32.mrb[0].mxu0
        %v1184 = vadd.f32 0.0, %v1183
        %v1185 = vpop.f32.mrb[0].mxu0
        %1186 = vmatprep.mubr.bf16.mxu0 0
        %1187 = vmatmul.mubr.bf16.gmra.mrb[0].mxu0 %v1132
        %v1188 = vpop.f32.mrb[0].mxu0
        %v1189 = vadd.f32 0.0, %v1188
        %v1190 = vpop.f32.mrb[0].mxu0
        %v1191 = vpop.f32.mrb[0].mxu0
        %v1192 = vadd.f32 0.0, %v1191
        %v1193 = vpop.f32.mrb[0].mxu0
        %1194 = vmatprep.mubr.bf16.mxu0 0
        %1195 = vmatmul.mubr.bf16.gmra.mrb[0].mxu0 %v1135
        %v1196 = vpop.f32.mrb[0].mxu0
        %v1197 = vadd.f32 0.0, %v1196
        %v1198 = vpop.f32.mrb[0].mxu0
        %v1199 = vpop.f32.mrb[0].mxu0
        %v1200 = vadd.f32 0.0, %v1199
        %v1201 = vpop.f32.mrb[0].mxu0
        %1202 = vmatprep.mubr.bf16.mxu0 0
        %1203 = vmatmul.mubr.bf16.gmra.mrb[0].mxu0 %v1138
        %v1204 = vpop.f32.mrb[0].mxu0
        %v1205 = vadd.f32 0.0, %v1204
        %v1206 = vpop.f32.mrb[0].mxu0
        %v1207 = vpop.f32.mrb[0].mxu0
        %v1208 = vadd.f32 0.0, %v1207
        %v1209 = vpop.f32.mrb[0].mxu0
        %1210 = vmatprep.mubr.bf16.mxu0 0
        %1211 = vmatmul.mubr.bf16.gmra.mrb[0].mxu0 %v1141
        %v1212 = vpop.f32.mrb[0].mxu0
        %v1213 = vadd.f32 0.0, %v1212
        %v1214 = vpop.f32.mrb[0].mxu0
        %v1215 = vpop.f32.mrb[0].mxu0
        %v1216 = vadd.f32 0.0, %v1215
        %v1217 = vpop.f32.mrb[0].mxu0
        %1218 = vdwg.mxu0
        %v1219 = vadd.f32 %v1100, %v1181
        %v1220 = vadd.f32 %v1101, %v1184
        %v1221 = vadd.f32 %v1102, %v1189
        %v1222 = vadd.f32 %v1103, %v1192
        %v1223 = vadd.f32 %v1104, %v1197
        %v1224 = vadd.f32 %v1105, %v1200
        %v1225 = vadd.f32 %v1106, %v1205
        %v1226 = vadd.f32 %v1107, %v1208
        %v1227 = vadd.f32 %v1108, %v1213
        %v1228 = vadd.f32 %v1109, %v1216
        %v1229 = vld [vmem:[%s378 + $0x8] sm:$0xc]
        %v1230 = vld [vmem:[%s378 + $0xc] sm:$0xf]
        %v1231 = vld [vmem:[%s378 + $0x10] sm:$0xf]
        %v1232 = vld [vmem:[%s378 + $0x14] sm:$0xf]
        %v1233 = vld [vmem:[%s378 + $0x18] sm:$0xf]
        %v1234 = vld [vmem:[%s378 + $0x1c] sm:$0xf]
        %v1235 = vld [vmem:[%s378 + $0x20] sm:$0xf]
        %v1236 = vld [vmem:[%s378 + $0x24] sm:$0xf]
        %v1237 = vld [vmem:[%s378 + $0x28] sm:$0xf]
        %v1238 = vld [vmem:[%s378 + $0x2c] sm:$0xf]
        %v1239 = vld [vmem:[%s378 + $0x30] sm:$0x3]
        %s1240 = scalar_lea.vmem %s3, 12
        %v1241 = vld [vmem:[%s1240] sm:$0x3]
        %v1253 = vunpack.c.l.b16 %v1229
        %v1254 = vunpack.c.l.b16 %v1230
        %v1255 = vunpack.c.l.b16 %v1231
        %v1256 = vunpack.c.l.b16 %v1232
        %v1257 = vunpack.c.l.b16 %v1233
        %v1258 = vunpack.c.l.b16 %v1234
        %v1259 = vunpack.c.l.b16 %v1235
        %v1260 = vunpack.c.l.b16 %v1236
        %v1261 = vunpack.c.l.b16 %v1237
        %v1262 = vunpack.c.l.b16 %v1238
        %v1263 = vunpack.c.l.b16 %v1239
        %v1264 = vpack.c.b16 %v1254, %v1253
        %v1265 = vpack.c.b16 %v1256, %v1255
        %v1266 = vpack.c.b16 %v1258, %v1257
        %v1267 = vpack.c.b16 %v1260, %v1259
        %v1268 = vpack.c.b16 %v1262, %v1261
        %v1269 = vpack.c.b16 %v1263, %v1263
        %v1270 = vrot.slane %v1264, 2
        %v1271 = vrot.slane %v1265, 2
        %v1272 = vsel %vm1116, %v1270, %v1271
        %v1273 = vrot.slane %v1266, 2
        %v1274 = vsel %vm1116, %v1271, %v1273
        %v1275 = vrot.slane %v1267, 2
        %v1276 = vsel %vm1116, %v1273, %v1275
        %v1277 = vrot.slane %v1268, 2
        %v1278 = vsel %vm1116, %v1275, %v1277
        %v1279 = vrot.slane %v1269, 2
        %v1280 = vsel %vm1116, %v1277, %v1279
        %v1282 = vsel %vm498, %v1272, 0
        %v1285 = vsel %vm498, %v1274, 0
        %v1288 = vsel %vm498, %v1276, 0
        %v1291 = vsel %vm498, %v1278, 0
        %v1294 = vsel %vm498, %v1280, 0
        %v1297 = vsel %vm514, %v1241, 0
        %1299 = vmatprep.subr.bf16.mxu0 0
        %1300 = vmatpush1.bf16.msra.mxu0 %v1297
        %1301 = vmatprep.subr.bf16.mxu0 0
        %1302 = vmatpush1.bf16.msra.mxu0 0
        %1303 = vmatprep.subr.bf16.mxu0 0
        %1304 = vmatpush1.bf16.msra.mxu0 0
        %1305 = vmatprep.subr.bf16.mxu0 0
        %1306 = vmatpush1.bf16.msra.mxu0 0
        %1307 = vmatprep.subr.bf16.mxu0 0
        %1308 = vmatpush1.bf16.msra.mxu0 0
        %1309 = vmatprep.subr.bf16.mxu0 0
        %1310 = vmatpush1.bf16.msra.mxu0 0
        %1311 = vmatprep.subr.bf16.mxu0 0
        %1312 = vmatpush1.bf16.msra.mxu0 0
        %1313 = vmatprep.subr.bf16.mxu0 0
        %1314 = vmatpush1.bf16.msra.mxu0 0
        %1315 = vmatprep.subr.bf16.mxu0 0
        %1316 = vmatpush1.bf16.msra.mxu0 0
        %1317 = vmatprep.subr.bf16.mxu0 0
        %1318 = vmatpush1.bf16.msra.mxu0 0
        %1319 = vmatprep.subr.bf16.mxu0 0
        %1320 = vmatpush1.bf16.msra.mxu0 0
        %1321 = vmatprep.subr.bf16.mxu0 0
        %1322 = vmatpush1.bf16.msra.mxu0 0
        %1323 = vmatprep.subr.bf16.mxu0 0
        %1324 = vmatpush1.bf16.msra.mxu0 0
        %1325 = vmatprep.subr.bf16.mxu0 0
        %1326 = vmatpush1.bf16.msra.mxu0 0
        %1327 = vmatprep.subr.bf16.mxu0 0
        %1328 = vmatpush1.bf16.msra.mxu0 0
        %1329 = vmatprep.subr.bf16.mxu0 0
        %1330 = vmatpush1.bf16.msra.mxu0 0
        %1331 = vmatprep.mubr.bf16.mxu0 0
        %1332 = vmatmul.mubr.bf16.gmra.mrb[0].mxu0 %v1282
        %v1333 = vpop.f32.mrb[0].mxu0
        %v1334 = vadd.f32 0.0, %v1333
        %v1335 = vpop.f32.mrb[0].mxu0
        %v1336 = vpop.f32.mrb[0].mxu0
        %v1337 = vadd.f32 0.0, %v1336
        %v1338 = vpop.f32.mrb[0].mxu0
        %1339 = vmatprep.mubr.bf16.mxu0 0
        %1340 = vmatmul.mubr.bf16.gmra.mrb[0].mxu0 %v1285
        %v1341 = vpop.f32.mrb[0].mxu0
        %v1342 = vadd.f32 0.0, %v1341
        %v1343 = vpop.f32.mrb[0].mxu0
        %v1344 = vpop.f32.mrb[0].mxu0
        %v1345 = vadd.f32 0.0, %v1344
        %v1346 = vpop.f32.mrb[0].mxu0
        %1347 = vmatprep.mubr.bf16.mxu0 0
        %1348 = vmatmul.mubr.bf16.gmra.mrb[0].mxu0 %v1288
        %v1349 = vpop.f32.mrb[0].mxu0
        %v1350 = vadd.f32 0.0, %v1349
        %v1351 = vpop.f32.mrb[0].mxu0
        %v1352 = vpop.f32.mrb[0].mxu0
        %v1353 = vadd.f32 0.0, %v1352
        %v1354 = vpop.f32.mrb[0].mxu0
        %1355 = vmatprep.mubr.bf16.mxu0 0
        %1356 = vmatmul.mubr.bf16.gmra.mrb[0].mxu0 %v1291
        %v1357 = vpop.f32.mrb[0].mxu0
        %v1358 = vadd.f32 0.0, %v1357
        %v1359 = vpop.f32.mrb[0].mxu0
        %v1360 = vpop.f32.mrb[0].mxu0
        %v1361 = vadd.f32 0.0, %v1360
        %v1362 = vpop.f32.mrb[0].mxu0
        %1363 = vmatprep.mubr.bf16.mxu0 0
        %1364 = vmatmul.mubr.bf16.gmra.mrb[0].mxu0 %v1294
        %v1365 = vpop.f32.mrb[0].mxu0
        %v1366 = vadd.f32 0.0, %v1365
        %v1367 = vpop.f32.mrb[0].mxu0
        %v1368 = vpop.f32.mrb[0].mxu0
        %v1369 = vadd.f32 0.0, %v1368
        %v1370 = vpop.f32.mrb[0].mxu0
        %1371 = vdwg.mxu0
        %v1372 = vadd.f32 %v1219, %v1334
        %v1373 = vadd.f32 %v1220, %v1337
        %v1374 = vadd.f32 %v1221, %v1342
        %v1375 = vadd.f32 %v1222, %v1345
        %v1376 = vadd.f32 %v1223, %v1350
        %v1377 = vadd.f32 %v1224, %v1353
        %v1378 = vadd.f32 %v1225, %v1358
        %v1379 = vadd.f32 %v1226, %v1361
        %v1380 = vadd.f32 %v1227, %v1366
        %v1381 = vadd.f32 %v1228, %v1369
        %v1382 = vld [vmem:[%s378 + $0x30] sm:$0x7]
        %s1383 = scalar_lea.vmem %s3, 14
        %v1384 = vld [vmem:[%s1383] sm:$0x3]
        %v1386 = vunpack.c.l.b16 %v1382
        %v1387 = vpack.c.b16 %v1386, %v1386
        %vm1388 = vsmask.f32 5376
        %v1390 = vshrl.u32 %v1264, 16
        %v1392 = vrot.slane %v1390, 2
        %v1393 = vshll.u32 %v1264, 16
        %v1395 = vrot.slane %v1393, 3
        %v1396 = vor.u32 %v1392, %v1395
        %v1398 = vshrl.u32 %v1265, 16
        %v1400 = vrot.slane %v1398, 2
        %v1401 = vshll.u32 %v1265, 16
        %v1403 = vrot.slane %v1401, 3
        %v1404 = vor.u32 %v1400, %v1403
        %v1405 = vsel %vm1388, %v1396, %v1404
        %v1407 = vshrl.u32 %v1266, 16
        %v1409 = vrot.slane %v1407, 2
        %v1410 = vshll.u32 %v1266, 16
        %v1412 = vrot.slane %v1410, 3
        %v1413 = vor.u32 %v1409, %v1412
        %v1414 = vsel %vm1388, %v1404, %v1413
        %v1416 = vshrl.u32 %v1267, 16
        %v1418 = vrot.slane %v1416, 2
        %v1419 = vshll.u32 %v1267, 16
        %v1421 = vrot.slane %v1419, 3
        %v1422 = vor.u32 %v1418, %v1421
        %v1423 = vsel %vm1388, %v1413, %v1422
        %v1425 = vshrl.u32 %v1268, 16
        %v1427 = vrot.slane %v1425, 2
        %v1428 = vshll.u32 %v1268, 16
        %v1430 = vrot.slane %v1428, 3
        %v1431 = vor.u32 %v1427, %v1430
        %v1432 = vsel %vm1388, %v1422, %v1431
        %v1434 = vshrl.u32 %v1387, 16
        %v1436 = vrot.slane %v1434, 2
        %v1437 = vshll.u32 %v1387, 16
        %v1439 = vrot.slane %v1437, 3
        %v1440 = vor.u32 %v1436, %v1439
        %v1441 = vsel %vm1388, %v1431, %v1440
        %v1443 = vsel %vm498, %v1405, 0
        %v1446 = vsel %vm498, %v1414, 0
        %v1449 = vsel %vm498, %v1423, 0
        %v1452 = vsel %vm498, %v1432, 0
        %v1455 = vsel %vm498, %v1441, 0
        %v1458 = vsel %vm514, %v1384, 0
        %1460 = vmatprep.subr.bf16.mxu0 0
        %1461 = vmatpush1.bf16.msra.mxu0 %v1458
        %1462 = vmatprep.subr.bf16.mxu0 0
        %1463 = vmatpush1.bf16.msra.mxu0 0
        %1464 = vmatprep.subr.bf16.mxu0 0
        %1465 = vmatpush1.bf16.msra.mxu0 0
        %1466 = vmatprep.subr.bf16.mxu0 0
        %1467 = vmatpush1.bf16.msra.mxu0 0
        %1468 = vmatprep.subr.bf16.mxu0 0
        %1469 = vmatpush1.bf16.msra.mxu0 0
        %1470 = vmatprep.subr.bf16.mxu0 0
        %1471 = vmatpush1.bf16.msra.mxu0 0
        %1472 = vmatprep.subr.bf16.mxu0 0
        %1473 = vmatpush1.bf16.msra.mxu0 0
        %1474 = vmatprep.subr.bf16.mxu0 0
        %1475 = vmatpush1.bf16.msra.mxu0 0
        %1476 = vmatprep.subr.bf16.mxu0 0
        %1477 = vmatpush1.bf16.msra.mxu0 0
        %1478 = vmatprep.subr.bf16.mxu0 0
        %1479 = vmatpush1.bf16.msra.mxu0 0
        %1480 = vmatprep.subr.bf16.mxu0 0
        %1481 = vmatpush1.bf16.msra.mxu0 0
        %1482 = vmatprep.subr.bf16.mxu0 0
        %1483 = vmatpush1.bf16.msra.mxu0 0
        %1484 = vmatprep.subr.bf16.mxu0 0
        %1485 = vmatpush1.bf16.msra.mxu0 0
        %1486 = vmatprep.subr.bf16.mxu0 0
        %1487 = vmatpush1.bf16.msra.mxu0 0
        %1488 = vmatprep.subr.bf16.mxu0 0
        %1489 = vmatpush1.bf16.msra.mxu0 0
        %1490 = vmatprep.subr.bf16.mxu0 0
        %1491 = vmatpush1.bf16.msra.mxu0 0
        %1492 = vmatprep.mubr.bf16.mxu0 0
        %1493 = vmatmul.mubr.bf16.gmra.mrb[0].mxu0 %v1443
        %v1494 = vpop.f32.mrb[0].mxu0
        %v1495 = vadd.f32 0.0, %v1494
        %v1496 = vpop.f32.mrb[0].mxu0
        %v1497 = vpop.f32.mrb[0].mxu0
        %v1498 = vadd.f32 0.0, %v1497
        %v1499 = vpop.f32.mrb[0].mxu0
        %1500 = vmatprep.mubr.bf16.mxu0 0
        %1501 = vmatmul.mubr.bf16.gmra.mrb[0].mxu0 %v1446
        %v1502 = vpop.f32.mrb[0].mxu0
        %v1503 = vadd.f32 0.0, %v1502
        %v1504 = vpop.f32.mrb[0].mxu0
        %v1505 = vpop.f32.mrb[0].mxu0
        %v1506 = vadd.f32 0.0, %v1505
        %v1507 = vpop.f32.mrb[0].mxu0
        %1508 = vmatprep.mubr.bf16.mxu0 0
        %1509 = vmatmul.mubr.bf16.gmra.mrb[0].mxu0 %v1449
        %v1510 = vpop.f32.mrb[0].mxu0
        %v1511 = vadd.f32 0.0, %v1510
        %v1512 = vpop.f32.mrb[0].mxu0
        %v1513 = vpop.f32.mrb[0].mxu0
        %v1514 = vadd.f32 0.0, %v1513
        %v1515 = vpop.f32.mrb[0].mxu0
        %1516 = vmatprep.mubr.bf16.mxu0 0
        %1517 = vmatmul.mubr.bf16.gmra.mrb[0].mxu0 %v1452
        %v1518 = vpop.f32.mrb[0].mxu0
        %v1519 = vadd.f32 0.0, %v1518
        %v1520 = vpop.f32.mrb[0].mxu0
        %v1521 = vpop.f32.mrb[0].mxu0
        %v1522 = vadd.f32 0.0, %v1521
        %v1523 = vpop.f32.mrb[0].mxu0
        %1524 = vmatprep.mubr.bf16.mxu0 0
        %1525 = vmatmul.mubr.bf16.gmra.mrb[0].mxu0 %v1455
        %v1526 = vpop.f32.mrb[0].mxu0
        %v1527 = vadd.f32 0.0, %v1526
        %v1528 = vpop.f32.mrb[0].mxu0
        %v1529 = vpop.f32.mrb[0].mxu0
        %v1530 = vadd.f32 0.0, %v1529
        %v1531 = vpop.f32.mrb[0].mxu0
        %1532 = vdwg.mxu0
        %v1533 = vadd.f32 %v1372, %v1495
        %v1534 = vadd.f32 %v1373, %v1498
        %v1535 = vadd.f32 %v1374, %v1503
        %v1536 = vadd.f32 %v1375, %v1506
        %v1537 = vadd.f32 %v1376, %v1511
        %v1538 = vadd.f32 %v1377, %v1514
        %v1539 = vadd.f32 %v1378, %v1519
        %v1540 = vadd.f32 %v1379, %v1522
        %v1541 = vadd.f32 %v1380, %v1527
        %v1542 = vadd.f32 %v1381, %v1530
        %v1543 = vld [vmem:[%s378 + $0x8] sm:$0x8]
        %s1544 = scalar_lea.vmem %s3, 16
        %v1545 = vld [vmem:[%s1544] sm:$0x3]
        %v1547 = vunpack.c.l.b16 %v1543
        %v1548 = vpack.c.b16 %v1254, %v1547
        %vm1549 = vcmask 1044480
        %v1550 = vrot.slane %v1548, 3
        %v1551 = vrot.slane %v1265, 3
        %v1552 = vsel %vm1549, %v1550, %v1551
        %v1553 = vrot.slane %v1266, 3
        %v1554 = vsel %vm1549, %v1551, %v1553
        %v1555 = vrot.slane %v1267, 3
        %v1556 = vsel %vm1549, %v1553, %v1555
        %v1557 = vrot.slane %v1268, 3
        %v1558 = vsel %vm1549, %v1555, %v1557
        %v1559 = vrot.slane %v1387, 3
        %v1560 = vsel %vm1549, %v1557, %v1559
        %v1562 = vsel %vm498, %v1552, 0
        %v1565 = vsel %vm498, %v1554, 0
        %v1568 = vsel %vm498, %v1556, 0
        %v1571 = vsel %vm498, %v1558, 0
        %v1574 = vsel %vm498, %v1560, 0
        %v1577 = vsel %vm514, %v1545, 0
        %1579 = vmatprep.subr.bf16.mxu0 0
        %1580 = vmatpush1.bf16.msra.mxu0 %v1577
        %1581 = vmatprep.subr.bf16.mxu0 0
        %1582 = vmatpush1.bf16.msra.mxu0 0
        %1583 = vmatprep.subr.bf16.mxu0 0
        %1584 = vmatpush1.bf16.msra.mxu0 0
        %1585 = vmatprep.subr.bf16.mxu0 0
        %1586 = vmatpush1.bf16.msra.mxu0 0
        %1587 = vmatprep.subr.bf16.mxu0 0
        %1588 = vmatpush1.bf16.msra.mxu0 0
        %1589 = vmatprep.subr.bf16.mxu0 0
        %1590 = vmatpush1.bf16.msra.mxu0 0
        %1591 = vmatprep.subr.bf16.mxu0 0
        %1592 = vmatpush1.bf16.msra.mxu0 0
        %1593 = vmatprep.subr.bf16.mxu0 0
        %1594 = vmatpush1.bf16.msra.mxu0 0
        %1595 = vmatprep.subr.bf16.mxu0 0
        %1596 = vmatpush1.bf16.msra.mxu0 0
        %1597 = vmatprep.subr.bf16.mxu0 0
        %1598 = vmatpush1.bf16.msra.mxu0 0
        %1599 = vmatprep.subr.bf16.mxu0 0
        %1600 = vmatpush1.bf16.msra.mxu0 0
        %1601 = vmatprep.subr.bf16.mxu0 0
        %1602 = vmatpush1.bf16.msra.mxu0 0
        %1603 = vmatprep.subr.bf16.mxu0 0
        %1604 = vmatpush1.bf16.msra.mxu0 0
        %1605 = vmatprep.subr.bf16.mxu0 0
        %1606 = vmatpush1.bf16.msra.mxu0 0
        %1607 = vmatprep.subr.bf16.mxu0 0
        %1608 = vmatpush1.bf16.msra.mxu0 0
        %1609 = vmatprep.subr.bf16.mxu0 0
        %1610 = vmatpush1.bf16.msra.mxu0 0
        %1611 = vmatprep.mubr.bf16.mxu0 0
        %1612 = vmatmul.mubr.bf16.gmra.mrb[0].mxu0 %v1562
        %v1613 = vpop.f32.mrb[0].mxu0
        %v1614 = vadd.f32 0.0, %v1613
        %v1615 = vpop.f32.mrb[0].mxu0
        %v1616 = vpop.f32.mrb[0].mxu0
        %v1617 = vadd.f32 0.0, %v1616
        %v1618 = vpop.f32.mrb[0].mxu0
        %1619 = vmatprep.mubr.bf16.mxu0 0
        %1620 = vmatmul.mubr.bf16.gmra.mrb[0].mxu0 %v1565
        %v1621 = vpop.f32.mrb[0].mxu0
        %v1622 = vadd.f32 0.0, %v1621
        %v1623 = vpop.f32.mrb[0].mxu0
        %v1624 = vpop.f32.mrb[0].mxu0
        %v1625 = vadd.f32 0.0, %v1624
        %v1626 = vpop.f32.mrb[0].mxu0
        %1627 = vmatprep.mubr.bf16.mxu0 0
        %1628 = vmatmul.mubr.bf16.gmra.mrb[0].mxu0 %v1568
        %v1629 = vpop.f32.mrb[0].mxu0
        %v1630 = vadd.f32 0.0, %v1629
        %v1631 = vpop.f32.mrb[0].mxu0
        %v1632 = vpop.f32.mrb[0].mxu0
        %v1633 = vadd.f32 0.0, %v1632
        %v1634 = vpop.f32.mrb[0].mxu0
        %1635 = vmatprep.mubr.bf16.mxu0 0
        %1636 = vmatmul.mubr.bf16.gmra.mrb[0].mxu0 %v1571
        %v1637 = vpop.f32.mrb[0].mxu0
        %v1638 = vadd.f32 0.0, %v1637
        %v1639 = vpop.f32.mrb[0].mxu0
        %v1640 = vpop.f32.mrb[0].mxu0
        %v1641 = vadd.f32 0.0, %v1640
        %v1642 = vpop.f32.mrb[0].mxu0
        %1643 = vmatprep.mubr.bf16.mxu0 0
        %1644 = vmatmul.mubr.bf16.gmra.mrb[0].mxu0 %v1574
        %v1645 = vpop.f32.mrb[0].mxu0
        %v1646 = vadd.f32 0.0, %v1645
        %v1647 = vpop.f32.mrb[0].mxu0
        %v1648 = vpop.f32.mrb[0].mxu0
        %v1649 = vadd.f32 0.0, %v1648
        %v1650 = vpop.f32.mrb[0].mxu0
        %1651 = vdwg.mxu0
        %v1652 = vadd.f32 %v1533, %v1614
        %v1653 = vadd.f32 %v1534, %v1617
        %v1654 = vadd.f32 %v1535, %v1622
        %v1655 = vadd.f32 %v1536, %v1625
        %v1656 = vadd.f32 %v1537, %v1630
        %v1657 = vadd.f32 %v1538, %v1633
        %v1658 = vadd.f32 %v1539, %v1638
        %v1659 = vadd.f32 %v1540, %v1641
        %v1660 = vadd.f32 %v1541, %v1646
        %v1661 = vadd.f32 %v1542, %v1649
        %v1662 = vld [vmem:[%s388] sm:$0xf]
        %v1663 = vld [vmem:[%s388 + $0x4] sm:$0xf]
        %v1664 = vld [vmem:[%s388 + $0x8] sm:$0xf]
        %v1665 = vld [vmem:[%s388 + $0xc] sm:$0xf]
        %v1666 = vld [vmem:[%s388 + $0x10] sm:$0xf]
        %v1667 = vld [vmem:[%s388 + $0x14] sm:$0xf]
        %v1668 = vld [vmem:[%s388 + $0x18] sm:$0xf]
        %v1669 = vld [vmem:[%s388 + $0x1c] sm:$0xf]
        %v1670 = vld [vmem:[%s388 + $0x20] sm:$0xf]
        %v1671 = vld [vmem:[%s388 + $0x24] sm:$0xf]
        %s1672 = scalar_lea.vmem %s3, 18
        %v1673 = vld [vmem:[%s1672] sm:$0x3]
        %v1684 = vunpack.c.l.b16 %v1662
        %v1685 = vunpack.c.l.b16 %v1663
        %v1686 = vunpack.c.l.b16 %v1664
        %v1687 = vunpack.c.l.b16 %v1665
        %v1688 = vunpack.c.l.b16 %v1666
        %v1689 = vunpack.c.l.b16 %v1667
        %v1690 = vunpack.c.l.b16 %v1668
        %v1691 = vunpack.c.l.b16 %v1669
        %v1692 = vunpack.c.l.b16 %v1670
        %v1693 = vunpack.c.l.b16 %v1671
        %v1694 = vpack.c.b16 %v1685, %v1684
        %v1695 = vpack.c.b16 %v1687, %v1686
        %v1696 = vpack.c.b16 %v1689, %v1688
        %v1697 = vpack.c.b16 %v1691, %v1690
        %v1698 = vpack.c.b16 %v1693, %v1692
        %v1700 = vsel %vm498, %v1694, 0
        %v1703 = vsel %vm498, %v1695, 0
        %v1706 = vsel %vm498, %v1696, 0
        %v1709 = vsel %vm498, %v1697, 0
        %v1712 = vsel %vm498, %v1698, 0
        %v1715 = vsel %vm514, %v1673, 0
        %1717 = vmatprep.subr.bf16.mxu0 0
        %1718 = vmatpush1.bf16.msra.mxu0 %v1715
        %1719 = vmatprep.subr.bf16.mxu0 0
        %1720 = vmatpush1.bf16.msra.mxu0 0
        %1721 = vmatprep.subr.bf16.mxu0 0
        %1722 = vmatpush1.bf16.msra.mxu0 0
        %1723 = vmatprep.subr.bf16.mxu0 0
        %1724 = vmatpush1.bf16.msra.mxu0 0
        %1725 = vmatprep.subr.bf16.mxu0 0
        %1726 = vmatpush1.bf16.msra.mxu0 0
        %1727 = vmatprep.subr.bf16.mxu0 0
        %1728 = vmatpush1.bf16.msra.mxu0 0
        %1729 = vmatprep.subr.bf16.mxu0 0
        %1730 = vmatpush1.bf16.msra.mxu0 0
        %1731 = vmatprep.subr.bf16.mxu0 0
        %1732 = vmatpush1.bf16.msra.mxu0 0
        %1733 = vmatprep.subr.bf16.mxu0 0
        %1734 = vmatpush1.bf16.msra.mxu0 0
        %1735 = vmatprep.subr.bf16.mxu0 0
        %1736 = vmatpush1.bf16.msra.mxu0 0
        %1737 = vmatprep.subr.bf16.mxu0 0
        %1738 = vmatpush1.bf16.msra.mxu0 0
        %1739 = vmatprep.subr.bf16.mxu0 0
        %1740 = vmatpush1.bf16.msra.mxu0 0
        %1741 = vmatprep.subr.bf16.mxu0 0
        %1742 = vmatpush1.bf16.msra.mxu0 0
        %1743 = vmatprep.subr.bf16.mxu0 0
        %1744 = vmatpush1.bf16.msra.mxu0 0
        %1745 = vmatprep.subr.bf16.mxu0 0
        %1746 = vmatpush1.bf16.msra.mxu0 0
        %1747 = vmatprep.subr.bf16.mxu0 0
        %1748 = vmatpush1.bf16.msra.mxu0 0
        %1749 = vmatprep.mubr.bf16.mxu0 0
        %1750 = vmatmul.mubr.bf16.gmra.mrb[0].mxu0 %v1700
        %v1751 = vpop.f32.mrb[0].mxu0
        %v1752 = vadd.f32 0.0, %v1751
        %v1753 = vpop.f32.mrb[0].mxu0
        %v1754 = vpop.f32.mrb[0].mxu0
        %v1755 = vadd.f32 0.0, %v1754
        %v1756 = vpop.f32.mrb[0].mxu0
        %1757 = vmatprep.mubr.bf16.mxu0 0
        %1758 = vmatmul.mubr.bf16.gmra.mrb[0].mxu0 %v1703
        %v1759 = vpop.f32.mrb[0].mxu0
        %v1760 = vadd.f32 0.0, %v1759
        %v1761 = vpop.f32.mrb[0].mxu0
        %v1762 = vpop.f32.mrb[0].mxu0
        %v1763 = vadd.f32 0.0, %v1762
        %v1764 = vpop.f32.mrb[0].mxu0
        %1765 = vmatprep.mubr.bf16.mxu0 0
        %1766 = vmatmul.mubr.bf16.gmra.mrb[0].mxu0 %v1706
        %v1767 = vpop.f32.mrb[0].mxu0
        %v1768 = vadd.f32 0.0, %v1767
        %v1769 = vpop.f32.mrb[0].mxu0
        %v1770 = vpop.f32.mrb[0].mxu0
        %v1771 = vadd.f32 0.0, %v1770
        %v1772 = vpop.f32.mrb[0].mxu0
        %1773 = vmatprep.mubr.bf16.mxu0 0
        %1774 = vmatmul.mubr.bf16.gmra.mrb[0].mxu0 %v1709
        %v1775 = vpop.f32.mrb[0].mxu0
        %v1776 = vadd.f32 0.0, %v1775
        %v1777 = vpop.f32.mrb[0].mxu0
        %v1778 = vpop.f32.mrb[0].mxu0
        %v1779 = vadd.f32 0.0, %v1778
        %v1780 = vpop.f32.mrb[0].mxu0
        %1781 = vmatprep.mubr.bf16.mxu0 0
        %1782 = vmatmul.mubr.bf16.gmra.mrb[0].mxu0 %v1712
        %v1783 = vpop.f32.mrb[0].mxu0
        %v1784 = vadd.f32 0.0, %v1783
        %v1785 = vpop.f32.mrb[0].mxu0
        %v1786 = vpop.f32.mrb[0].mxu0
        %v1787 = vadd.f32 0.0, %v1786
        %v1788 = vpop.f32.mrb[0].mxu0
        %1789 = vdwg.mxu0
        %v1790 = vadd.f32 %v1652, %v1752
        %v1791 = vadd.f32 %v1653, %v1755
        %v1792 = vadd.f32 %v1654, %v1760
        %v1793 = vadd.f32 %v1655, %v1763
        %v1794 = vadd.f32 %v1656, %v1768
        %v1795 = vadd.f32 %v1657, %v1771
        %v1796 = vadd.f32 %v1658, %v1776
        %v1797 = vadd.f32 %v1659, %v1779
        %v1798 = vadd.f32 %v1660, %v1784
        %v1799 = vadd.f32 %v1661, %v1787
        %v1800 = vld [vmem:[%s388] sm:$0xf]
        %v1801 = vld [vmem:[%s388 + $0x4] sm:$0xf]
        %v1802 = vld [vmem:[%s388 + $0x8] sm:$0xf]
        %v1803 = vld [vmem:[%s388 + $0xc] sm:$0xf]
        %v1804 = vld [vmem:[%s388 + $0x10] sm:$0xf]
        %v1805 = vld [vmem:[%s388 + $0x14] sm:$0xf]
        %v1806 = vld [vmem:[%s388 + $0x18] sm:$0xf]
        %v1807 = vld [vmem:[%s388 + $0x1c] sm:$0xf]
        %v1808 = vld [vmem:[%s388 + $0x20] sm:$0xf]
        %v1809 = vld [vmem:[%s388 + $0x24] sm:$0xf]
        %v1810 = vld [vmem:[%s388 + $0x28] sm:$0x1]
        %s1811 = scalar_lea.vmem %s3, 20
        %v1812 = vld [vmem:[%s1811] sm:$0x3]
        %v1824 = vunpack.c.l.b16 %v1800
        %v1825 = vunpack.c.l.b16 %v1801
        %v1826 = vunpack.c.l.b16 %v1802
        %v1827 = vunpack.c.l.b16 %v1803
        %v1828 = vunpack.c.l.b16 %v1804
        %v1829 = vunpack.c.l.b16 %v1805
        %v1830 = vunpack.c.l.b16 %v1806
        %v1831 = vunpack.c.l.b16 %v1807
        %v1832 = vunpack.c.l.b16 %v1808
        %v1833 = vunpack.c.l.b16 %v1809
        %v1834 = vunpack.c.l.b16 %v1810
        %v1835 = vpack.c.b16 %v1825, %v1824
        %v1836 = vpack.c.b16 %v1827, %v1826
        %v1837 = vpack.c.b16 %v1829, %v1828
        %v1838 = vpack.c.b16 %v1831, %v1830
        %v1839 = vpack.c.b16 %v1833, %v1832
        %v1840 = vpack.c.b16 %v1834, %v1834
        %v1842 = vshrl.u32 %v1835, 16
        %v1844 = vshll.u32 %v1835, 16
        %v1846 = vrot.slane %v1844, 1
        %v1847 = vor.u32 %v1842, %v1846
        %v1849 = vshll.u32 %v1836, 16
        %v1851 = vrot.slane %v1849, 1
        %v1852 = vsel %vm453, %v1847, %v1851
        %v1853 = vshrl.u32 %v1836, 16
        %v1855 = vor.u32 %v1853, %v1851
        %v1857 = vshll.u32 %v1837, 16
        %v1859 = vrot.slane %v1857, 1
        %v1860 = vsel %vm453, %v1855, %v1859
        %v1861 = vshrl.u32 %v1837, 16
        %v1863 = vor.u32 %v1861, %v1859
        %v1865 = vshll.u32 %v1838, 16
        %v1867 = vrot.slane %v1865, 1
        %v1868 = vsel %vm453, %v1863, %v1867
        %v1869 = vshrl.u32 %v1838, 16
        %v1871 = vor.u32 %v1869, %v1867
        %v1873 = vshll.u32 %v1839, 16
        %v1875 = vrot.slane %v1873, 1
        %v1876 = vsel %vm453, %v1871, %v1875
        %v1877 = vshrl.u32 %v1839, 16
        %v1879 = vor.u32 %v1877, %v1875
        %v1881 = vshll.u32 %v1840, 16
        %v1883 = vrot.slane %v1881, 1
        %v1884 = vsel %vm453, %v1879, %v1883
        %v1886 = vsel %vm498, %v1852, 0
        %v1889 = vsel %vm498, %v1860, 0
        %v1892 = vsel %vm498, %v1868, 0
        %v1895 = vsel %vm498, %v1876, 0
        %v1898 = vsel %vm498, %v1884, 0
        %v1901 = vsel %vm514, %v1812, 0
        %1903 = vmatprep.subr.bf16.mxu0 0
        %1904 = vmatpush1.bf16.msra.mxu0 %v1901
        %1905 = vmatprep.subr.bf16.mxu0 0
        %1906 = vmatpush1.bf16.msra.mxu0 0
        %1907 = vmatprep.subr.bf16.mxu0 0
        %1908 = vmatpush1.bf16.msra.mxu0 0
        %1909 = vmatprep.subr.bf16.mxu0 0
        %1910 = vmatpush1.bf16.msra.mxu0 0
        %1911 = vmatprep.subr.bf16.mxu0 0
        %1912 = vmatpush1.bf16.msra.mxu0 0
        %1913 = vmatprep.subr.bf16.mxu0 0
        %1914 = vmatpush1.bf16.msra.mxu0 0
        %1915 = vmatprep.subr.bf16.mxu0 0
        %1916 = vmatpush1.bf16.msra.mxu0 0
        %1917 = vmatprep.subr.bf16.mxu0 0
        %1918 = vmatpush1.bf16.msra.mxu0 0
        %1919 = vmatprep.subr.bf16.mxu0 0
        %1920 = vmatpush1.bf16.msra.mxu0 0
        %1921 = vmatprep.subr.bf16.mxu0 0
        %1922 = vmatpush1.bf16.msra.mxu0 0
        %1923 = vmatprep.subr.bf16.mxu0 0
        %1924 = vmatpush1.bf16.msra.mxu0 0
        %1925 = vmatprep.subr.bf16.mxu0 0
        %1926 = vmatpush1.bf16.msra.mxu0 0
        %1927 = vmatprep.subr.bf16.mxu0 0
        %1928 = vmatpush1.bf16.msra.mxu0 0
        %1929 = vmatprep.subr.bf16.mxu0 0
        %1930 = vmatpush1.bf16.msra.mxu0 0
        %1931 = vmatprep.subr.bf16.mxu0 0
        %1932 = vmatpush1.bf16.msra.mxu0 0
        %1933 = vmatprep.subr.bf16.mxu0 0
        %1934 = vmatpush1.bf16.msra.mxu0 0
        %1935 = vmatprep.mubr.bf16.mxu0 0
        %1936 = vmatmul.mubr.bf16.gmra.mrb[0].mxu0 %v1886
        %v1937 = vpop.f32.mrb[0].mxu0
        %v1938 = vadd.f32 0.0, %v1937
        %v1939 = vpop.f32.mrb[0].mxu0
        %v1940 = vpop.f32.mrb[0].mxu0
        %v1941 = vadd.f32 0.0, %v1940
        %v1942 = vpop.f32.mrb[0].mxu0
        %1943 = vmatprep.mubr.bf16.mxu0 0
        %1944 = vmatmul.mubr.bf16.gmra.mrb[0].mxu0 %v1889
        %v1945 = vpop.f32.mrb[0].mxu0
        %v1946 = vadd.f32 0.0, %v1945
        %v1947 = vpop.f32.mrb[0].mxu0
        %v1948 = vpop.f32.mrb[0].mxu0
        %v1949 = vadd.f32 0.0, %v1948
        %v1950 = vpop.f32.mrb[0].mxu0
        %1951 = vmatprep.mubr.bf16.mxu0 0
        %1952 = vmatmul.mubr.bf16.gmra.mrb[0].mxu0 %v1892
        %v1953 = vpop.f32.mrb[0].mxu0
        %v1954 = vadd.f32 0.0, %v1953
        %v1955 = vpop.f32.mrb[0].mxu0
        %v1956 = vpop.f32.mrb[0].mxu0
        %v1957 = vadd.f32 0.0, %v1956
        %v1958 = vpop.f32.mrb[0].mxu0
        %1959 = vmatprep.mubr.bf16.mxu0 0
        %1960 = vmatmul.mubr.bf16.gmra.mrb[0].mxu0 %v1895
        %v1961 = vpop.f32.mrb[0].mxu0
        %v1962 = vadd.f32 0.0, %v1961
        %v1963 = vpop.f32.mrb[0].mxu0
        %v1964 = vpop.f32.mrb[0].mxu0
        %v1965 = vadd.f32 0.0, %v1964
        %v1966 = vpop.f32.mrb[0].mxu0
        %1967 = vmatprep.mubr.bf16.mxu0 0
        %1968 = vmatmul.mubr.bf16.gmra.mrb[0].mxu0 %v1898
        %v1969 = vpop.f32.mrb[0].mxu0
        %v1970 = vadd.f32 0.0, %v1969
        %v1971 = vpop.f32.mrb[0].mxu0
        %v1972 = vpop.f32.mrb[0].mxu0
        %v1973 = vadd.f32 0.0, %v1972
        %v1974 = vpop.f32.mrb[0].mxu0
        %1975 = vdwg.mxu0
        %v1976 = vadd.f32 %v1790, %v1938
        %v1977 = vadd.f32 %v1791, %v1941
        %v1978 = vadd.f32 %v1792, %v1946
        %v1979 = vadd.f32 %v1793, %v1949
        %v1980 = vadd.f32 %v1794, %v1954
        %v1981 = vadd.f32 %v1795, %v1957
        %v1982 = vadd.f32 %v1796, %v1962
        %v1983 = vadd.f32 %v1797, %v1965
        %v1984 = vadd.f32 %v1798, %v1970
        %v1985 = vadd.f32 %v1799, %v1973
        %v1986 = vld [vmem:[%s388] sm:$0xe]
        %s1987 = scalar_lea.vmem %s3, 22
        %v1988 = vld [vmem:[%s1987] sm:$0x3]
        %v1990 = vunpack.c.l.b16 %v1986
        %v1991 = vpack.c.b16 %v1825, %v1990
        %v1992 = vrot.slane %v1991, 1
        %v1993 = vrot.slane %v1836, 1
        %v1994 = vsel %vm683, %v1992, %v1993
        %v1995 = vrot.slane %v1837, 1
        %v1996 = vsel %vm683, %v1993, %v1995
        %v1997 = vrot.slane %v1838, 1
        %v1998 = vsel %vm683, %v1995, %v1997
        %v1999 = vrot.slane %v1839, 1
        %v2000 = vsel %vm683, %v1997, %v1999
        %v2001 = vrot.slane %v1840, 1
        %v2002 = vsel %vm683, %v1999, %v2001
        %v2004 = vsel %vm498, %v1994, 0
        %v2007 = vsel %vm498, %v1996, 0
        %v2010 = vsel %vm498, %v1998, 0
        %v2013 = vsel %vm498, %v2000, 0
        %v2016 = vsel %vm498, %v2002, 0
        %v2019 = vsel %vm514, %v1988, 0
        %2021 = vmatprep.subr.bf16.mxu0 0
        %2022 = vmatpush1.bf16.msra.mxu0 %v2019
        %2023 = vmatprep.subr.bf16.mxu0 0
        %2024 = vmatpush1.bf16.msra.mxu0 0
        %2025 = vmatprep.subr.bf16.mxu0 0
        %2026 = vmatpush1.bf16.msra.mxu0 0
        %2027 = vmatprep.subr.bf16.mxu0 0
        %2028 = vmatpush1.bf16.msra.mxu0 0
        %2029 = vmatprep.subr.bf16.mxu0 0
        %2030 = vmatpush1.bf16.msra.mxu0 0
        %2031 = vmatprep.subr.bf16.mxu0 0
        %2032 = vmatpush1.bf16.msra.mxu0 0
        %2033 = vmatprep.subr.bf16.mxu0 0
        %2034 = vmatpush1.bf16.msra.mxu0 0
        %2035 = vmatprep.subr.bf16.mxu0 0
        %2036 = vmatpush1.bf16.msra.mxu0 0
        %2037 = vmatprep.subr.bf16.mxu0 0
        %2038 = vmatpush1.bf16.msra.mxu0 0
        %2039 = vmatprep.subr.bf16.mxu0 0
        %2040 = vmatpush1.bf16.msra.mxu0 0
        %2041 = vmatprep.subr.bf16.mxu0 0
        %2042 = vmatpush1.bf16.msra.mxu0 0
        %2043 = vmatprep.subr.bf16.mxu0 0
        %2044 = vmatpush1.bf16.msra.mxu0 0
        %2045 = vmatprep.subr.bf16.mxu0 0
        %2046 = vmatpush1.bf16.msra.mxu0 0
        %2047 = vmatprep.subr.bf16.mxu0 0
        %2048 = vmatpush1.bf16.msra.mxu0 0
        %2049 = vmatprep.subr.bf16.mxu0 0
        %2050 = vmatpush1.bf16.msra.mxu0 0
        %2051 = vmatprep.subr.bf16.mxu0 0
        %2052 = vmatpush1.bf16.msra.mxu0 0
        %2053 = vmatprep.mubr.bf16.mxu0 0
        %2054 = vmatmul.mubr.bf16.gmra.mrb[0].mxu0 %v2004
        %v2055 = vpop.f32.mrb[0].mxu0
        %v2056 = vadd.f32 0.0, %v2055
        %v2057 = vpop.f32.mrb[0].mxu0
        %v2058 = vpop.f32.mrb[0].mxu0
        %v2059 = vadd.f32 0.0, %v2058
        %v2060 = vpop.f32.mrb[0].mxu0
        %2061 = vmatprep.mubr.bf16.mxu0 0
        %2062 = vmatmul.mubr.bf16.gmra.mrb[0].mxu0 %v2007
        %v2063 = vpop.f32.mrb[0].mxu0
        %v2064 = vadd.f32 0.0, %v2063
        %v2065 = vpop.f32.mrb[0].mxu0
        %v2066 = vpop.f32.mrb[0].mxu0
        %v2067 = vadd.f32 0.0, %v2066
        %v2068 = vpop.f32.mrb[0].mxu0
        %2069 = vmatprep.mubr.bf16.mxu0 0
        %2070 = vmatmul.mubr.bf16.gmra.mrb[0].mxu0 %v2010
        %v2071 = vpop.f32.mrb[0].mxu0
        %v2072 = vadd.f32 0.0, %v2071
        %v2073 = vpop.f32.mrb[0].mxu0
        %v2074 = vpop.f32.mrb[0].mxu0
        %v2075 = vadd.f32 0.0, %v2074
        %v2076 = vpop.f32.mrb[0].mxu0
        %2077 = vmatprep.mubr.bf16.mxu0 0
        %2078 = vmatmul.mubr.bf16.gmra.mrb[0].mxu0 %v2013
        %v2079 = vpop.f32.mrb[0].mxu0
        %v2080 = vadd.f32 0.0, %v2079
        %v2081 = vpop.f32.mrb[0].mxu0
        %v2082 = vpop.f32.mrb[0].mxu0
        %v2083 = vadd.f32 0.0, %v2082
        %v2084 = vpop.f32.mrb[0].mxu0
        %2085 = vmatprep.mubr.bf16.mxu0 0
        %2086 = vmatmul.mubr.bf16.gmra.mrb[0].mxu0 %v2016
        %v2087 = vpop.f32.mrb[0].mxu0
        %v2088 = vadd.f32 0.0, %v2087
        %v2089 = vpop.f32.mrb[0].mxu0
        %v2090 = vpop.f32.mrb[0].mxu0
        %v2091 = vadd.f32 0.0, %v2090
        %v2092 = vpop.f32.mrb[0].mxu0
        %2093 = vdwg.mxu0
        %v2094 = vadd.f32 %v1976, %v2056
        %v2095 = vadd.f32 %v1977, %v2059
        %v2096 = vadd.f32 %v1978, %v2064
        %v2097 = vadd.f32 %v1979, %v2067
        %v2098 = vadd.f32 %v1980, %v2072
        %v2099 = vadd.f32 %v1981, %v2075
        %v2100 = vadd.f32 %v1982, %v2080
        %v2101 = vadd.f32 %v1983, %v2083
        %v2102 = vadd.f32 %v1984, %v2088
        %v2103 = vadd.f32 %v1985, %v2091
        %v2104 = vld [vmem:[%s388 + $0x4] sm:$0xe]
        %v2105 = vld [vmem:[%s388 + $0x8] sm:$0xf]
        %v2106 = vld [vmem:[%s388 + $0xc] sm:$0xf]
        %v2107 = vld [vmem:[%s388 + $0x10] sm:$0xf]
        %v2108 = vld [vmem:[%s388 + $0x14] sm:$0xf]
        %v2109 = vld [vmem:[%s388 + $0x18] sm:$0xf]
        %v2110 = vld [vmem:[%s388 + $0x1c] sm:$0xf]
        %v2111 = vld [vmem:[%s388 + $0x20] sm:$0xf]
        %v2112 = vld [vmem:[%s388 + $0x24] sm:$0xf]
        %v2113 = vld [vmem:[%s388 + $0x28] sm:$0xf]
        %v2114 = vld [vmem:[%s388 + $0x2c] sm:$0x1]
        %s2115 = scalar_lea.vmem %s3, 24
        %v2116 = vld [vmem:[%s2115] sm:$0x3]
        %v2128 = vunpack.c.l.b16 %v2104
        %v2129 = vunpack.c.l.b16 %v2105
        %v2130 = vunpack.c.l.b16 %v2106
        %v2131 = vunpack.c.l.b16 %v2107
        %v2132 = vunpack.c.l.b16 %v2108
        %v2133 = vunpack.c.l.b16 %v2109
        %v2134 = vunpack.c.l.b16 %v2110
        %v2135 = vunpack.c.l.b16 %v2111
        %v2136 = vunpack.c.l.b16 %v2112
        %v2137 = vunpack.c.l.b16 %v2113
        %v2138 = vunpack.c.l.b16 %v2114
        %v2139 = vpack.c.b16 %v2129, %v2128
        %v2140 = vpack.c.b16 %v2131, %v2130
        %v2141 = vpack.c.b16 %v2133, %v2132
        %v2142 = vpack.c.b16 %v2135, %v2134
        %v2143 = vpack.c.b16 %v2137, %v2136
        %v2144 = vpack.c.b16 %v2138, %v2138
        %v2145 = vrot.slane %v2139, 1
        %v2146 = vrot.slane %v2140, 1
        %v2147 = vsel %vm683, %v2145, %v2146
        %v2148 = vrot.slane %v2141, 1
        %v2149 = vsel %vm683, %v2146, %v2148
        %v2150 = vrot.slane %v2142, 1
        %v2151 = vsel %vm683, %v2148, %v2150
        %v2152 = vrot.slane %v2143, 1
        %v2153 = vsel %vm683, %v2150, %v2152
        %v2154 = vrot.slane %v2144, 1
        %v2155 = vsel %vm683, %v2152, %v2154
        %v2157 = vsel %vm498, %v2147, 0
        %v2160 = vsel %vm498, %v2149, 0
        %v2163 = vsel %vm498, %v2151, 0
        %v2166 = vsel %vm498, %v2153, 0
        %v2169 = vsel %vm498, %v2155, 0
        %v2172 = vsel %vm514, %v2116, 0
        %2174 = vmatprep.subr.bf16.mxu0 0
        %2175 = vmatpush1.bf16.msra.mxu0 %v2172
        %2176 = vmatprep.subr.bf16.mxu0 0
        %2177 = vmatpush1.bf16.msra.mxu0 0
        %2178 = vmatprep.subr.bf16.mxu0 0
        %2179 = vmatpush1.bf16.msra.mxu0 0
        %2180 = vmatprep.subr.bf16.mxu0 0
        %2181 = vmatpush1.bf16.msra.mxu0 0
        %2182 = vmatprep.subr.bf16.mxu0 0
        %2183 = vmatpush1.bf16.msra.mxu0 0
        %2184 = vmatprep.subr.bf16.mxu0 0
        %2185 = vmatpush1.bf16.msra.mxu0 0
        %2186 = vmatprep.subr.bf16.mxu0 0
        %2187 = vmatpush1.bf16.msra.mxu0 0
        %2188 = vmatprep.subr.bf16.mxu0 0
        %2189 = vmatpush1.bf16.msra.mxu0 0
        %2190 = vmatprep.subr.bf16.mxu0 0
        %2191 = vmatpush1.bf16.msra.mxu0 0
        %2192 = vmatprep.subr.bf16.mxu0 0
        %2193 = vmatpush1.bf16.msra.mxu0 0
        %2194 = vmatprep.subr.bf16.mxu0 0
        %2195 = vmatpush1.bf16.msra.mxu0 0
        %2196 = vmatprep.subr.bf16.mxu0 0
        %2197 = vmatpush1.bf16.msra.mxu0 0
        %2198 = vmatprep.subr.bf16.mxu0 0
        %2199 = vmatpush1.bf16.msra.mxu0 0
        %2200 = vmatprep.subr.bf16.mxu0 0
        %2201 = vmatpush1.bf16.msra.mxu0 0
        %2202 = vmatprep.subr.bf16.mxu0 0
        %2203 = vmatpush1.bf16.msra.mxu0 0
        %2204 = vmatprep.subr.bf16.mxu0 0
        %2205 = vmatpush1.bf16.msra.mxu0 0
        %2206 = vmatprep.mubr.bf16.mxu0 0
        %2207 = vmatmul.mubr.bf16.gmra.mrb[0].mxu0 %v2157
        %v2208 = vpop.f32.mrb[0].mxu0
        %v2209 = vadd.f32 0.0, %v2208
        %v2210 = vpop.f32.mrb[0].mxu0
        %v2211 = vpop.f32.mrb[0].mxu0
        %v2212 = vadd.f32 0.0, %v2211
        %v2213 = vpop.f32.mrb[0].mxu0
        %2214 = vmatprep.mubr.bf16.mxu0 0
        %2215 = vmatmul.mubr.bf16.gmra.mrb[0].mxu0 %v2160
        %v2216 = vpop.f32.mrb[0].mxu0
        %v2217 = vadd.f32 0.0, %v2216
        %v2218 = vpop.f32.mrb[0].mxu0
        %v2219 = vpop.f32.mrb[0].mxu0
        %v2220 = vadd.f32 0.0, %v2219
        %v2221 = vpop.f32.mrb[0].mxu0
        %2222 = vmatprep.mubr.bf16.mxu0 0
        %2223 = vmatmul.mubr.bf16.gmra.mrb[0].mxu0 %v2163
        %v2224 = vpop.f32.mrb[0].mxu0
        %v2225 = vadd.f32 0.0, %v2224
        %v2226 = vpop.f32.mrb[0].mxu0
        %v2227 = vpop.f32.mrb[0].mxu0
        %v2228 = vadd.f32 0.0, %v2227
        %v2229 = vpop.f32.mrb[0].mxu0
        %2230 = vmatprep.mubr.bf16.mxu0 0
        %2231 = vmatmul.mubr.bf16.gmra.mrb[0].mxu0 %v2166
        %v2232 = vpop.f32.mrb[0].mxu0
        %v2233 = vadd.f32 0.0, %v2232
        %v2234 = vpop.f32.mrb[0].mxu0
        %v2235 = vpop.f32.mrb[0].mxu0
        %v2236 = vadd.f32 0.0, %v2235
        %v2237 = vpop.f32.mrb[0].mxu0
        %2238 = vmatprep.mubr.bf16.mxu0 0
        %2239 = vmatmul.mubr.bf16.gmra.mrb[0].mxu0 %v2169
        %v2240 = vpop.f32.mrb[0].mxu0
        %v2241 = vadd.f32 0.0, %v2240
        %v2242 = vpop.f32.mrb[0].mxu0
        %v2243 = vpop.f32.mrb[0].mxu0
        %v2244 = vadd.f32 0.0, %v2243
        %v2245 = vpop.f32.mrb[0].mxu0
        %2246 = vdwg.mxu0
        %v2247 = vadd.f32 %v2094, %v2209
        %v2248 = vadd.f32 %v2095, %v2212
        %v2249 = vadd.f32 %v2096, %v2217
        %v2250 = vadd.f32 %v2097, %v2220
        %v2251 = vadd.f32 %v2098, %v2225
        %v2252 = vadd.f32 %v2099, %v2228
        %v2253 = vadd.f32 %v2100, %v2233
        %v2254 = vadd.f32 %v2101, %v2236
        %v2255 = vadd.f32 %v2102, %v2241
        %v2256 = vadd.f32 %v2103, %v2244
        %v2257 = vld [vmem:[%s388 + $0x2c] sm:$0x3]
        %s2258 = scalar_lea.vmem %s3, 26
        %v2259 = vld [vmem:[%s2258] sm:$0x3]
        %v2261 = vunpack.c.l.b16 %v2257
        %v2262 = vpack.c.b16 %v2261, %v2261
        %v2264 = vshrl.u32 %v2139, 16
        %v2266 = vrot.slane %v2264, 1
        %v2267 = vshll.u32 %v2139, 16
        %v2269 = vrot.slane %v2267, 2
        %v2270 = vor.u32 %v2266, %v2269
        %v2272 = vshrl.u32 %v2140, 16
        %v2274 = vrot.slane %v2272, 1
        %v2275 = vshll.u32 %v2140, 16
        %v2277 = vrot.slane %v2275, 2
        %v2278 = vor.u32 %v2274, %v2277
        %v2279 = vsel %vm955, %v2270, %v2278
        %v2281 = vshrl.u32 %v2141, 16
        %v2283 = vrot.slane %v2281, 1
        %v2284 = vshll.u32 %v2141, 16
        %v2286 = vrot.slane %v2284, 2
        %v2287 = vor.u32 %v2283, %v2286
        %v2288 = vsel %vm955, %v2278, %v2287
        %v2290 = vshrl.u32 %v2142, 16
        %v2292 = vrot.slane %v2290, 1
        %v2293 = vshll.u32 %v2142, 16
        %v2295 = vrot.slane %v2293, 2
        %v2296 = vor.u32 %v2292, %v2295
        %v2297 = vsel %vm955, %v2287, %v2296
        %v2299 = vshrl.u32 %v2143, 16
        %v2301 = vrot.slane %v2299, 1
        %v2302 = vshll.u32 %v2143, 16
        %v2304 = vrot.slane %v2302, 2
        %v2305 = vor.u32 %v2301, %v2304
        %v2306 = vsel %vm955, %v2296, %v2305
        %v2308 = vshrl.u32 %v2262, 16
        %v2310 = vrot.slane %v2308, 1
        %v2311 = vshll.u32 %v2262, 16
        %v2313 = vrot.slane %v2311, 2
        %v2314 = vor.u32 %v2310, %v2313
        %v2315 = vsel %vm955, %v2305, %v2314
        %v2317 = vsel %vm498, %v2279, 0
        %v2320 = vsel %vm498, %v2288, 0
        %v2323 = vsel %vm498, %v2297, 0
        %v2326 = vsel %vm498, %v2306, 0
        %v2329 = vsel %vm498, %v2315, 0
        %v2332 = vsel %vm514, %v2259, 0
        %2334 = vmatprep.subr.bf16.mxu0 0
        %2335 = vmatpush1.bf16.msra.mxu0 %v2332
        %2336 = vmatprep.subr.bf16.mxu0 0
        %2337 = vmatpush1.bf16.msra.mxu0 0
        %2338 = vmatprep.subr.bf16.mxu0 0
        %2339 = vmatpush1.bf16.msra.mxu0 0
        %2340 = vmatprep.subr.bf16.mxu0 0
        %2341 = vmatpush1.bf16.msra.mxu0 0
        %2342 = vmatprep.subr.bf16.mxu0 0
        %2343 = vmatpush1.bf16.msra.mxu0 0
        %2344 = vmatprep.subr.bf16.mxu0 0
        %2345 = vmatpush1.bf16.msra.mxu0 0
        %2346 = vmatprep.subr.bf16.mxu0 0
        %2347 = vmatpush1.bf16.msra.mxu0 0
        %2348 = vmatprep.subr.bf16.mxu0 0
        %2349 = vmatpush1.bf16.msra.mxu0 0
        %2350 = vmatprep.subr.bf16.mxu0 0
        %2351 = vmatpush1.bf16.msra.mxu0 0
        %2352 = vmatprep.subr.bf16.mxu0 0
        %2353 = vmatpush1.bf16.msra.mxu0 0
        %2354 = vmatprep.subr.bf16.mxu0 0
        %2355 = vmatpush1.bf16.msra.mxu0 0
        %2356 = vmatprep.subr.bf16.mxu0 0
        %2357 = vmatpush1.bf16.msra.mxu0 0
        %2358 = vmatprep.subr.bf16.mxu0 0
        %2359 = vmatpush1.bf16.msra.mxu0 0
        %2360 = vmatprep.subr.bf16.mxu0 0
        %2361 = vmatpush1.bf16.msra.mxu0 0
        %2362 = vmatprep.subr.bf16.mxu0 0
        %2363 = vmatpush1.bf16.msra.mxu0 0
        %2364 = vmatprep.subr.bf16.mxu0 0
        %2365 = vmatpush1.bf16.msra.mxu0 0
        %2366 = vmatprep.mubr.bf16.mxu0 0
        %2367 = vmatmul.mubr.bf16.gmra.mrb[0].mxu0 %v2317
        %v2368 = vpop.f32.mrb[0].mxu0
        %v2369 = vadd.f32 0.0, %v2368
        %v2370 = vpop.f32.mrb[0].mxu0
        %v2371 = vpop.f32.mrb[0].mxu0
        %v2372 = vadd.f32 0.0, %v2371
        %v2373 = vpop.f32.mrb[0].mxu0
        %2374 = vmatprep.mubr.bf16.mxu0 0
        %2375 = vmatmul.mubr.bf16.gmra.mrb[0].mxu0 %v2320
        %v2376 = vpop.f32.mrb[0].mxu0
        %v2377 = vadd.f32 0.0, %v2376
        %v2378 = vpop.f32.mrb[0].mxu0
        %v2379 = vpop.f32.mrb[0].mxu0
        %v2380 = vadd.f32 0.0, %v2379
        %v2381 = vpop.f32.mrb[0].mxu0
        %2382 = vmatprep.mubr.bf16.mxu0 0
        %2383 = vmatmul.mubr.bf16.gmra.mrb[0].mxu0 %v2323
        %v2384 = vpop.f32.mrb[0].mxu0
        %v2385 = vadd.f32 0.0, %v2384
        %v2386 = vpop.f32.mrb[0].mxu0
        %v2387 = vpop.f32.mrb[0].mxu0
        %v2388 = vadd.f32 0.0, %v2387
        %v2389 = vpop.f32.mrb[0].mxu0
        %2390 = vmatprep.mubr.bf16.mxu0 0
        %2391 = vmatmul.mubr.bf16.gmra.mrb[0].mxu0 %v2326
        %v2392 = vpop.f32.mrb[0].mxu0
        %v2393 = vadd.f32 0.0, %v2392
        %v2394 = vpop.f32.mrb[0].mxu0
        %v2395 = vpop.f32.mrb[0].mxu0
        %v2396 = vadd.f32 0.0, %v2395
        %v2397 = vpop.f32.mrb[0].mxu0
        %2398 = vmatprep.mubr.bf16.mxu0 0
        %2399 = vmatmul.mubr.bf16.gmra.mrb[0].mxu0 %v2329
        %v2400 = vpop.f32.mrb[0].mxu0
        %v2401 = vadd.f32 0.0, %v2400
        %v2402 = vpop.f32.mrb[0].mxu0
        %v2403 = vpop.f32.mrb[0].mxu0
        %v2404 = vadd.f32 0.0, %v2403
        %v2405 = vpop.f32.mrb[0].mxu0
        %2406 = vdwg.mxu0
        %v2407 = vadd.f32 %v2247, %v2369
        %v2408 = vadd.f32 %v2248, %v2372
        %v2409 = vadd.f32 %v2249, %v2377
        %v2410 = vadd.f32 %v2250, %v2380
        %v2411 = vadd.f32 %v2251, %v2385
        %v2412 = vadd.f32 %v2252, %v2388
        %v2413 = vadd.f32 %v2253, %v2393
        %v2414 = vadd.f32 %v2254, %v2396
        %v2415 = vadd.f32 %v2255, %v2401
        %v2416 = vadd.f32 %v2256, %v2404
        %v2417 = vld [vmem:[%s388 + $0x4] sm:$0xc]
        %s2418 = scalar_lea.vmem %s3, 28
        %v2419 = vld [vmem:[%s2418] sm:$0x3]
        %v2421 = vunpack.c.l.b16 %v2417
        %v2422 = vpack.c.b16 %v2129, %v2421
        %v2423 = vrot.slane %v2422, 2
        %v2424 = vrot.slane %v2140, 2
        %v2425 = vsel %vm1116, %v2423, %v2424
        %v2426 = vrot.slane %v2141, 2
        %v2427 = vsel %vm1116, %v2424, %v2426
        %v2428 = vrot.slane %v2142, 2
        %v2429 = vsel %vm1116, %v2426, %v2428
        %v2430 = vrot.slane %v2143, 2
        %v2431 = vsel %vm1116, %v2428, %v2430
        %v2432 = vrot.slane %v2262, 2
        %v2433 = vsel %vm1116, %v2430, %v2432
        %v2435 = vsel %vm498, %v2425, 0
        %v2438 = vsel %vm498, %v2427, 0
        %v2441 = vsel %vm498, %v2429, 0
        %v2444 = vsel %vm498, %v2431, 0
        %v2447 = vsel %vm498, %v2433, 0
        %v2450 = vsel %vm514, %v2419, 0
        %2452 = vmatprep.subr.bf16.mxu0 0
        %2453 = vmatpush1.bf16.msra.mxu0 %v2450
        %2454 = vmatprep.subr.bf16.mxu0 0
        %2455 = vmatpush1.bf16.msra.mxu0 0
        %2456 = vmatprep.subr.bf16.mxu0 0
        %2457 = vmatpush1.bf16.msra.mxu0 0
        %2458 = vmatprep.subr.bf16.mxu0 0
        %2459 = vmatpush1.bf16.msra.mxu0 0
        %2460 = vmatprep.subr.bf16.mxu0 0
        %2461 = vmatpush1.bf16.msra.mxu0 0
        %2462 = vmatprep.subr.bf16.mxu0 0
        %2463 = vmatpush1.bf16.msra.mxu0 0
        %2464 = vmatprep.subr.bf16.mxu0 0
        %2465 = vmatpush1.bf16.msra.mxu0 0
        %2466 = vmatprep.subr.bf16.mxu0 0
        %2467 = vmatpush1.bf16.msra.mxu0 0
        %2468 = vmatprep.subr.bf16.mxu0 0
        %2469 = vmatpush1.bf16.msra.mxu0 0
        %2470 = vmatprep.subr.bf16.mxu0 0
        %2471 = vmatpush1.bf16.msra.mxu0 0
        %2472 = vmatprep.subr.bf16.mxu0 0
        %2473 = vmatpush1.bf16.msra.mxu0 0
        %2474 = vmatprep.subr.bf16.mxu0 0
        %2475 = vmatpush1.bf16.msra.mxu0 0
        %2476 = vmatprep.subr.bf16.mxu0 0
        %2477 = vmatpush1.bf16.msra.mxu0 0
        %2478 = vmatprep.subr.bf16.mxu0 0
        %2479 = vmatpush1.bf16.msra.mxu0 0
        %2480 = vmatprep.subr.bf16.mxu0 0
        %2481 = vmatpush1.bf16.msra.mxu0 0
        %2482 = vmatprep.subr.bf16.mxu0 0
        %2483 = vmatpush1.bf16.msra.mxu0 0
        %2484 = vmatprep.mubr.bf16.mxu0 0
        %2485 = vmatmul.mubr.bf16.gmra.mrb[0].mxu0 %v2435
        %v2486 = vpop.f32.mrb[0].mxu0
        %v2487 = vadd.f32 0.0, %v2486
        %v2488 = vpop.f32.mrb[0].mxu0
        %v2489 = vpop.f32.mrb[0].mxu0
        %v2490 = vadd.f32 0.0, %v2489
        %v2491 = vpop.f32.mrb[0].mxu0
        %2492 = vmatprep.mubr.bf16.mxu0 0
        %2493 = vmatmul.mubr.bf16.gmra.mrb[0].mxu0 %v2438
        %v2494 = vpop.f32.mrb[0].mxu0
        %v2495 = vadd.f32 0.0, %v2494
        %v2496 = vpop.f32.mrb[0].mxu0
        %v2497 = vpop.f32.mrb[0].mxu0
        %v2498 = vadd.f32 0.0, %v2497
        %v2499 = vpop.f32.mrb[0].mxu0
        %2500 = vmatprep.mubr.bf16.mxu0 0
        %2501 = vmatmul.mubr.bf16.gmra.mrb[0].mxu0 %v2441
        %v2502 = vpop.f32.mrb[0].mxu0
        %v2503 = vadd.f32 0.0, %v2502
        %v2504 = vpop.f32.mrb[0].mxu0
        %v2505 = vpop.f32.mrb[0].mxu0
        %v2506 = vadd.f32 0.0, %v2505
        %v2507 = vpop.f32.mrb[0].mxu0
        %2508 = vmatprep.mubr.bf16.mxu0 0
        %2509 = vmatmul.mubr.bf16.gmra.mrb[0].mxu0 %v2444
        %v2510 = vpop.f32.mrb[0].mxu0
        %v2511 = vadd.f32 0.0, %v2510
        %v2512 = vpop.f32.mrb[0].mxu0
        %v2513 = vpop.f32.mrb[0].mxu0
        %v2514 = vadd.f32 0.0, %v2513
        %v2515 = vpop.f32.mrb[0].mxu0
        %2516 = vmatprep.mubr.bf16.mxu0 0
        %2517 = vmatmul.mubr.bf16.gmra.mrb[0].mxu0 %v2447
        %v2518 = vpop.f32.mrb[0].mxu0
        %v2519 = vadd.f32 0.0, %v2518
        %v2520 = vpop.f32.mrb[0].mxu0
        %v2521 = vpop.f32.mrb[0].mxu0
        %v2522 = vadd.f32 0.0, %v2521
        %v2523 = vpop.f32.mrb[0].mxu0
        %2524 = vdwg.mxu0
        %v2525 = vadd.f32 %v2407, %v2487
        %v2526 = vadd.f32 %v2408, %v2490
        %v2527 = vadd.f32 %v2409, %v2495
        %v2528 = vadd.f32 %v2410, %v2498
        %v2529 = vadd.f32 %v2411, %v2503
        %v2530 = vadd.f32 %v2412, %v2506
        %v2531 = vadd.f32 %v2413, %v2511
        %v2532 = vadd.f32 %v2414, %v2514
        %v2533 = vadd.f32 %v2415, %v2519
        %v2534 = vadd.f32 %v2416, %v2522
        %v2535 = vld [vmem:[%s388 + $0x8] sm:$0xc]
        %v2536 = vld [vmem:[%s388 + $0xc] sm:$0xf]
        %v2537 = vld [vmem:[%s388 + $0x10] sm:$0xf]
        %v2538 = vld [vmem:[%s388 + $0x14] sm:$0xf]
        %v2539 = vld [vmem:[%s388 + $0x18] sm:$0xf]
        %v2540 = vld [vmem:[%s388 + $0x1c] sm:$0xf]
        %v2541 = vld [vmem:[%s388 + $0x20] sm:$0xf]
        %v2542 = vld [vmem:[%s388 + $0x24] sm:$0xf]
        %v2543 = vld [vmem:[%s388 + $0x28] sm:$0xf]
        %v2544 = vld [vmem:[%s388 + $0x2c] sm:$0xf]
        %v2545 = vld [vmem:[%s388 + $0x30] sm:$0x3]
        %s2546 = scalar_lea.vmem %s3, 30
        %v2547 = vld [vmem:[%s2546] sm:$0x3]
        %v2559 = vunpack.c.l.b16 %v2535
        %v2560 = vunpack.c.l.b16 %v2536
        %v2561 = vunpack.c.l.b16 %v2537
        %v2562 = vunpack.c.l.b16 %v2538
        %v2563 = vunpack.c.l.b16 %v2539
        %v2564 = vunpack.c.l.b16 %v2540
        %v2565 = vunpack.c.l.b16 %v2541
        %v2566 = vunpack.c.l.b16 %v2542
        %v2567 = vunpack.c.l.b16 %v2543
        %v2568 = vunpack.c.l.b16 %v2544
        %v2569 = vunpack.c.l.b16 %v2545
        %v2570 = vpack.c.b16 %v2560, %v2559
        %v2571 = vpack.c.b16 %v2562, %v2561
        %v2572 = vpack.c.b16 %v2564, %v2563
        %v2573 = vpack.c.b16 %v2566, %v2565
        %v2574 = vpack.c.b16 %v2568, %v2567
        %v2575 = vpack.c.b16 %v2569, %v2569
        %v2576 = vrot.slane %v2570, 2
        %v2577 = vrot.slane %v2571, 2
        %v2578 = vsel %vm1116, %v2576, %v2577
        %v2579 = vrot.slane %v2572, 2
        %v2580 = vsel %vm1116, %v2577, %v2579
        %v2581 = vrot.slane %v2573, 2
        %v2582 = vsel %vm1116, %v2579, %v2581
        %v2583 = vrot.slane %v2574, 2
        %v2584 = vsel %vm1116, %v2581, %v2583
        %v2585 = vrot.slane %v2575, 2
        %v2586 = vsel %vm1116, %v2583, %v2585
        %v2588 = vsel %vm498, %v2578, 0
        %v2591 = vsel %vm498, %v2580, 0
        %v2594 = vsel %vm498, %v2582, 0
        %v2597 = vsel %vm498, %v2584, 0
        %v2600 = vsel %vm498, %v2586, 0
        %v2603 = vsel %vm514, %v2547, 0
        %2605 = vmatprep.subr.bf16.mxu0 0
        %2606 = vmatpush1.bf16.msra.mxu0 %v2603
        %2607 = vmatprep.subr.bf16.mxu0 0
        %2608 = vmatpush1.bf16.msra.mxu0 0
        %2609 = vmatprep.subr.bf16.mxu0 0
        %2610 = vmatpush1.bf16.msra.mxu0 0
        %2611 = vmatprep.subr.bf16.mxu0 0
        %2612 = vmatpush1.bf16.msra.mxu0 0
        %2613 = vmatprep.subr.bf16.mxu0 0
        %2614 = vmatpush1.bf16.msra.mxu0 0
        %2615 = vmatprep.subr.bf16.mxu0 0
        %2616 = vmatpush1.bf16.msra.mxu0 0
        %2617 = vmatprep.subr.bf16.mxu0 0
        %2618 = vmatpush1.bf16.msra.mxu0 0
        %2619 = vmatprep.subr.bf16.mxu0 0
        %2620 = vmatpush1.bf16.msra.mxu0 0
        %2621 = vmatprep.subr.bf16.mxu0 0
        %2622 = vmatpush1.bf16.msra.mxu0 0
        %2623 = vmatprep.subr.bf16.mxu0 0
        %2624 = vmatpush1.bf16.msra.mxu0 0
        %2625 = vmatprep.subr.bf16.mxu0 0
        %2626 = vmatpush1.bf16.msra.mxu0 0
        %2627 = vmatprep.subr.bf16.mxu0 0
        %2628 = vmatpush1.bf16.msra.mxu0 0
        %2629 = vmatprep.subr.bf16.mxu0 0
        %2630 = vmatpush1.bf16.msra.mxu0 0
        %2631 = vmatprep.subr.bf16.mxu0 0
        %2632 = vmatpush1.bf16.msra.mxu0 0
        %2633 = vmatprep.subr.bf16.mxu0 0
        %2634 = vmatpush1.bf16.msra.mxu0 0
        %2635 = vmatprep.subr.bf16.mxu0 0
        %2636 = vmatpush1.bf16.msra.mxu0 0
        %2637 = vmatprep.mubr.bf16.mxu0 0
        %2638 = vmatmul.mubr.bf16.gmra.mrb[0].mxu0 %v2588
        %v2639 = vpop.f32.mrb[0].mxu0
        %v2640 = vadd.f32 0.0, %v2639
        %v2641 = vpop.f32.mrb[0].mxu0
        %v2642 = vpop.f32.mrb[0].mxu0
        %v2643 = vadd.f32 0.0, %v2642
        %v2644 = vpop.f32.mrb[0].mxu0
        %2645 = vmatprep.mubr.bf16.mxu0 0
        %2646 = vmatmul.mubr.bf16.gmra.mrb[0].mxu0 %v2591
        %v2647 = vpop.f32.mrb[0].mxu0
        %v2648 = vadd.f32 0.0, %v2647
        %v2649 = vpop.f32.mrb[0].mxu0
        %v2650 = vpop.f32.mrb[0].mxu0
        %v2651 = vadd.f32 0.0, %v2650
        %v2652 = vpop.f32.mrb[0].mxu0
        %2653 = vmatprep.mubr.bf16.mxu0 0
        %2654 = vmatmul.mubr.bf16.gmra.mrb[0].mxu0 %v2594
        %v2655 = vpop.f32.mrb[0].mxu0
        %v2656 = vadd.f32 0.0, %v2655
        %v2657 = vpop.f32.mrb[0].mxu0
        %v2658 = vpop.f32.mrb[0].mxu0
        %v2659 = vadd.f32 0.0, %v2658
        %v2660 = vpop.f32.mrb[0].mxu0
        %2661 = vmatprep.mubr.bf16.mxu0 0
        %2662 = vmatmul.mubr.bf16.gmra.mrb[0].mxu0 %v2597
        %v2663 = vpop.f32.mrb[0].mxu0
        %v2664 = vadd.f32 0.0, %v2663
        %v2665 = vpop.f32.mrb[0].mxu0
        %v2666 = vpop.f32.mrb[0].mxu0
        %v2667 = vadd.f32 0.0, %v2666
        %v2668 = vpop.f32.mrb[0].mxu0
        %2669 = vmatprep.mubr.bf16.mxu0 0
        %2670 = vmatmul.mubr.bf16.gmra.mrb[0].mxu0 %v2600
        %v2671 = vpop.f32.mrb[0].mxu0
        %v2672 = vadd.f32 0.0, %v2671
        %v2673 = vpop.f32.mrb[0].mxu0
        %v2674 = vpop.f32.mrb[0].mxu0
        %v2675 = vadd.f32 0.0, %v2674
        %v2676 = vpop.f32.mrb[0].mxu0
        %2677 = vdwg.mxu0
        %v2678 = vadd.f32 %v2525, %v2640
        %v2679 = vadd.f32 %v2526, %v2643
        %v2680 = vadd.f32 %v2527, %v2648
        %v2681 = vadd.f32 %v2528, %v2651
        %v2682 = vadd.f32 %v2529, %v2656
        %v2683 = vadd.f32 %v2530, %v2659
        %v2684 = vadd.f32 %v2531, %v2664
        %v2685 = vadd.f32 %v2532, %v2667
        %v2686 = vadd.f32 %v2533, %v2672
        %v2687 = vadd.f32 %v2534, %v2675
        %v2688 = vld [vmem:[%s388 + $0x30] sm:$0x7]
        %s2689 = scalar_lea.vmem %s3, 32
        %v2690 = vld [vmem:[%s2689] sm:$0x3]
        %v2692 = vunpack.c.l.b16 %v2688
        %v2693 = vpack.c.b16 %v2692, %v2692
        %v2695 = vshrl.u32 %v2570, 16
        %v2697 = vrot.slane %v2695, 2
        %v2698 = vshll.u32 %v2570, 16
        %v2700 = vrot.slane %v2698, 3
        %v2701 = vor.u32 %v2697, %v2700
        %v2703 = vshrl.u32 %v2571, 16
        %v2705 = vrot.slane %v2703, 2
        %v2706 = vshll.u32 %v2571, 16
        %v2708 = vrot.slane %v2706, 3
        %v2709 = vor.u32 %v2705, %v2708
        %v2710 = vsel %vm1388, %v2701, %v2709
        %v2712 = vshrl.u32 %v2572, 16
        %v2714 = vrot.slane %v2712, 2
        %v2715 = vshll.u32 %v2572, 16
        %v2717 = vrot.slane %v2715, 3
        %v2718 = vor.u32 %v2714, %v2717
        %v2719 = vsel %vm1388, %v2709, %v2718
        %v2721 = vshrl.u32 %v2573, 16
        %v2723 = vrot.slane %v2721, 2
        %v2724 = vshll.u32 %v2573, 16
        %v2726 = vrot.slane %v2724, 3
        %v2727 = vor.u32 %v2723, %v2726
        %v2728 = vsel %vm1388, %v2718, %v2727
        %v2730 = vshrl.u32 %v2574, 16
        %v2732 = vrot.slane %v2730, 2
        %v2733 = vshll.u32 %v2574, 16
        %v2735 = vrot.slane %v2733, 3
        %v2736 = vor.u32 %v2732, %v2735
        %v2737 = vsel %vm1388, %v2727, %v2736
        %v2739 = vshrl.u32 %v2693, 16
        %v2741 = vrot.slane %v2739, 2
        %v2742 = vshll.u32 %v2693, 16
        %v2744 = vrot.slane %v2742, 3
        %v2745 = vor.u32 %v2741, %v2744
        %v2746 = vsel %vm1388, %v2736, %v2745
        %v2748 = vsel %vm498, %v2710, 0
        %v2751 = vsel %vm498, %v2719, 0
        %v2754 = vsel %vm498, %v2728, 0
        %v2757 = vsel %vm498, %v2737, 0
        %v2760 = vsel %vm498, %v2746, 0
        %v2763 = vsel %vm514, %v2690, 0
        %2765 = vmatprep.subr.bf16.mxu0 0
        %2766 = vmatpush1.bf16.msra.mxu0 %v2763
        %2767 = vmatprep.subr.bf16.mxu0 0
        %2768 = vmatpush1.bf16.msra.mxu0 0
        %2769 = vmatprep.subr.bf16.mxu0 0
        %2770 = vmatpush1.bf16.msra.mxu0 0
        %2771 = vmatprep.subr.bf16.mxu0 0
        %2772 = vmatpush1.bf16.msra.mxu0 0
        %2773 = vmatprep.subr.bf16.mxu0 0
        %2774 = vmatpush1.bf16.msra.mxu0 0
        %2775 = vmatprep.subr.bf16.mxu0 0
        %2776 = vmatpush1.bf16.msra.mxu0 0
        %2777 = vmatprep.subr.bf16.mxu0 0
        %2778 = vmatpush1.bf16.msra.mxu0 0
        %2779 = vmatprep.subr.bf16.mxu0 0
        %2780 = vmatpush1.bf16.msra.mxu0 0
        %2781 = vmatprep.subr.bf16.mxu0 0
        %2782 = vmatpush1.bf16.msra.mxu0 0
        %2783 = vmatprep.subr.bf16.mxu0 0
        %2784 = vmatpush1.bf16.msra.mxu0 0
        %2785 = vmatprep.subr.bf16.mxu0 0
        %2786 = vmatpush1.bf16.msra.mxu0 0
        %2787 = vmatprep.subr.bf16.mxu0 0
        %2788 = vmatpush1.bf16.msra.mxu0 0
        %2789 = vmatprep.subr.bf16.mxu0 0
        %2790 = vmatpush1.bf16.msra.mxu0 0
        %2791 = vmatprep.subr.bf16.mxu0 0
        %2792 = vmatpush1.bf16.msra.mxu0 0
        %2793 = vmatprep.subr.bf16.mxu0 0
        %2794 = vmatpush1.bf16.msra.mxu0 0
        %2795 = vmatprep.subr.bf16.mxu0 0
        %2796 = vmatpush1.bf16.msra.mxu0 0
        %2797 = vmatprep.mubr.bf16.mxu0 0
        %2798 = vmatmul.mubr.bf16.gmra.mrb[0].mxu0 %v2748
        %v2799 = vpop.f32.mrb[0].mxu0
        %v2800 = vadd.f32 0.0, %v2799
        %v2801 = vpop.f32.mrb[0].mxu0
        %v2802 = vpop.f32.mrb[0].mxu0
        %v2803 = vadd.f32 0.0, %v2802
        %v2804 = vpop.f32.mrb[0].mxu0
        %2805 = vmatprep.mubr.bf16.mxu0 0
        %2806 = vmatmul.mubr.bf16.gmra.mrb[0].mxu0 %v2751
        %v2807 = vpop.f32.mrb[0].mxu0
        %v2808 = vadd.f32 0.0, %v2807
        %v2809 = vpop.f32.mrb[0].mxu0
        %v2810 = vpop.f32.mrb[0].mxu0
        %v2811 = vadd.f32 0.0, %v2810
        %v2812 = vpop.f32.mrb[0].mxu0
        %2813 = vmatprep.mubr.bf16.mxu0 0
        %2814 = vmatmul.mubr.bf16.gmra.mrb[0].mxu0 %v2754
        %v2815 = vpop.f32.mrb[0].mxu0
        %v2816 = vadd.f32 0.0, %v2815
        %v2817 = vpop.f32.mrb[0].mxu0
        %v2818 = vpop.f32.mrb[0].mxu0
        %v2819 = vadd.f32 0.0, %v2818
        %v2820 = vpop.f32.mrb[0].mxu0
        %2821 = vmatprep.mubr.bf16.mxu0 0
        %2822 = vmatmul.mubr.bf16.gmra.mrb[0].mxu0 %v2757
        %v2823 = vpop.f32.mrb[0].mxu0
        %v2824 = vadd.f32 0.0, %v2823
        %v2825 = vpop.f32.mrb[0].mxu0
        %v2826 = vpop.f32.mrb[0].mxu0
        %v2827 = vadd.f32 0.0, %v2826
        %v2828 = vpop.f32.mrb[0].mxu0
        %2829 = vmatprep.mubr.bf16.mxu0 0
        %2830 = vmatmul.mubr.bf16.gmra.mrb[0].mxu0 %v2760
        %v2831 = vpop.f32.mrb[0].mxu0
        %v2832 = vadd.f32 0.0, %v2831
        %v2833 = vpop.f32.mrb[0].mxu0
        %v2834 = vpop.f32.mrb[0].mxu0
        %v2835 = vadd.f32 0.0, %v2834
        %v2836 = vpop.f32.mrb[0].mxu0
        %2837 = vdwg.mxu0
        %v2838 = vadd.f32 %v2678, %v2800
        %v2839 = vadd.f32 %v2679, %v2803
        %v2840 = vadd.f32 %v2680, %v2808
        %v2841 = vadd.f32 %v2681, %v2811
        %v2842 = vadd.f32 %v2682, %v2816
        %v2843 = vadd.f32 %v2683, %v2819
        %v2844 = vadd.f32 %v2684, %v2824
        %v2845 = vadd.f32 %v2685, %v2827
        %v2846 = vadd.f32 %v2686, %v2832
        %v2847 = vadd.f32 %v2687, %v2835
        %v2848 = vld [vmem:[%s388 + $0x8] sm:$0x8]
        %s2849 = scalar_lea.vmem %s3, 34
        %v2850 = vld [vmem:[%s2849] sm:$0x3]
        %v2852 = vunpack.c.l.b16 %v2848
        %v2853 = vpack.c.b16 %v2560, %v2852
        %v2854 = vrot.slane %v2853, 3
        %v2855 = vrot.slane %v2571, 3
        %v2856 = vsel %vm1549, %v2854, %v2855
        %v2857 = vrot.slane %v2572, 3
        %v2858 = vsel %vm1549, %v2855, %v2857
        %v2859 = vrot.slane %v2573, 3
        %v2860 = vsel %vm1549, %v2857, %v2859
        %v2861 = vrot.slane %v2574, 3
        %v2862 = vsel %vm1549, %v2859, %v2861
        %v2863 = vrot.slane %v2693, 3
        %v2864 = vsel %vm1549, %v2861, %v2863
        %v2866 = vsel %vm498, %v2856, 0
        %v2869 = vsel %vm498, %v2858, 0
        %v2872 = vsel %vm498, %v2860, 0
        %v2875 = vsel %vm498, %v2862, 0
        %v2878 = vsel %vm498, %v2864, 0
        %v2881 = vsel %vm514, %v2850, 0
        %2883 = vmatprep.subr.bf16.mxu0 0
        %2884 = vmatpush1.bf16.msra.mxu0 %v2881
        %2885 = vmatprep.subr.bf16.mxu0 0
        %2886 = vmatpush1.bf16.msra.mxu0 0
        %2887 = vmatprep.subr.bf16.mxu0 0
        %2888 = vmatpush1.bf16.msra.mxu0 0
        %2889 = vmatprep.subr.bf16.mxu0 0
        %2890 = vmatpush1.bf16.msra.mxu0 0
        %2891 = vmatprep.subr.bf16.mxu0 0
        %2892 = vmatpush1.bf16.msra.mxu0 0
        %2893 = vmatprep.subr.bf16.mxu0 0
        %2894 = vmatpush1.bf16.msra.mxu0 0
        %2895 = vmatprep.subr.bf16.mxu0 0
        %2896 = vmatpush1.bf16.msra.mxu0 0
        %2897 = vmatprep.subr.bf16.mxu0 0
        %2898 = vmatpush1.bf16.msra.mxu0 0
        %2899 = vmatprep.subr.bf16.mxu0 0
        %2900 = vmatpush1.bf16.msra.mxu0 0
        %2901 = vmatprep.subr.bf16.mxu0 0
        %2902 = vmatpush1.bf16.msra.mxu0 0
        %2903 = vmatprep.subr.bf16.mxu0 0
        %2904 = vmatpush1.bf16.msra.mxu0 0
        %2905 = vmatprep.subr.bf16.mxu0 0
        %2906 = vmatpush1.bf16.msra.mxu0 0
        %2907 = vmatprep.subr.bf16.mxu0 0
        %2908 = vmatpush1.bf16.msra.mxu0 0
        %2909 = vmatprep.subr.bf16.mxu0 0
        %2910 = vmatpush1.bf16.msra.mxu0 0
        %2911 = vmatprep.subr.bf16.mxu0 0
        %2912 = vmatpush1.bf16.msra.mxu0 0
        %2913 = vmatprep.subr.bf16.mxu0 0
        %2914 = vmatpush1.bf16.msra.mxu0 0
        %2915 = vmatprep.mubr.bf16.mxu0 0
        %2916 = vmatmul.mubr.bf16.gmra.mrb[0].mxu0 %v2866
        %v2917 = vpop.f32.mrb[0].mxu0
        %v2918 = vadd.f32 0.0, %v2917
        %v2919 = vpop.f32.mrb[0].mxu0
        %v2920 = vpop.f32.mrb[0].mxu0
        %v2921 = vadd.f32 0.0, %v2920
        %v2922 = vpop.f32.mrb[0].mxu0
        %2923 = vmatprep.mubr.bf16.mxu0 0
        %2924 = vmatmul.mubr.bf16.gmra.mrb[0].mxu0 %v2869
        %v2925 = vpop.f32.mrb[0].mxu0
        %v2926 = vadd.f32 0.0, %v2925
        %v2927 = vpop.f32.mrb[0].mxu0
        %v2928 = vpop.f32.mrb[0].mxu0
        %v2929 = vadd.f32 0.0, %v2928
        %v2930 = vpop.f32.mrb[0].mxu0
        %2931 = vmatprep.mubr.bf16.mxu0 0
        %2932 = vmatmul.mubr.bf16.gmra.mrb[0].mxu0 %v2872
        %v2933 = vpop.f32.mrb[0].mxu0
        %v2934 = vadd.f32 0.0, %v2933
        %v2935 = vpop.f32.mrb[0].mxu0
        %v2936 = vpop.f32.mrb[0].mxu0
        %v2937 = vadd.f32 0.0, %v2936
        %v2938 = vpop.f32.mrb[0].mxu0
        %2939 = vmatprep.mubr.bf16.mxu0 0
        %2940 = vmatmul.mubr.bf16.gmra.mrb[0].mxu0 %v2875
        %v2941 = vpop.f32.mrb[0].mxu0
        %v2942 = vadd.f32 0.0, %v2941
        %v2943 = vpop.f32.mrb[0].mxu0
        %v2944 = vpop.f32.mrb[0].mxu0
        %v2945 = vadd.f32 0.0, %v2944
        %v2946 = vpop.f32.mrb[0].mxu0
        %2947 = vmatprep.mubr.bf16.mxu0 0
        %2948 = vmatmul.mubr.bf16.gmra.mrb[0].mxu0 %v2878
        %v2949 = vpop.f32.mrb[0].mxu0
        %v2950 = vadd.f32 0.0, %v2949
        %v2951 = vpop.f32.mrb[0].mxu0
        %v2952 = vpop.f32.mrb[0].mxu0
        %v2953 = vadd.f32 0.0, %v2952
        %v2954 = vpop.f32.mrb[0].mxu0
        %2955 = vdwg.mxu0
        %v2956 = vadd.f32 %v2838, %v2918
        %v2957 = vadd.f32 %v2839, %v2921
        %v2958 = vadd.f32 %v2840, %v2926
        %v2959 = vadd.f32 %v2841, %v2929
        %v2960 = vadd.f32 %v2842, %v2934
        %v2961 = vadd.f32 %v2843, %v2937
        %v2962 = vadd.f32 %v2844, %v2942
        %v2963 = vadd.f32 %v2845, %v2945
        %v2964 = vadd.f32 %v2846, %v2950
        %v2965 = vadd.f32 %v2847, %v2953
        %v2966 = vld [vmem:[%s399] sm:$0xf]
        %v2967 = vld [vmem:[%s399 + $0x4] sm:$0xf]
        %v2968 = vld [vmem:[%s399 + $0x8] sm:$0xf]
        %v2969 = vld [vmem:[%s399 + $0xc] sm:$0xf]
        %v2970 = vld [vmem:[%s399 + $0x10] sm:$0xf]
        %v2971 = vld [vmem:[%s399 + $0x14] sm:$0xf]
        %v2972 = vld [vmem:[%s399 + $0x18] sm:$0xf]
        %v2973 = vld [vmem:[%s399 + $0x1c] sm:$0xf]
        %v2974 = vld [vmem:[%s399 + $0x20] sm:$0xf]
        %v2975 = vld [vmem:[%s399 + $0x24] sm:$0xf]
        %s2976 = scalar_lea.vmem %s3, 36
        %v2977 = vld [vmem:[%s2976] sm:$0x3]
        %v2988 = vunpack.c.l.b16 %v2966
        %v2989 = vunpack.c.l.b16 %v2967
        %v2990 = vunpack.c.l.b16 %v2968
        %v2991 = vunpack.c.l.b16 %v2969
        %v2992 = vunpack.c.l.b16 %v2970
        %v2993 = vunpack.c.l.b16 %v2971
        %v2994 = vunpack.c.l.b16 %v2972
        %v2995 = vunpack.c.l.b16 %v2973
        %v2996 = vunpack.c.l.b16 %v2974
        %v2997 = vunpack.c.l.b16 %v2975
        %v2998 = vpack.c.b16 %v2989, %v2988
        %v2999 = vpack.c.b16 %v2991, %v2990
        %v3000 = vpack.c.b16 %v2993, %v2992
        %v3001 = vpack.c.b16 %v2995, %v2994
        %v3002 = vpack.c.b16 %v2997, %v2996
        %v3004 = vsel %vm498, %v2998, 0
        %v3007 = vsel %vm498, %v2999, 0
        %v3010 = vsel %vm498, %v3000, 0
        %v3013 = vsel %vm498, %v3001, 0
        %v3016 = vsel %vm498, %v3002, 0
        %v3019 = vsel %vm514, %v2977, 0
        %3021 = vmatprep.subr.bf16.mxu0 0
        %3022 = vmatpush1.bf16.msra.mxu0 %v3019
        %3023 = vmatprep.subr.bf16.mxu0 0
        %3024 = vmatpush1.bf16.msra.mxu0 0
        %3025 = vmatprep.subr.bf16.mxu0 0
        %3026 = vmatpush1.bf16.msra.mxu0 0
        %3027 = vmatprep.subr.bf16.mxu0 0
        %3028 = vmatpush1.bf16.msra.mxu0 0
        %3029 = vmatprep.subr.bf16.mxu0 0
        %3030 = vmatpush1.bf16.msra.mxu0 0
        %3031 = vmatprep.subr.bf16.mxu0 0
        %3032 = vmatpush1.bf16.msra.mxu0 0
        %3033 = vmatprep.subr.bf16.mxu0 0
        %3034 = vmatpush1.bf16.msra.mxu0 0
        %3035 = vmatprep.subr.bf16.mxu0 0
        %3036 = vmatpush1.bf16.msra.mxu0 0
        %3037 = vmatprep.subr.bf16.mxu0 0
        %3038 = vmatpush1.bf16.msra.mxu0 0
        %3039 = vmatprep.subr.bf16.mxu0 0
        %3040 = vmatpush1.bf16.msra.mxu0 0
        %3041 = vmatprep.subr.bf16.mxu0 0
        %3042 = vmatpush1.bf16.msra.mxu0 0
        %3043 = vmatprep.subr.bf16.mxu0 0
        %3044 = vmatpush1.bf16.msra.mxu0 0
        %3045 = vmatprep.subr.bf16.mxu0 0
        %3046 = vmatpush1.bf16.msra.mxu0 0
        %3047 = vmatprep.subr.bf16.mxu0 0
        %3048 = vmatpush1.bf16.msra.mxu0 0
        %3049 = vmatprep.subr.bf16.mxu0 0
        %3050 = vmatpush1.bf16.msra.mxu0 0
        %3051 = vmatprep.subr.bf16.mxu0 0
        %3052 = vmatpush1.bf16.msra.mxu0 0
        %3053 = vmatprep.mubr.bf16.mxu0 0
        %3054 = vmatmul.mubr.bf16.gmra.mrb[0].mxu0 %v3004
        %v3055 = vpop.f32.mrb[0].mxu0
        %v3056 = vadd.f32 0.0, %v3055
        %v3057 = vpop.f32.mrb[0].mxu0
        %v3058 = vpop.f32.mrb[0].mxu0
        %v3059 = vadd.f32 0.0, %v3058
        %v3060 = vpop.f32.mrb[0].mxu0
        %3061 = vmatprep.mubr.bf16.mxu0 0
        %3062 = vmatmul.mubr.bf16.gmra.mrb[0].mxu0 %v3007
        %v3063 = vpop.f32.mrb[0].mxu0
        %v3064 = vadd.f32 0.0, %v3063
        %v3065 = vpop.f32.mrb[0].mxu0
        %v3066 = vpop.f32.mrb[0].mxu0
        %v3067 = vadd.f32 0.0, %v3066
        %v3068 = vpop.f32.mrb[0].mxu0
        %3069 = vmatprep.mubr.bf16.mxu0 0
        %3070 = vmatmul.mubr.bf16.gmra.mrb[0].mxu0 %v3010
        %v3071 = vpop.f32.mrb[0].mxu0
        %v3072 = vadd.f32 0.0, %v3071
        %v3073 = vpop.f32.mrb[0].mxu0
        %v3074 = vpop.f32.mrb[0].mxu0
        %v3075 = vadd.f32 0.0, %v3074
        %v3076 = vpop.f32.mrb[0].mxu0
        %3077 = vmatprep.mubr.bf16.mxu0 0
        %3078 = vmatmul.mubr.bf16.gmra.mrb[0].mxu0 %v3013
        %v3079 = vpop.f32.mrb[0].mxu0
        %v3080 = vadd.f32 0.0, %v3079
        %v3081 = vpop.f32.mrb[0].mxu0
        %v3082 = vpop.f32.mrb[0].mxu0
        %v3083 = vadd.f32 0.0, %v3082
        %v3084 = vpop.f32.mrb[0].mxu0
        %3085 = vmatprep.mubr.bf16.mxu0 0
        %3086 = vmatmul.mubr.bf16.gmra.mrb[0].mxu0 %v3016
        %v3087 = vpop.f32.mrb[0].mxu0
        %v3088 = vadd.f32 0.0, %v3087
        %v3089 = vpop.f32.mrb[0].mxu0
        %v3090 = vpop.f32.mrb[0].mxu0
        %v3091 = vadd.f32 0.0, %v3090
        %v3092 = vpop.f32.mrb[0].mxu0
        %3093 = vdwg.mxu0
        %v3094 = vadd.f32 %v2956, %v3056
        %v3095 = vadd.f32 %v2957, %v3059
        %v3096 = vadd.f32 %v2958, %v3064
        %v3097 = vadd.f32 %v2959, %v3067
        %v3098 = vadd.f32 %v2960, %v3072
        %v3099 = vadd.f32 %v2961, %v3075
        %v3100 = vadd.f32 %v2962, %v3080
        %v3101 = vadd.f32 %v2963, %v3083
        %v3102 = vadd.f32 %v2964, %v3088
        %v3103 = vadd.f32 %v2965, %v3091
        %v3104 = vld [vmem:[%s399] sm:$0xf]
        %v3105 = vld [vmem:[%s399 + $0x4] sm:$0xf]
        %v3106 = vld [vmem:[%s399 + $0x8] sm:$0xf]
        %v3107 = vld [vmem:[%s399 + $0xc] sm:$0xf]
        %v3108 = vld [vmem:[%s399 + $0x10] sm:$0xf]
        %v3109 = vld [vmem:[%s399 + $0x14] sm:$0xf]
        %v3110 = vld [vmem:[%s399 + $0x18] sm:$0xf]
        %v3111 = vld [vmem:[%s399 + $0x1c] sm:$0xf]
        %v3112 = vld [vmem:[%s399 + $0x20] sm:$0xf]
        %v3113 = vld [vmem:[%s399 + $0x24] sm:$0xf]
        %v3114 = vld [vmem:[%s399 + $0x28] sm:$0x1]
        %s3115 = scalar_lea.vmem %s3, 38
        %v3116 = vld [vmem:[%s3115] sm:$0x3]
        %v3128 = vunpack.c.l.b16 %v3104
        %v3129 = vunpack.c.l.b16 %v3105
        %v3130 = vunpack.c.l.b16 %v3106
        %v3131 = vunpack.c.l.b16 %v3107
        %v3132 = vunpack.c.l.b16 %v3108
        %v3133 = vunpack.c.l.b16 %v3109
        %v3134 = vunpack.c.l.b16 %v3110
        %v3135 = vunpack.c.l.b16 %v3111
        %v3136 = vunpack.c.l.b16 %v3112
        %v3137 = vunpack.c.l.b16 %v3113
        %v3138 = vunpack.c.l.b16 %v3114
        %v3139 = vpack.c.b16 %v3129, %v3128
        %v3140 = vpack.c.b16 %v3131, %v3130
        %v3141 = vpack.c.b16 %v3133, %v3132
        %v3142 = vpack.c.b16 %v3135, %v3134
        %v3143 = vpack.c.b16 %v3137, %v3136
        %v3144 = vpack.c.b16 %v3138, %v3138
        %v3146 = vshrl.u32 %v3139, 16
        %v3148 = vshll.u32 %v3139, 16
        %v3150 = vrot.slane %v3148, 1
        %v3151 = vor.u32 %v3146, %v3150
        %v3153 = vshll.u32 %v3140, 16
        %v3155 = vrot.slane %v3153, 1
        %v3156 = vsel %vm453, %v3151, %v3155
        %v3157 = vshrl.u32 %v3140, 16
        %v3159 = vor.u32 %v3157, %v3155
        %v3161 = vshll.u32 %v3141, 16
        %v3163 = vrot.slane %v3161, 1
        %v3164 = vsel %vm453, %v3159, %v3163
        %v3165 = vshrl.u32 %v3141, 16
        %v3167 = vor.u32 %v3165, %v3163
        %v3169 = vshll.u32 %v3142, 16
        %v3171 = vrot.slane %v3169, 1
        %v3172 = vsel %vm453, %v3167, %v3171
        %v3173 = vshrl.u32 %v3142, 16
        %v3175 = vor.u32 %v3173, %v3171
        %v3177 = vshll.u32 %v3143, 16
        %v3179 = vrot.slane %v3177, 1
        %v3180 = vsel %vm453, %v3175, %v3179
        %v3181 = vshrl.u32 %v3143, 16
        %v3183 = vor.u32 %v3181, %v3179
        %v3185 = vshll.u32 %v3144, 16
        %v3187 = vrot.slane %v3185, 1
        %v3188 = vsel %vm453, %v3183, %v3187
        %v3190 = vsel %vm498, %v3156, 0
        %v3193 = vsel %vm498, %v3164, 0
        %v3196 = vsel %vm498, %v3172, 0
        %v3199 = vsel %vm498, %v3180, 0
        %v3202 = vsel %vm498, %v3188, 0
        %v3205 = vsel %vm514, %v3116, 0
        %3207 = vmatprep.subr.bf16.mxu0 0
        %3208 = vmatpush1.bf16.msra.mxu0 %v3205
        %3209 = vmatprep.subr.bf16.mxu0 0
        %3210 = vmatpush1.bf16.msra.mxu0 0
        %3211 = vmatprep.subr.bf16.mxu0 0
        %3212 = vmatpush1.bf16.msra.mxu0 0
        %3213 = vmatprep.subr.bf16.mxu0 0
        %3214 = vmatpush1.bf16.msra.mxu0 0
        %3215 = vmatprep.subr.bf16.mxu0 0
        %3216 = vmatpush1.bf16.msra.mxu0 0
        %3217 = vmatprep.subr.bf16.mxu0 0
        %3218 = vmatpush1.bf16.msra.mxu0 0
        %3219 = vmatprep.subr.bf16.mxu0 0
        %3220 = vmatpush1.bf16.msra.mxu0 0
        %3221 = vmatprep.subr.bf16.mxu0 0
        %3222 = vmatpush1.bf16.msra.mxu0 0
        %3223 = vmatprep.subr.bf16.mxu0 0
        %3224 = vmatpush1.bf16.msra.mxu0 0
        %3225 = vmatprep.subr.bf16.mxu0 0
        %3226 = vmatpush1.bf16.msra.mxu0 0
        %3227 = vmatprep.subr.bf16.mxu0 0
        %3228 = vmatpush1.bf16.msra.mxu0 0
        %3229 = vmatprep.subr.bf16.mxu0 0
        %3230 = vmatpush1.bf16.msra.mxu0 0
        %3231 = vmatprep.subr.bf16.mxu0 0
        %3232 = vmatpush1.bf16.msra.mxu0 0
        %3233 = vmatprep.subr.bf16.mxu0 0
        %3234 = vmatpush1.bf16.msra.mxu0 0
        %3235 = vmatprep.subr.bf16.mxu0 0
        %3236 = vmatpush1.bf16.msra.mxu0 0
        %3237 = vmatprep.subr.bf16.mxu0 0
        %3238 = vmatpush1.bf16.msra.mxu0 0
        %3239 = vmatprep.mubr.bf16.mxu0 0
        %3240 = vmatmul.mubr.bf16.gmra.mrb[0].mxu0 %v3190
        %v3241 = vpop.f32.mrb[0].mxu0
        %v3242 = vadd.f32 0.0, %v3241
        %v3243 = vpop.f32.mrb[0].mxu0
        %v3244 = vpop.f32.mrb[0].mxu0
        %v3245 = vadd.f32 0.0, %v3244
        %v3246 = vpop.f32.mrb[0].mxu0
        %3247 = vmatprep.mubr.bf16.mxu0 0
        %3248 = vmatmul.mubr.bf16.gmra.mrb[0].mxu0 %v3193
        %v3249 = vpop.f32.mrb[0].mxu0
        %v3250 = vadd.f32 0.0, %v3249
        %v3251 = vpop.f32.mrb[0].mxu0
        %v3252 = vpop.f32.mrb[0].mxu0
        %v3253 = vadd.f32 0.0, %v3252
        %v3254 = vpop.f32.mrb[0].mxu0
        %3255 = vmatprep.mubr.bf16.mxu0 0
        %3256 = vmatmul.mubr.bf16.gmra.mrb[0].mxu0 %v3196
        %v3257 = vpop.f32.mrb[0].mxu0
        %v3258 = vadd.f32 0.0, %v3257
        %v3259 = vpop.f32.mrb[0].mxu0
        %v3260 = vpop.f32.mrb[0].mxu0
        %v3261 = vadd.f32 0.0, %v3260
        %v3262 = vpop.f32.mrb[0].mxu0
        %3263 = vmatprep.mubr.bf16.mxu0 0
        %3264 = vmatmul.mubr.bf16.gmra.mrb[0].mxu0 %v3199
        %v3265 = vpop.f32.mrb[0].mxu0
        %v3266 = vadd.f32 0.0, %v3265
        %v3267 = vpop.f32.mrb[0].mxu0
        %v3268 = vpop.f32.mrb[0].mxu0
        %v3269 = vadd.f32 0.0, %v3268
        %v3270 = vpop.f32.mrb[0].mxu0
        %3271 = vmatprep.mubr.bf16.mxu0 0
        %3272 = vmatmul.mubr.bf16.gmra.mrb[0].mxu0 %v3202
        %v3273 = vpop.f32.mrb[0].mxu0
        %v3274 = vadd.f32 0.0, %v3273
        %v3275 = vpop.f32.mrb[0].mxu0
        %v3276 = vpop.f32.mrb[0].mxu0
        %v3277 = vadd.f32 0.0, %v3276
        %v3278 = vpop.f32.mrb[0].mxu0
        %3279 = vdwg.mxu0
        %v3280 = vadd.f32 %v3094, %v3242
        %v3281 = vadd.f32 %v3095, %v3245
        %v3282 = vadd.f32 %v3096, %v3250
        %v3283 = vadd.f32 %v3097, %v3253
        %v3284 = vadd.f32 %v3098, %v3258
        %v3285 = vadd.f32 %v3099, %v3261
        %v3286 = vadd.f32 %v3100, %v3266
        %v3287 = vadd.f32 %v3101, %v3269
        %v3288 = vadd.f32 %v3102, %v3274
        %v3289 = vadd.f32 %v3103, %v3277
        %v3290 = vld [vmem:[%s399] sm:$0xe]
        %s3291 = scalar_lea.vmem %s3, 40
        %v3292 = vld [vmem:[%s3291] sm:$0x3]
        %v3294 = vunpack.c.l.b16 %v3290
        %v3295 = vpack.c.b16 %v3129, %v3294
        %v3296 = vrot.slane %v3295, 1
        %v3297 = vrot.slane %v3140, 1
        %v3298 = vsel %vm683, %v3296, %v3297
        %v3299 = vrot.slane %v3141, 1
        %v3300 = vsel %vm683, %v3297, %v3299
        %v3301 = vrot.slane %v3142, 1
        %v3302 = vsel %vm683, %v3299, %v3301
        %v3303 = vrot.slane %v3143, 1
        %v3304 = vsel %vm683, %v3301, %v3303
        %v3305 = vrot.slane %v3144, 1
        %v3306 = vsel %vm683, %v3303, %v3305
        %v3308 = vsel %vm498, %v3298, 0
        %v3311 = vsel %vm498, %v3300, 0
        %v3314 = vsel %vm498, %v3302, 0
        %v3317 = vsel %vm498, %v3304, 0
        %v3320 = vsel %vm498, %v3306, 0
        %v3323 = vsel %vm514, %v3292, 0
        %3325 = vmatprep.subr.bf16.mxu0 0
        %3326 = vmatpush1.bf16.msra.mxu0 %v3323
        %3327 = vmatprep.subr.bf16.mxu0 0
        %3328 = vmatpush1.bf16.msra.mxu0 0
        %3329 = vmatprep.subr.bf16.mxu0 0
        %3330 = vmatpush1.bf16.msra.mxu0 0
        %3331 = vmatprep.subr.bf16.mxu0 0
        %3332 = vmatpush1.bf16.msra.mxu0 0
        %3333 = vmatprep.subr.bf16.mxu0 0
        %3334 = vmatpush1.bf16.msra.mxu0 0
        %3335 = vmatprep.subr.bf16.mxu0 0
        %3336 = vmatpush1.bf16.msra.mxu0 0
        %3337 = vmatprep.subr.bf16.mxu0 0
        %3338 = vmatpush1.bf16.msra.mxu0 0
        %3339 = vmatprep.subr.bf16.mxu0 0
        %3340 = vmatpush1.bf16.msra.mxu0 0
        %3341 = vmatprep.subr.bf16.mxu0 0
        %3342 = vmatpush1.bf16.msra.mxu0 0
        %3343 = vmatprep.subr.bf16.mxu0 0
        %3344 = vmatpush1.bf16.msra.mxu0 0
        %3345 = vmatprep.subr.bf16.mxu0 0
        %3346 = vmatpush1.bf16.msra.mxu0 0
        %3347 = vmatprep.subr.bf16.mxu0 0
        %3348 = vmatpush1.bf16.msra.mxu0 0
        %3349 = vmatprep.subr.bf16.mxu0 0
        %3350 = vmatpush1.bf16.msra.mxu0 0
        %3351 = vmatprep.subr.bf16.mxu0 0
        %3352 = vmatpush1.bf16.msra.mxu0 0
        %3353 = vmatprep.subr.bf16.mxu0 0
        %3354 = vmatpush1.bf16.msra.mxu0 0
        %3355 = vmatprep.subr.bf16.mxu0 0
        %3356 = vmatpush1.bf16.msra.mxu0 0
        %3357 = vmatprep.mubr.bf16.mxu0 0
        %3358 = vmatmul.mubr.bf16.gmra.mrb[0].mxu0 %v3308
        %v3359 = vpop.f32.mrb[0].mxu0
        %v3360 = vadd.f32 0.0, %v3359
        %v3361 = vpop.f32.mrb[0].mxu0
        %v3362 = vpop.f32.mrb[0].mxu0
        %v3363 = vadd.f32 0.0, %v3362
        %v3364 = vpop.f32.mrb[0].mxu0
        %3365 = vmatprep.mubr.bf16.mxu0 0
        %3366 = vmatmul.mubr.bf16.gmra.mrb[0].mxu0 %v3311
        %v3367 = vpop.f32.mrb[0].mxu0
        %v3368 = vadd.f32 0.0, %v3367
        %v3369 = vpop.f32.mrb[0].mxu0
        %v3370 = vpop.f32.mrb[0].mxu0
        %v3371 = vadd.f32 0.0, %v3370
        %v3372 = vpop.f32.mrb[0].mxu0
        %3373 = vmatprep.mubr.bf16.mxu0 0
        %3374 = vmatmul.mubr.bf16.gmra.mrb[0].mxu0 %v3314
        %v3375 = vpop.f32.mrb[0].mxu0
        %v3376 = vadd.f32 0.0, %v3375
        %v3377 = vpop.f32.mrb[0].mxu0
        %v3378 = vpop.f32.mrb[0].mxu0
        %v3379 = vadd.f32 0.0, %v3378
        %v3380 = vpop.f32.mrb[0].mxu0
        %3381 = vmatprep.mubr.bf16.mxu0 0
        %3382 = vmatmul.mubr.bf16.gmra.mrb[0].mxu0 %v3317
        %v3383 = vpop.f32.mrb[0].mxu0
        %v3384 = vadd.f32 0.0, %v3383
        %v3385 = vpop.f32.mrb[0].mxu0
        %v3386 = vpop.f32.mrb[0].mxu0
        %v3387 = vadd.f32 0.0, %v3386
        %v3388 = vpop.f32.mrb[0].mxu0
        %3389 = vmatprep.mubr.bf16.mxu0 0
        %3390 = vmatmul.mubr.bf16.gmra.mrb[0].mxu0 %v3320
        %v3391 = vpop.f32.mrb[0].mxu0
        %v3392 = vadd.f32 0.0, %v3391
        %v3393 = vpop.f32.mrb[0].mxu0
        %v3394 = vpop.f32.mrb[0].mxu0
        %v3395 = vadd.f32 0.0, %v3394
        %v3396 = vpop.f32.mrb[0].mxu0
        %3397 = vdwg.mxu0
        %v3398 = vadd.f32 %v3280, %v3360
        %v3399 = vadd.f32 %v3281, %v3363
        %v3400 = vadd.f32 %v3282, %v3368
        %v3401 = vadd.f32 %v3283, %v3371
        %v3402 = vadd.f32 %v3284, %v3376
        %v3403 = vadd.f32 %v3285, %v3379
        %v3404 = vadd.f32 %v3286, %v3384
        %v3405 = vadd.f32 %v3287, %v3387
        %v3406 = vadd.f32 %v3288, %v3392
        %v3407 = vadd.f32 %v3289, %v3395
        %v3408 = vld [vmem:[%s399 + $0x4] sm:$0xe]
        %v3409 = vld [vmem:[%s399 + $0x8] sm:$0xf]
        %v3410 = vld [vmem:[%s399 + $0xc] sm:$0xf]
        %v3411 = vld [vmem:[%s399 + $0x10] sm:$0xf]
        %v3412 = vld [vmem:[%s399 + $0x14] sm:$0xf]
        %v3413 = vld [vmem:[%s399 + $0x18] sm:$0xf]
        %v3414 = vld [vmem:[%s399 + $0x1c] sm:$0xf]
        %v3415 = vld [vmem:[%s399 + $0x20] sm:$0xf]
        %v3416 = vld [vmem:[%s399 + $0x24] sm:$0xf]
        %v3417 = vld [vmem:[%s399 + $0x28] sm:$0xf]
        %v3418 = vld [vmem:[%s399 + $0x2c] sm:$0x1]
        %s3419 = scalar_lea.vmem %s3, 42
        %v3420 = vld [vmem:[%s3419] sm:$0x3]
        %v3432 = vunpack.c.l.b16 %v3408
        %v3433 = vunpack.c.l.b16 %v3409
        %v3434 = vunpack.c.l.b16 %v3410
        %v3435 = vunpack.c.l.b16 %v3411
        %v3436 = vunpack.c.l.b16 %v3412
        %v3437 = vunpack.c.l.b16 %v3413
        %v3438 = vunpack.c.l.b16 %v3414
        %v3439 = vunpack.c.l.b16 %v3415
        %v3440 = vunpack.c.l.b16 %v3416
        %v3441 = vunpack.c.l.b16 %v3417
        %v3442 = vunpack.c.l.b16 %v3418
        %v3443 = vpack.c.b16 %v3433, %v3432
        %v3444 = vpack.c.b16 %v3435, %v3434
        %v3445 = vpack.c.b16 %v3437, %v3436
        %v3446 = vpack.c.b16 %v3439, %v3438
        %v3447 = vpack.c.b16 %v3441, %v3440
        %v3448 = vpack.c.b16 %v3442, %v3442
        %v3449 = vrot.slane %v3443, 1
        %v3450 = vrot.slane %v3444, 1
        %v3451 = vsel %vm683, %v3449, %v3450
        %v3452 = vrot.slane %v3445, 1
        %v3453 = vsel %vm683, %v3450, %v3452
        %v3454 = vrot.slane %v3446, 1
        %v3455 = vsel %vm683, %v3452, %v3454
        %v3456 = vrot.slane %v3447, 1
        %v3457 = vsel %vm683, %v3454, %v3456
        %v3458 = vrot.slane %v3448, 1
        %v3459 = vsel %vm683, %v3456, %v3458
        %v3461 = vsel %vm498, %v3451, 0
        %v3464 = vsel %vm498, %v3453, 0
        %v3467 = vsel %vm498, %v3455, 0
        %v3470 = vsel %vm498, %v3457, 0
        %v3473 = vsel %vm498, %v3459, 0
        %v3476 = vsel %vm514, %v3420, 0
        %3478 = vmatprep.subr.bf16.mxu0 0
        %3479 = vmatpush1.bf16.msra.mxu0 %v3476
        %3480 = vmatprep.subr.bf16.mxu0 0
        %3481 = vmatpush1.bf16.msra.mxu0 0
        %3482 = vmatprep.subr.bf16.mxu0 0
        %3483 = vmatpush1.bf16.msra.mxu0 0
        %3484 = vmatprep.subr.bf16.mxu0 0
        %3485 = vmatpush1.bf16.msra.mxu0 0
        %3486 = vmatprep.subr.bf16.mxu0 0
        %3487 = vmatpush1.bf16.msra.mxu0 0
        %3488 = vmatprep.subr.bf16.mxu0 0
        %3489 = vmatpush1.bf16.msra.mxu0 0
        %3490 = vmatprep.subr.bf16.mxu0 0
        %3491 = vmatpush1.bf16.msra.mxu0 0
        %3492 = vmatprep.subr.bf16.mxu0 0
        %3493 = vmatpush1.bf16.msra.mxu0 0
        %3494 = vmatprep.subr.bf16.mxu0 0
        %3495 = vmatpush1.bf16.msra.mxu0 0
        %3496 = vmatprep.subr.bf16.mxu0 0
        %3497 = vmatpush1.bf16.msra.mxu0 0
        %3498 = vmatprep.subr.bf16.mxu0 0
        %3499 = vmatpush1.bf16.msra.mxu0 0
        %3500 = vmatprep.subr.bf16.mxu0 0
        %3501 = vmatpush1.bf16.msra.mxu0 0
        %3502 = vmatprep.subr.bf16.mxu0 0
        %3503 = vmatpush1.bf16.msra.mxu0 0
        %3504 = vmatprep.subr.bf16.mxu0 0
        %3505 = vmatpush1.bf16.msra.mxu0 0
        %3506 = vmatprep.subr.bf16.mxu0 0
        %3507 = vmatpush1.bf16.msra.mxu0 0
        %3508 = vmatprep.subr.bf16.mxu0 0
        %3509 = vmatpush1.bf16.msra.mxu0 0
        %3510 = vmatprep.mubr.bf16.mxu0 0
        %3511 = vmatmul.mubr.bf16.gmra.mrb[0].mxu0 %v3461
        %v3512 = vpop.f32.mrb[0].mxu0
        %v3513 = vadd.f32 0.0, %v3512
        %v3514 = vpop.f32.mrb[0].mxu0
        %v3515 = vpop.f32.mrb[0].mxu0
        %v3516 = vadd.f32 0.0, %v3515
        %v3517 = vpop.f32.mrb[0].mxu0
        %3518 = vmatprep.mubr.bf16.mxu0 0
        %3519 = vmatmul.mubr.bf16.gmra.mrb[0].mxu0 %v3464
        %v3520 = vpop.f32.mrb[0].mxu0
        %v3521 = vadd.f32 0.0, %v3520
        %v3522 = vpop.f32.mrb[0].mxu0
        %v3523 = vpop.f32.mrb[0].mxu0
        %v3524 = vadd.f32 0.0, %v3523
        %v3525 = vpop.f32.mrb[0].mxu0
        %3526 = vmatprep.mubr.bf16.mxu0 0
        %3527 = vmatmul.mubr.bf16.gmra.mrb[0].mxu0 %v3467
        %v3528 = vpop.f32.mrb[0].mxu0
        %v3529 = vadd.f32 0.0, %v3528
        %v3530 = vpop.f32.mrb[0].mxu0
        %v3531 = vpop.f32.mrb[0].mxu0
        %v3532 = vadd.f32 0.0, %v3531
        %v3533 = vpop.f32.mrb[0].mxu0
        %3534 = vmatprep.mubr.bf16.mxu0 0
        %3535 = vmatmul.mubr.bf16.gmra.mrb[0].mxu0 %v3470
        %v3536 = vpop.f32.mrb[0].mxu0
        %v3537 = vadd.f32 0.0, %v3536
        %v3538 = vpop.f32.mrb[0].mxu0
        %v3539 = vpop.f32.mrb[0].mxu0
        %v3540 = vadd.f32 0.0, %v3539
        %v3541 = vpop.f32.mrb[0].mxu0
        %3542 = vmatprep.mubr.bf16.mxu0 0
        %3543 = vmatmul.mubr.bf16.gmra.mrb[0].mxu0 %v3473
        %v3544 = vpop.f32.mrb[0].mxu0
        %v3545 = vadd.f32 0.0, %v3544
        %v3546 = vpop.f32.mrb[0].mxu0
        %v3547 = vpop.f32.mrb[0].mxu0
        %v3548 = vadd.f32 0.0, %v3547
        %v3549 = vpop.f32.mrb[0].mxu0
        %3550 = vdwg.mxu0
        %v3551 = vadd.f32 %v3398, %v3513
        %v3552 = vadd.f32 %v3399, %v3516
        %v3553 = vadd.f32 %v3400, %v3521
        %v3554 = vadd.f32 %v3401, %v3524
        %v3555 = vadd.f32 %v3402, %v3529
        %v3556 = vadd.f32 %v3403, %v3532
        %v3557 = vadd.f32 %v3404, %v3537
        %v3558 = vadd.f32 %v3405, %v3540
        %v3559 = vadd.f32 %v3406, %v3545
        %v3560 = vadd.f32 %v3407, %v3548
        %v3561 = vld [vmem:[%s399 + $0x2c] sm:$0x3]
        %s3562 = scalar_lea.vmem %s3, 44
        %v3563 = vld [vmem:[%s3562] sm:$0x3]
        %v3565 = vunpack.c.l.b16 %v3561
        %v3566 = vpack.c.b16 %v3565, %v3565
        %v3568 = vshrl.u32 %v3443, 16
        %v3570 = vrot.slane %v3568, 1
        %v3571 = vshll.u32 %v3443, 16
        %v3573 = vrot.slane %v3571, 2
        %v3574 = vor.u32 %v3570, %v3573
        %v3576 = vshrl.u32 %v3444, 16
        %v3578 = vrot.slane %v3576, 1
        %v3579 = vshll.u32 %v3444, 16
        %v3581 = vrot.slane %v3579, 2
        %v3582 = vor.u32 %v3578, %v3581
        %v3583 = vsel %vm955, %v3574, %v3582
        %v3585 = vshrl.u32 %v3445, 16
        %v3587 = vrot.slane %v3585, 1
        %v3588 = vshll.u32 %v3445, 16
        %v3590 = vrot.slane %v3588, 2
        %v3591 = vor.u32 %v3587, %v3590
        %v3592 = vsel %vm955, %v3582, %v3591
        %v3594 = vshrl.u32 %v3446, 16
        %v3596 = vrot.slane %v3594, 1
        %v3597 = vshll.u32 %v3446, 16
        %v3599 = vrot.slane %v3597, 2
        %v3600 = vor.u32 %v3596, %v3599
        %v3601 = vsel %vm955, %v3591, %v3600
        %v3603 = vshrl.u32 %v3447, 16
        %v3605 = vrot.slane %v3603, 1
        %v3606 = vshll.u32 %v3447, 16
        %v3608 = vrot.slane %v3606, 2
        %v3609 = vor.u32 %v3605, %v3608
        %v3610 = vsel %vm955, %v3600, %v3609
        %v3612 = vshrl.u32 %v3566, 16
        %v3614 = vrot.slane %v3612, 1
        %v3615 = vshll.u32 %v3566, 16
        %v3617 = vrot.slane %v3615, 2
        %v3618 = vor.u32 %v3614, %v3617
        %v3619 = vsel %vm955, %v3609, %v3618
        %v3621 = vsel %vm498, %v3583, 0
        %v3624 = vsel %vm498, %v3592, 0
        %v3627 = vsel %vm498, %v3601, 0
        %v3630 = vsel %vm498, %v3610, 0
        %v3633 = vsel %vm498, %v3619, 0
        %v3636 = vsel %vm514, %v3563, 0
        %3638 = vmatprep.subr.bf16.mxu0 0
        %3639 = vmatpush1.bf16.msra.mxu0 %v3636
        %3640 = vmatprep.subr.bf16.mxu0 0
        %3641 = vmatpush1.bf16.msra.mxu0 0
        %3642 = vmatprep.subr.bf16.mxu0 0
        %3643 = vmatpush1.bf16.msra.mxu0 0
        %3644 = vmatprep.subr.bf16.mxu0 0
        %3645 = vmatpush1.bf16.msra.mxu0 0
        %3646 = vmatprep.subr.bf16.mxu0 0
        %3647 = vmatpush1.bf16.msra.mxu0 0
        %3648 = vmatprep.subr.bf16.mxu0 0
        %3649 = vmatpush1.bf16.msra.mxu0 0
        %3650 = vmatprep.subr.bf16.mxu0 0
        %3651 = vmatpush1.bf16.msra.mxu0 0
        %3652 = vmatprep.subr.bf16.mxu0 0
        %3653 = vmatpush1.bf16.msra.mxu0 0
        %3654 = vmatprep.subr.bf16.mxu0 0
        %3655 = vmatpush1.bf16.msra.mxu0 0
        %3656 = vmatprep.subr.bf16.mxu0 0
        %3657 = vmatpush1.bf16.msra.mxu0 0
        %3658 = vmatprep.subr.bf16.mxu0 0
        %3659 = vmatpush1.bf16.msra.mxu0 0
        %3660 = vmatprep.subr.bf16.mxu0 0
        %3661 = vmatpush1.bf16.msra.mxu0 0
        %3662 = vmatprep.subr.bf16.mxu0 0
        %3663 = vmatpush1.bf16.msra.mxu0 0
        %3664 = vmatprep.subr.bf16.mxu0 0
        %3665 = vmatpush1.bf16.msra.mxu0 0
        %3666 = vmatprep.subr.bf16.mxu0 0
        %3667 = vmatpush1.bf16.msra.mxu0 0
        %3668 = vmatprep.subr.bf16.mxu0 0
        %3669 = vmatpush1.bf16.msra.mxu0 0
        %3670 = vmatprep.mubr.bf16.mxu0 0
        %3671 = vmatmul.mubr.bf16.gmra.mrb[0].mxu0 %v3621
        %v3672 = vpop.f32.mrb[0].mxu0
        %v3673 = vadd.f32 0.0, %v3672
        %v3674 = vpop.f32.mrb[0].mxu0
        %v3675 = vpop.f32.mrb[0].mxu0
        %v3676 = vadd.f32 0.0, %v3675
        %v3677 = vpop.f32.mrb[0].mxu0
        %3678 = vmatprep.mubr.bf16.mxu0 0
        %3679 = vmatmul.mubr.bf16.gmra.mrb[0].mxu0 %v3624
        %v3680 = vpop.f32.mrb[0].mxu0
        %v3681 = vadd.f32 0.0, %v3680
        %v3682 = vpop.f32.mrb[0].mxu0
        %v3683 = vpop.f32.mrb[0].mxu0
        %v3684 = vadd.f32 0.0, %v3683
        %v3685 = vpop.f32.mrb[0].mxu0
        %3686 = vmatprep.mubr.bf16.mxu0 0
        %3687 = vmatmul.mubr.bf16.gmra.mrb[0].mxu0 %v3627
        %v3688 = vpop.f32.mrb[0].mxu0
        %v3689 = vadd.f32 0.0, %v3688
        %v3690 = vpop.f32.mrb[0].mxu0
        %v3691 = vpop.f32.mrb[0].mxu0
        %v3692 = vadd.f32 0.0, %v3691
        %v3693 = vpop.f32.mrb[0].mxu0
        %3694 = vmatprep.mubr.bf16.mxu0 0
        %3695 = vmatmul.mubr.bf16.gmra.mrb[0].mxu0 %v3630
        %v3696 = vpop.f32.mrb[0].mxu0
        %v3697 = vadd.f32 0.0, %v3696
        %v3698 = vpop.f32.mrb[0].mxu0
        %v3699 = vpop.f32.mrb[0].mxu0
        %v3700 = vadd.f32 0.0, %v3699
        %v3701 = vpop.f32.mrb[0].mxu0
        %3702 = vmatprep.mubr.bf16.mxu0 0
        %3703 = vmatmul.mubr.bf16.gmra.mrb[0].mxu0 %v3633
        %v3704 = vpop.f32.mrb[0].mxu0
        %v3705 = vadd.f32 0.0, %v3704
        %v3706 = vpop.f32.mrb[0].mxu0
        %v3707 = vpop.f32.mrb[0].mxu0
        %v3708 = vadd.f32 0.0, %v3707
        %v3709 = vpop.f32.mrb[0].mxu0
        %3710 = vdwg.mxu0
        %v3711 = vadd.f32 %v3551, %v3673
        %v3712 = vadd.f32 %v3552, %v3676
        %v3713 = vadd.f32 %v3553, %v3681
        %v3714 = vadd.f32 %v3554, %v3684
        %v3715 = vadd.f32 %v3555, %v3689
        %v3716 = vadd.f32 %v3556, %v3692
        %v3717 = vadd.f32 %v3557, %v3697
        %v3718 = vadd.f32 %v3558, %v3700
        %v3719 = vadd.f32 %v3559, %v3705
        %v3720 = vadd.f32 %v3560, %v3708
        %v3721 = vld [vmem:[%s399 + $0x4] sm:$0xc]
        %s3722 = scalar_lea.vmem %s3, 46
        %v3723 = vld [vmem:[%s3722] sm:$0x3]
        %v3725 = vunpack.c.l.b16 %v3721
        %v3726 = vpack.c.b16 %v3433, %v3725
        %v3727 = vrot.slane %v3726, 2
        %v3728 = vrot.slane %v3444, 2
        %v3729 = vsel %vm1116, %v3727, %v3728
        %v3730 = vrot.slane %v3445, 2
        %v3731 = vsel %vm1116, %v3728, %v3730
        %v3732 = vrot.slane %v3446, 2
        %v3733 = vsel %vm1116, %v3730, %v3732
        %v3734 = vrot.slane %v3447, 2
        %v3735 = vsel %vm1116, %v3732, %v3734
        %v3736 = vrot.slane %v3566, 2
        %v3737 = vsel %vm1116, %v3734, %v3736
        %v3739 = vsel %vm498, %v3729, 0
        %v3742 = vsel %vm498, %v3731, 0
        %v3745 = vsel %vm498, %v3733, 0
        %v3748 = vsel %vm498, %v3735, 0
        %v3751 = vsel %vm498, %v3737, 0
        %v3754 = vsel %vm514, %v3723, 0
        %3756 = vmatprep.subr.bf16.mxu0 0
        %3757 = vmatpush1.bf16.msra.mxu0 %v3754
        %3758 = vmatprep.subr.bf16.mxu0 0
        %3759 = vmatpush1.bf16.msra.mxu0 0
        %3760 = vmatprep.subr.bf16.mxu0 0
        %3761 = vmatpush1.bf16.msra.mxu0 0
        %3762 = vmatprep.subr.bf16.mxu0 0
        %3763 = vmatpush1.bf16.msra.mxu0 0
        %3764 = vmatprep.subr.bf16.mxu0 0
        %3765 = vmatpush1.bf16.msra.mxu0 0
        %3766 = vmatprep.subr.bf16.mxu0 0
        %3767 = vmatpush1.bf16.msra.mxu0 0
        %3768 = vmatprep.subr.bf16.mxu0 0
        %3769 = vmatpush1.bf16.msra.mxu0 0
        %3770 = vmatprep.subr.bf16.mxu0 0
        %3771 = vmatpush1.bf16.msra.mxu0 0
        %3772 = vmatprep.subr.bf16.mxu0 0
        %3773 = vmatpush1.bf16.msra.mxu0 0
        %3774 = vmatprep.subr.bf16.mxu0 0
        %3775 = vmatpush1.bf16.msra.mxu0 0
        %3776 = vmatprep.subr.bf16.mxu0 0
        %3777 = vmatpush1.bf16.msra.mxu0 0
        %3778 = vmatprep.subr.bf16.mxu0 0
        %3779 = vmatpush1.bf16.msra.mxu0 0
        %3780 = vmatprep.subr.bf16.mxu0 0
        %3781 = vmatpush1.bf16.msra.mxu0 0
        %3782 = vmatprep.subr.bf16.mxu0 0
        %3783 = vmatpush1.bf16.msra.mxu0 0
        %3784 = vmatprep.subr.bf16.mxu0 0
        %3785 = vmatpush1.bf16.msra.mxu0 0
        %3786 = vmatprep.subr.bf16.mxu0 0
        %3787 = vmatpush1.bf16.msra.mxu0 0
        %3788 = vmatprep.mubr.bf16.mxu0 0
        %3789 = vmatmul.mubr.bf16.gmra.mrb[0].mxu0 %v3739
        %v3790 = vpop.f32.mrb[0].mxu0
        %v3791 = vadd.f32 0.0, %v3790
        %v3792 = vpop.f32.mrb[0].mxu0
        %v3793 = vpop.f32.mrb[0].mxu0
        %v3794 = vadd.f32 0.0, %v3793
        %v3795 = vpop.f32.mrb[0].mxu0
        %3796 = vmatprep.mubr.bf16.mxu0 0
        %3797 = vmatmul.mubr.bf16.gmra.mrb[0].mxu0 %v3742
        %v3798 = vpop.f32.mrb[0].mxu0
        %v3799 = vadd.f32 0.0, %v3798
        %v3800 = vpop.f32.mrb[0].mxu0
        %v3801 = vpop.f32.mrb[0].mxu0
        %v3802 = vadd.f32 0.0, %v3801
        %v3803 = vpop.f32.mrb[0].mxu0
        %3804 = vmatprep.mubr.bf16.mxu0 0
        %3805 = vmatmul.mubr.bf16.gmra.mrb[0].mxu0 %v3745
        %v3806 = vpop.f32.mrb[0].mxu0
        %v3807 = vadd.f32 0.0, %v3806
        %v3808 = vpop.f32.mrb[0].mxu0
        %v3809 = vpop.f32.mrb[0].mxu0
        %v3810 = vadd.f32 0.0, %v3809
        %v3811 = vpop.f32.mrb[0].mxu0
        %3812 = vmatprep.mubr.bf16.mxu0 0
        %3813 = vmatmul.mubr.bf16.gmra.mrb[0].mxu0 %v3748
        %v3814 = vpop.f32.mrb[0].mxu0
        %v3815 = vadd.f32 0.0, %v3814
        %v3816 = vpop.f32.mrb[0].mxu0
        %v3817 = vpop.f32.mrb[0].mxu0
        %v3818 = vadd.f32 0.0, %v3817
        %v3819 = vpop.f32.mrb[0].mxu0
        %3820 = vmatprep.mubr.bf16.mxu0 0
        %3821 = vmatmul.mubr.bf16.gmra.mrb[0].mxu0 %v3751
        %v3822 = vpop.f32.mrb[0].mxu0
        %v3823 = vadd.f32 0.0, %v3822
        %v3824 = vpop.f32.mrb[0].mxu0
        %v3825 = vpop.f32.mrb[0].mxu0
        %v3826 = vadd.f32 0.0, %v3825
        %v3827 = vpop.f32.mrb[0].mxu0
        %3828 = vdwg.mxu0
        %v3829 = vadd.f32 %v3711, %v3791
        %v3830 = vadd.f32 %v3712, %v3794
        %v3831 = vadd.f32 %v3713, %v3799
        %v3832 = vadd.f32 %v3714, %v3802
        %v3833 = vadd.f32 %v3715, %v3807
        %v3834 = vadd.f32 %v3716, %v3810
        %v3835 = vadd.f32 %v3717, %v3815
        %v3836 = vadd.f32 %v3718, %v3818
        %v3837 = vadd.f32 %v3719, %v3823
        %v3838 = vadd.f32 %v3720, %v3826
        %v3839 = vld [vmem:[%s399 + $0x8] sm:$0xc]
        %v3840 = vld [vmem:[%s399 + $0xc] sm:$0xf]
        %v3841 = vld [vmem:[%s399 + $0x10] sm:$0xf]
        %v3842 = vld [vmem:[%s399 + $0x14] sm:$0xf]
        %v3843 = vld [vmem:[%s399 + $0x18] sm:$0xf]
        %v3844 = vld [vmem:[%s399 + $0x1c] sm:$0xf]
        %v3845 = vld [vmem:[%s399 + $0x20] sm:$0xf]
        %v3846 = vld [vmem:[%s399 + $0x24] sm:$0xf]
        %v3847 = vld [vmem:[%s399 + $0x28] sm:$0xf]
        %v3848 = vld [vmem:[%s399 + $0x2c] sm:$0xf]
        %v3849 = vld [vmem:[%s399 + $0x30] sm:$0x3]
        %s3850 = scalar_lea.vmem %s3, 48
        %v3851 = vld [vmem:[%s3850] sm:$0x3]
        %v3863 = vunpack.c.l.b16 %v3839
        %v3864 = vunpack.c.l.b16 %v3840
        %v3865 = vunpack.c.l.b16 %v3841
        %v3866 = vunpack.c.l.b16 %v3842
        %v3867 = vunpack.c.l.b16 %v3843
        %v3868 = vunpack.c.l.b16 %v3844
        %v3869 = vunpack.c.l.b16 %v3845
        %v3870 = vunpack.c.l.b16 %v3846
        %v3871 = vunpack.c.l.b16 %v3847
        %v3872 = vunpack.c.l.b16 %v3848
        %v3873 = vunpack.c.l.b16 %v3849
        %v3874 = vpack.c.b16 %v3864, %v3863
        %v3875 = vpack.c.b16 %v3866, %v3865
        %v3876 = vpack.c.b16 %v3868, %v3867
        %v3877 = vpack.c.b16 %v3870, %v3869
        %v3878 = vpack.c.b16 %v3872, %v3871
        %v3879 = vpack.c.b16 %v3873, %v3873
        %v3880 = vrot.slane %v3874, 2
        %v3881 = vrot.slane %v3875, 2
        %v3882 = vsel %vm1116, %v3880, %v3881
        %v3883 = vrot.slane %v3876, 2
        %v3884 = vsel %vm1116, %v3881, %v3883
        %v3885 = vrot.slane %v3877, 2
        %v3886 = vsel %vm1116, %v3883, %v3885
        %v3887 = vrot.slane %v3878, 2
        %v3888 = vsel %vm1116, %v3885, %v3887
        %v3889 = vrot.slane %v3879, 2
        %v3890 = vsel %vm1116, %v3887, %v3889
        %v3892 = vsel %vm498, %v3882, 0
        %v3895 = vsel %vm498, %v3884, 0
        %v3898 = vsel %vm498, %v3886, 0
        %v3901 = vsel %vm498, %v3888, 0
        %v3904 = vsel %vm498, %v3890, 0
        %v3907 = vsel %vm514, %v3851, 0
        %3909 = vmatprep.subr.bf16.mxu0 0
        %3910 = vmatpush1.bf16.msra.mxu0 %v3907
        %3911 = vmatprep.subr.bf16.mxu0 0
        %3912 = vmatpush1.bf16.msra.mxu0 0
        %3913 = vmatprep.subr.bf16.mxu0 0
        %3914 = vmatpush1.bf16.msra.mxu0 0
        %3915 = vmatprep.subr.bf16.mxu0 0
        %3916 = vmatpush1.bf16.msra.mxu0 0
        %3917 = vmatprep.subr.bf16.mxu0 0
        %3918 = vmatpush1.bf16.msra.mxu0 0
        %3919 = vmatprep.subr.bf16.mxu0 0
        %3920 = vmatpush1.bf16.msra.mxu0 0
        %3921 = vmatprep.subr.bf16.mxu0 0
        %3922 = vmatpush1.bf16.msra.mxu0 0
        %3923 = vmatprep.subr.bf16.mxu0 0
        %3924 = vmatpush1.bf16.msra.mxu0 0
        %3925 = vmatprep.subr.bf16.mxu0 0
        %3926 = vmatpush1.bf16.msra.mxu0 0
        %3927 = vmatprep.subr.bf16.mxu0 0
        %3928 = vmatpush1.bf16.msra.mxu0 0
        %3929 = vmatprep.subr.bf16.mxu0 0
        %3930 = vmatpush1.bf16.msra.mxu0 0
        %3931 = vmatprep.subr.bf16.mxu0 0
        %3932 = vmatpush1.bf16.msra.mxu0 0
        %3933 = vmatprep.subr.bf16.mxu0 0
        %3934 = vmatpush1.bf16.msra.mxu0 0
        %3935 = vmatprep.subr.bf16.mxu0 0
        %3936 = vmatpush1.bf16.msra.mxu0 0
        %3937 = vmatprep.subr.bf16.mxu0 0
        %3938 = vmatpush1.bf16.msra.mxu0 0
        %3939 = vmatprep.subr.bf16.mxu0 0
        %3940 = vmatpush1.bf16.msra.mxu0 0
        %3941 = vmatprep.mubr.bf16.mxu0 0
        %3942 = vmatmul.mubr.bf16.gmra.mrb[0].mxu0 %v3892
        %v3943 = vpop.f32.mrb[0].mxu0
        %v3944 = vadd.f32 0.0, %v3943
        %v3945 = vpop.f32.mrb[0].mxu0
        %v3946 = vpop.f32.mrb[0].mxu0
        %v3947 = vadd.f32 0.0, %v3946
        %v3948 = vpop.f32.mrb[0].mxu0
        %3949 = vmatprep.mubr.bf16.mxu0 0
        %3950 = vmatmul.mubr.bf16.gmra.mrb[0].mxu0 %v3895
        %v3951 = vpop.f32.mrb[0].mxu0
        %v3952 = vadd.f32 0.0, %v3951
        %v3953 = vpop.f32.mrb[0].mxu0
        %v3954 = vpop.f32.mrb[0].mxu0
        %v3955 = vadd.f32 0.0, %v3954
        %v3956 = vpop.f32.mrb[0].mxu0
        %3957 = vmatprep.mubr.bf16.mxu0 0
        %3958 = vmatmul.mubr.bf16.gmra.mrb[0].mxu0 %v3898
        %v3959 = vpop.f32.mrb[0].mxu0
        %v3960 = vadd.f32 0.0, %v3959
        %v3961 = vpop.f32.mrb[0].mxu0
        %v3962 = vpop.f32.mrb[0].mxu0
        %v3963 = vadd.f32 0.0, %v3962
        %v3964 = vpop.f32.mrb[0].mxu0
        %3965 = vmatprep.mubr.bf16.mxu0 0
        %3966 = vmatmul.mubr.bf16.gmra.mrb[0].mxu0 %v3901
        %v3967 = vpop.f32.mrb[0].mxu0
        %v3968 = vadd.f32 0.0, %v3967
        %v3969 = vpop.f32.mrb[0].mxu0
        %v3970 = vpop.f32.mrb[0].mxu0
        %v3971 = vadd.f32 0.0, %v3970
        %v3972 = vpop.f32.mrb[0].mxu0
        %3973 = vmatprep.mubr.bf16.mxu0 0
        %3974 = vmatmul.mubr.bf16.gmra.mrb[0].mxu0 %v3904
        %v3975 = vpop.f32.mrb[0].mxu0
        %v3976 = vadd.f32 0.0, %v3975
        %v3977 = vpop.f32.mrb[0].mxu0
        %v3978 = vpop.f32.mrb[0].mxu0
        %v3979 = vadd.f32 0.0, %v3978
        %v3980 = vpop.f32.mrb[0].mxu0
        %3981 = vdwg.mxu0
        %v3982 = vadd.f32 %v3829, %v3944
        %v3983 = vadd.f32 %v3830, %v3947
        %v3984 = vadd.f32 %v3831, %v3952
        %v3985 = vadd.f32 %v3832, %v3955
        %v3986 = vadd.f32 %v3833, %v3960
        %v3987 = vadd.f32 %v3834, %v3963
        %v3988 = vadd.f32 %v3835, %v3968
        %v3989 = vadd.f32 %v3836, %v3971
        %v3990 = vadd.f32 %v3837, %v3976
        %v3991 = vadd.f32 %v3838, %v3979
        %v3992 = vld [vmem:[%s399 + $0x30] sm:$0x7]
        %s3993 = scalar_lea.vmem %s3, 50
        %v3994 = vld [vmem:[%s3993] sm:$0x3]
        %v3996 = vunpack.c.l.b16 %v3992
        %v3997 = vpack.c.b16 %v3996, %v3996
        %v3999 = vshrl.u32 %v3874, 16
        %v4001 = vrot.slane %v3999, 2
        %v4002 = vshll.u32 %v3874, 16
        %v4004 = vrot.slane %v4002, 3
        %v4005 = vor.u32 %v4001, %v4004
        %v4007 = vshrl.u32 %v3875, 16
        %v4009 = vrot.slane %v4007, 2
        %v4010 = vshll.u32 %v3875, 16
        %v4012 = vrot.slane %v4010, 3
        %v4013 = vor.u32 %v4009, %v4012
        %v4014 = vsel %vm1388, %v4005, %v4013
        %v4016 = vshrl.u32 %v3876, 16
        %v4018 = vrot.slane %v4016, 2
        %v4019 = vshll.u32 %v3876, 16
        %v4021 = vrot.slane %v4019, 3
        %v4022 = vor.u32 %v4018, %v4021
        %v4023 = vsel %vm1388, %v4013, %v4022
        %v4025 = vshrl.u32 %v3877, 16
        %v4027 = vrot.slane %v4025, 2
        %v4028 = vshll.u32 %v3877, 16
        %v4030 = vrot.slane %v4028, 3
        %v4031 = vor.u32 %v4027, %v4030
        %v4032 = vsel %vm1388, %v4022, %v4031
        %v4034 = vshrl.u32 %v3878, 16
        %v4036 = vrot.slane %v4034, 2
        %v4037 = vshll.u32 %v3878, 16
        %v4039 = vrot.slane %v4037, 3
        %v4040 = vor.u32 %v4036, %v4039
        %v4041 = vsel %vm1388, %v4031, %v4040
        %v4043 = vshrl.u32 %v3997, 16
        %v4045 = vrot.slane %v4043, 2
        %v4046 = vshll.u32 %v3997, 16
        %v4048 = vrot.slane %v4046, 3
        %v4049 = vor.u32 %v4045, %v4048
        %v4050 = vsel %vm1388, %v4040, %v4049
        %v4052 = vsel %vm498, %v4014, 0
        %v4055 = vsel %vm498, %v4023, 0
        %v4058 = vsel %vm498, %v4032, 0
        %v4061 = vsel %vm498, %v4041, 0
        %v4064 = vsel %vm498, %v4050, 0
        %v4067 = vsel %vm514, %v3994, 0
        %4069 = vmatprep.subr.bf16.mxu0 0
        %4070 = vmatpush1.bf16.msra.mxu0 %v4067
        %4071 = vmatprep.subr.bf16.mxu0 0
        %4072 = vmatpush1.bf16.msra.mxu0 0
        %4073 = vmatprep.subr.bf16.mxu0 0
        %4074 = vmatpush1.bf16.msra.mxu0 0
        %4075 = vmatprep.subr.bf16.mxu0 0
        %4076 = vmatpush1.bf16.msra.mxu0 0
        %4077 = vmatprep.subr.bf16.mxu0 0
        %4078 = vmatpush1.bf16.msra.mxu0 0
        %4079 = vmatprep.subr.bf16.mxu0 0
        %4080 = vmatpush1.bf16.msra.mxu0 0
        %4081 = vmatprep.subr.bf16.mxu0 0
        %4082 = vmatpush1.bf16.msra.mxu0 0
        %4083 = vmatprep.subr.bf16.mxu0 0
        %4084 = vmatpush1.bf16.msra.mxu0 0
        %4085 = vmatprep.subr.bf16.mxu0 0
        %4086 = vmatpush1.bf16.msra.mxu0 0
        %4087 = vmatprep.subr.bf16.mxu0 0
        %4088 = vmatpush1.bf16.msra.mxu0 0
        %4089 = vmatprep.subr.bf16.mxu0 0
        %4090 = vmatpush1.bf16.msra.mxu0 0
        %4091 = vmatprep.subr.bf16.mxu0 0
        %4092 = vmatpush1.bf16.msra.mxu0 0
        %4093 = vmatprep.subr.bf16.mxu0 0
        %4094 = vmatpush1.bf16.msra.mxu0 0
        %4095 = vmatprep.subr.bf16.mxu0 0
        %4096 = vmatpush1.bf16.msra.mxu0 0
        %4097 = vmatprep.subr.bf16.mxu0 0
        %4098 = vmatpush1.bf16.msra.mxu0 0
        %4099 = vmatprep.subr.bf16.mxu0 0
        %4100 = vmatpush1.bf16.msra.mxu0 0
        %4101 = vmatprep.mubr.bf16.mxu0 0
        %4102 = vmatmul.mubr.bf16.gmra.mrb[0].mxu0 %v4052
        %v4103 = vpop.f32.mrb[0].mxu0
        %v4104 = vadd.f32 0.0, %v4103
        %v4105 = vpop.f32.mrb[0].mxu0
        %v4106 = vpop.f32.mrb[0].mxu0
        %v4107 = vadd.f32 0.0, %v4106
        %v4108 = vpop.f32.mrb[0].mxu0
        %4109 = vmatprep.mubr.bf16.mxu0 0
        %4110 = vmatmul.mubr.bf16.gmra.mrb[0].mxu0 %v4055
        %v4111 = vpop.f32.mrb[0].mxu0
        %v4112 = vadd.f32 0.0, %v4111
        %v4113 = vpop.f32.mrb[0].mxu0
        %v4114 = vpop.f32.mrb[0].mxu0
        %v4115 = vadd.f32 0.0, %v4114
        %v4116 = vpop.f32.mrb[0].mxu0
        %4117 = vmatprep.mubr.bf16.mxu0 0
        %4118 = vmatmul.mubr.bf16.gmra.mrb[0].mxu0 %v4058
        %v4119 = vpop.f32.mrb[0].mxu0
        %v4120 = vadd.f32 0.0, %v4119
        %v4121 = vpop.f32.mrb[0].mxu0
        %v4122 = vpop.f32.mrb[0].mxu0
        %v4123 = vadd.f32 0.0, %v4122
        %v4124 = vpop.f32.mrb[0].mxu0
        %4125 = vmatprep.mubr.bf16.mxu0 0
        %4126 = vmatmul.mubr.bf16.gmra.mrb[0].mxu0 %v4061
        %v4127 = vpop.f32.mrb[0].mxu0
        %v4128 = vadd.f32 0.0, %v4127
        %v4129 = vpop.f32.mrb[0].mxu0
        %v4130 = vpop.f32.mrb[0].mxu0
        %v4131 = vadd.f32 0.0, %v4130
        %v4132 = vpop.f32.mrb[0].mxu0
        %4133 = vmatprep.mubr.bf16.mxu0 0
        %4134 = vmatmul.mubr.bf16.gmra.mrb[0].mxu0 %v4064
        %v4135 = vpop.f32.mrb[0].mxu0
        %v4136 = vadd.f32 0.0, %v4135
        %v4137 = vpop.f32.mrb[0].mxu0
        %v4138 = vpop.f32.mrb[0].mxu0
        %v4139 = vadd.f32 0.0, %v4138
        %v4140 = vpop.f32.mrb[0].mxu0
        %4141 = vdwg.mxu0
        %v4142 = vadd.f32 %v3982, %v4104
        %v4143 = vadd.f32 %v3983, %v4107
        %v4144 = vadd.f32 %v3984, %v4112
        %v4145 = vadd.f32 %v3985, %v4115
        %v4146 = vadd.f32 %v3986, %v4120
        %v4147 = vadd.f32 %v3987, %v4123
        %v4148 = vadd.f32 %v3988, %v4128
        %v4149 = vadd.f32 %v3989, %v4131
        %v4150 = vadd.f32 %v3990, %v4136
        %v4151 = vadd.f32 %v3991, %v4139
        %v4152 = vld [vmem:[%s399 + $0x8] sm:$0x8]
        %s4153 = scalar_lea.vmem %s3, 52
        %v4154 = vld [vmem:[%s4153] sm:$0x3]
        %v4156 = vunpack.c.l.b16 %v4152
        %v4157 = vpack.c.b16 %v3864, %v4156
        %v4158 = vrot.slane %v4157, 3
        %v4159 = vrot.slane %v3875, 3
        %v4160 = vsel %vm1549, %v4158, %v4159
        %v4161 = vrot.slane %v3876, 3
        %v4162 = vsel %vm1549, %v4159, %v4161
        %v4163 = vrot.slane %v3877, 3
        %v4164 = vsel %vm1549, %v4161, %v4163
        %v4165 = vrot.slane %v3878, 3
        %v4166 = vsel %vm1549, %v4163, %v4165
        %v4167 = vrot.slane %v3997, 3
        %v4168 = vsel %vm1549, %v4165, %v4167
        %v4170 = vsel %vm498, %v4160, 0
        %v4173 = vsel %vm498, %v4162, 0
        %v4176 = vsel %vm498, %v4164, 0
        %v4179 = vsel %vm498, %v4166, 0
        %v4182 = vsel %vm498, %v4168, 0
        %v4185 = vsel %vm514, %v4154, 0
        %4187 = vmatprep.subr.bf16.mxu0 0
        %4188 = vmatpush1.bf16.msra.mxu0 %v4185
        %4189 = vmatprep.subr.bf16.mxu0 0
        %4190 = vmatpush1.bf16.msra.mxu0 0
        %4191 = vmatprep.subr.bf16.mxu0 0
        %4192 = vmatpush1.bf16.msra.mxu0 0
        %4193 = vmatprep.subr.bf16.mxu0 0
        %4194 = vmatpush1.bf16.msra.mxu0 0
        %4195 = vmatprep.subr.bf16.mxu0 0
        %4196 = vmatpush1.bf16.msra.mxu0 0
        %4197 = vmatprep.subr.bf16.mxu0 0
        %4198 = vmatpush1.bf16.msra.mxu0 0
        %4199 = vmatprep.subr.bf16.mxu0 0
        %4200 = vmatpush1.bf16.msra.mxu0 0
        %4201 = vmatprep.subr.bf16.mxu0 0
        %4202 = vmatpush1.bf16.msra.mxu0 0
        %4203 = vmatprep.subr.bf16.mxu0 0
        %4204 = vmatpush1.bf16.msra.mxu0 0
        %4205 = vmatprep.subr.bf16.mxu0 0
        %4206 = vmatpush1.bf16.msra.mxu0 0
        %4207 = vmatprep.subr.bf16.mxu0 0
        %4208 = vmatpush1.bf16.msra.mxu0 0
        %4209 = vmatprep.subr.bf16.mxu0 0
        %4210 = vmatpush1.bf16.msra.mxu0 0
        %4211 = vmatprep.subr.bf16.mxu0 0
        %4212 = vmatpush1.bf16.msra.mxu0 0
        %4213 = vmatprep.subr.bf16.mxu0 0
        %4214 = vmatpush1.bf16.msra.mxu0 0
        %4215 = vmatprep.subr.bf16.mxu0 0
        %4216 = vmatpush1.bf16.msra.mxu0 0
        %4217 = vmatprep.subr.bf16.mxu0 0
        %4218 = vmatpush1.bf16.msra.mxu0 0
        %4219 = vmatprep.mubr.bf16.mxu0 0
        %4220 = vmatmul.mubr.bf16.gmra.mrb[0].mxu0 %v4170
        %v4221 = vpop.f32.mrb[0].mxu0
        %v4222 = vadd.f32 0.0, %v4221
        %v4223 = vpop.f32.mrb[0].mxu0
        %v4224 = vpop.f32.mrb[0].mxu0
        %v4225 = vadd.f32 0.0, %v4224
        %v4226 = vpop.f32.mrb[0].mxu0
        %4227 = vmatprep.mubr.bf16.mxu0 0
        %4228 = vmatmul.mubr.bf16.gmra.mrb[0].mxu0 %v4173
        %v4229 = vpop.f32.mrb[0].mxu0
        %v4230 = vadd.f32 0.0, %v4229
        %v4231 = vpop.f32.mrb[0].mxu0
        %v4232 = vpop.f32.mrb[0].mxu0
        %v4233 = vadd.f32 0.0, %v4232
        %v4234 = vpop.f32.mrb[0].mxu0
        %4235 = vmatprep.mubr.bf16.mxu0 0
        %4236 = vmatmul.mubr.bf16.gmra.mrb[0].mxu0 %v4176
        %v4237 = vpop.f32.mrb[0].mxu0
        %v4238 = vadd.f32 0.0, %v4237
        %v4239 = vpop.f32.mrb[0].mxu0
        %v4240 = vpop.f32.mrb[0].mxu0
        %v4241 = vadd.f32 0.0, %v4240
        %v4242 = vpop.f32.mrb[0].mxu0
        %4243 = vmatprep.mubr.bf16.mxu0 0
        %4244 = vmatmul.mubr.bf16.gmra.mrb[0].mxu0 %v4179
        %v4245 = vpop.f32.mrb[0].mxu0
        %v4246 = vadd.f32 0.0, %v4245
        %v4247 = vpop.f32.mrb[0].mxu0
        %v4248 = vpop.f32.mrb[0].mxu0
        %v4249 = vadd.f32 0.0, %v4248
        %v4250 = vpop.f32.mrb[0].mxu0
        %4251 = vmatprep.mubr.bf16.mxu0 0
        %4252 = vmatmul.mubr.bf16.gmra.mrb[0].mxu0 %v4182
        %v4253 = vpop.f32.mrb[0].mxu0
        %v4254 = vadd.f32 0.0, %v4253
        %v4255 = vpop.f32.mrb[0].mxu0
        %v4256 = vpop.f32.mrb[0].mxu0
        %v4257 = vadd.f32 0.0, %v4256
        %v4258 = vpop.f32.mrb[0].mxu0
        %4259 = vdwg.mxu0
        %v4260 = vadd.f32 %v4142, %v4222
        %v4261 = vadd.f32 %v4143, %v4225
        %v4262 = vadd.f32 %v4144, %v4230
        %v4263 = vadd.f32 %v4145, %v4233
        %v4264 = vadd.f32 %v4146, %v4238
        %v4265 = vadd.f32 %v4147, %v4241
        %v4266 = vadd.f32 %v4148, %v4246
        %v4267 = vadd.f32 %v4149, %v4249
        %v4268 = vadd.f32 %v4150, %v4254
        %v4269 = vadd.f32 %v4151, %v4257
        %v4270 = vld [vmem:[#allocation2] sm:$0x1]
        %v4272 = vlaneseq
        %v4273 = vshrl.u32 %v4272, 7
        %v4274 = vsub.s32 0, %v4273
        %v4275 = vrot.slane %v4270, %v4274
        %v4277 = vadd.f32 %v4260, %v4275
        %v4278 = vadd.f32 %v4261, %v4275
        %v4279 = vadd.f32 %v4262, %v4275
        %v4280 = vadd.f32 %v4263, %v4275
        %v4281 = vadd.f32 %v4264, %v4275
        %v4282 = vadd.f32 %v4265, %v4275
        %v4283 = vadd.f32 %v4266, %v4275
        %v4284 = vadd.f32 %v4267, %v4275
        %v4285 = vadd.f32 %v4268, %v4275
        %v4286 = vadd.f32 %v4269, %v4275
        %v4287 = vmax.f32 %v4277, 0.0
        %v4288 = vmax.f32 %v4278, 0.0
        %v4289 = vmax.f32 %v4279, 0.0
        %v4290 = vmax.f32 %v4280, 0.0
        %v4291 = vmax.f32 %v4281, 0.0
        %v4292 = vmax.f32 %v4282, 0.0
        %v4293 = vmax.f32 %v4283, 0.0
        %v4294 = vmax.f32 %v4284, 0.0
        %v4295 = vmax.f32 %v4285, 0.0
        %v4296 = vmax.f32 %v4286, 0.0
        %v4297 = vpack.c.bf16 %v4288, %v4287
        %v4298 = vpack.c.bf16 %v4290, %v4289
        %v4299 = vpack.c.bf16 %v4292, %v4291
        %v4300 = vpack.c.bf16 %v4294, %v4293
        %v4301 = vpack.c.bf16 %v4296, %v4295
        %v4302 = vld [vmem:[%s5] sm:$0x3]
        %v4303 = vld [vmem:[%s6] sm:$0x1]
        %v4305 = vlaneseq
        %v4306 = vshrl.u32 %v4305, 7
        %v4307 = vsub.s32 0, %v4306
        %v4308 = vrot.slane %v4303, %v4307
        %v4311 = vsel %vm498, %v4297, 0
        %v4314 = vsel %vm498, %v4298, 0
        %v4317 = vsel %vm498, %v4299, 0
        %v4320 = vsel %vm498, %v4300, 0
        %v4323 = vsel %vm498, %v4301, 0
        %v4326 = vsel %vm514, %v4302, 0
        %4328 = vmatprep.subr.bf16.mxu0 0
        %4329 = vmatpush1.bf16.msra.mxu0 %v4326
        %4330 = vmatprep.subr.bf16.mxu0 0
        %4331 = vmatpush1.bf16.msra.mxu0 0
        %4332 = vmatprep.subr.bf16.mxu0 0
        %4333 = vmatpush1.bf16.msra.mxu0 0
        %4334 = vmatprep.subr.bf16.mxu0 0
        %4335 = vmatpush1.bf16.msra.mxu0 0
        %4336 = vmatprep.subr.bf16.mxu0 0
        %4337 = vmatpush1.bf16.msra.mxu0 0
        %4338 = vmatprep.subr.bf16.mxu0 0
        %4339 = vmatpush1.bf16.msra.mxu0 0
        %4340 = vmatprep.subr.bf16.mxu0 0
        %4341 = vmatpush1.bf16.msra.mxu0 0
        %4342 = vmatprep.subr.bf16.mxu0 0
        %4343 = vmatpush1.bf16.msra.mxu0 0
        %4344 = vmatprep.subr.bf16.mxu0 0
        %4345 = vmatpush1.bf16.msra.mxu0 0
        %4346 = vmatprep.subr.bf16.mxu0 0
        %4347 = vmatpush1.bf16.msra.mxu0 0
        %4348 = vmatprep.subr.bf16.mxu0 0
        %4349 = vmatpush1.bf16.msra.mxu0 0
        %4350 = vmatprep.subr.bf16.mxu0 0
        %4351 = vmatpush1.bf16.msra.mxu0 0
        %4352 = vmatprep.subr.bf16.mxu0 0
        %4353 = vmatpush1.bf16.msra.mxu0 0
        %4354 = vmatprep.subr.bf16.mxu0 0
        %4355 = vmatpush1.bf16.msra.mxu0 0
        %4356 = vmatprep.subr.bf16.mxu0 0
        %4357 = vmatpush1.bf16.msra.mxu0 0
        %4358 = vmatprep.subr.bf16.mxu0 0
        %4359 = vmatpush1.bf16.msra.mxu0 0
        %4360 = vmatprep.mubr.bf16.mxu0 0
        %4361 = vmatmul.mubr.bf16.gmra.mrb[0].mxu0 %v4311
        %v4362 = vpop.f32.mrb[0].mxu0
        %v4363 = vadd.f32 %v4308, %v4362
        %v4364 = vpop.f32.mrb[0].mxu0
        %v4365 = vpop.f32.mrb[0].mxu0
        %v4366 = vadd.f32 %v4308, %v4365
        %v4367 = vpop.f32.mrb[0].mxu0
        %4368 = vmatprep.mubr.bf16.mxu0 0
        %4369 = vmatmul.mubr.bf16.gmra.mrb[0].mxu0 %v4314
        %v4370 = vpop.f32.mrb[0].mxu0
        %v4371 = vadd.f32 %v4308, %v4370
        %v4372 = vpop.f32.mrb[0].mxu0
        %v4373 = vpop.f32.mrb[0].mxu0
        %v4374 = vadd.f32 %v4308, %v4373
        %v4375 = vpop.f32.mrb[0].mxu0
        %4376 = vmatprep.mubr.bf16.mxu0 0
        %4377 = vmatmul.mubr.bf16.gmra.mrb[0].mxu0 %v4317
        %v4378 = vpop.f32.mrb[0].mxu0
        %v4379 = vadd.f32 %v4308, %v4378
        %v4380 = vpop.f32.mrb[0].mxu0
        %v4381 = vpop.f32.mrb[0].mxu0
        %v4382 = vadd.f32 %v4308, %v4381
        %v4383 = vpop.f32.mrb[0].mxu0
        %4384 = vmatprep.mubr.bf16.mxu0 0
        %4385 = vmatmul.mubr.bf16.gmra.mrb[0].mxu0 %v4320
        %v4386 = vpop.f32.mrb[0].mxu0
        %v4387 = vadd.f32 %v4308, %v4386
        %v4388 = vpop.f32.mrb[0].mxu0
        %v4389 = vpop.f32.mrb[0].mxu0
        %v4390 = vadd.f32 %v4308, %v4389
        %v4391 = vpop.f32.mrb[0].mxu0
        %4392 = vmatprep.mubr.bf16.mxu0 0
        %4393 = vmatmul.mubr.bf16.gmra.mrb[0].mxu0 %v4323
        %v4394 = vpop.f32.mrb[0].mxu0
        %v4395 = vadd.f32 %v4308, %v4394
        %v4396 = vpop.f32.mrb[0].mxu0
        %v4397 = vpop.f32.mrb[0].mxu0
        %v4398 = vadd.f32 %v4308, %v4397
        %v4399 = vpop.f32.mrb[0].mxu0
        %4400 = vdwg.mxu0
        %vm4401 = vcmask 523264
        %4402 = vst.msk [vmem:[%s409] sm:$0xff] %vm4401, %v4363
        %4403 = vst.msk [vmem:[%s409 + $0x8] sm:$0xff] %vm4401, %v4366
        %4404 = vst.msk [vmem:[%s409 + $0x10] sm:$0xff] %vm4401, %v4371
        %4405 = vst.msk [vmem:[%s409 + $0x18] sm:$0xff] %vm4401, %v4374
        %4406 = vst.msk [vmem:[%s409 + $0x20] sm:$0xff] %vm4401, %v4379
        %4407 = vst.msk [vmem:[%s409 + $0x28] sm:$0xff] %vm4401, %v4382
        %4408 = vst.msk [vmem:[%s409 + $0x30] sm:$0xff] %vm4401, %v4387
        %4409 = vst.msk [vmem:[%s409 + $0x38] sm:$0xff] %vm4401, %v4390
        %4410 = vst.msk [vmem:[%s409 + $0x40] sm:$0xff] %vm4401, %v4395
        %4411 = vst.msk [vmem:[%s409 + $0x48] sm:$0xff] %vm4401, %v4398
        %p4412 = scmp.lt.s32.totalorder %s23, 1
        %s4413 = scalar_select %p4412, %s23, 1
        %p4414 = scmp.lt.s32.totalorder %s24, 7
        %s4415 = scalar_select %p4414, %s24, 7
        %s4416 = smul.addr %s4415, 10
        %s4417 = smul.addr %s4413, 80
        %s4418 = sadd.s32 %s4416, %s4417
        %s4419 = smul.addr %s4418, 8
        %s4420 = scalar_lea.vmem %s7, %s4419
        // Predicated region
        $region53: #{inv_res_trans_block.1} parent=47 // pred_check
          %p4421 = pneg %p223
        $region54: #{inv_res_trans_block.1} parent=47 // pred_check_branch
          %4423 = sbr.rel (%p4421) target = $region56
        $region55: #{inv_res_trans_block.1} parent=47 // pred_region
          _
        $region56: #{inv_res_trans_block.1} parent=47 // pred_fallthru
          _
      $region48: #{inv_res_trans_block.1} parent=5 // pred_fallthru
        _
      %p4424 = scmp.le.s32.totalorder 2, %s14
      // Predicated region
      $region57: #{inv_res_trans_block.1} parent=5 // pred_check
        %p4425 = pneg %p4424
      $region58: #{inv_res_trans_block.1} parent=5 // pred_check_branch
        %4427 = sbr.rel (%p4425) target = $region60
      $region59: #{inv_res_trans_block.1} parent=5 // pred_region
        %s4428 = ssub.s32 %s14, 2
        // Predicated region
        $region61: #{inv_res_trans_block.1} parent=59 // pred_check
          %p4429 = pneg %p229
        $region62: #{inv_res_trans_block.1} parent=59 // pred_check_branch
          %4431 = sbr.rel (%p4429) target = $region64
        $region63: #{inv_res_trans_block.1} parent=59 // pred_region
          %p4432 = scmp.lt.s32.totalorder %s25, 1
          %s4433 = scalar_select %p4432, %s25, 1
          %p4434 = scmp.lt.s32.totalorder %s26, 7
          %s4435 = scalar_select %p4434, %s26, 7
          %s4436 = smul.addr %s4435, 10
          %s4437 = smul.addr %s4433, 80
          %s4438 = sadd.s32 %s4436, %s4437
          %s4439 = smul.addr %s4438, 8
          %s4440 = scalar_lea.vmem %s7, %s4439
        $region64: #{inv_res_trans_block.1} parent=59 // pred_fallthru
          _
      $region60: #{inv_res_trans_block.1} parent=5 // pred_fallthru
        _
    $region6: #{inv_res_trans_block.1} parent=1 // loop_footer
      %s18 = sadd.s32 1, %s14
    $region7: #{inv_res_trans_block.1} parent=1 // loop_footer_branch
      %13 = sbr.rel target = $region3
    $region8: #{inv_res_trans_block.1} parent=1 // loop_exit
      _
    %4441 = vsyncpa [#allocation3], 1
    %s4442 = scalar_lea.sflag [#allocation3], 1
    %4443 = vsyncpa %s4442, 1

</llo_original>
